<compile_context>
chip_gen: v5e
topology: v5e:2x2
jax: 0.10.0
libtpu: 0.0.40
codegen_flags: <defaults>
</compile_context>

<pallas_src>
import jax
import jax.numpy as jnp
from jax.experimental import pallas as pl
from jax.experimental.pallas import tpu as pltpu

MESH_CENTER_INDICES = [81, 82, 85, 86, 91, 92, 93, 94, 109, 111, 113, 217, 220,
                       237, 239, 283]
MESH_CENTER_WEIGHTS = [0.009604673832654953, 0.03351994603872299,
                       0.19301486015319824, 0.045285675674676895,
                       0.003511656541377306, 0.012976124882698059,
                       0.002114641945809126, 0.19195371866226196,
                       0.019679106771945953, 0.0010375987039878964,
                       0.13418574631214142, 0.00015269737923517823,
                       0.22274497151374817, 0.01192322839051485,
                       0.0974457710981369, 0.02076236717402935]

NUM_LOW = 518        # num_vert_low_poly
NUM_MID = 1723       # num_vert_upsampler_intermediate (only used by the refs)
NUM_HIGH = 6890      # num_vert_high_poly
NUM_CTR = len(MESH_CENTER_INDICES)

M_PAD = 8            # 3 xyz coords padded to one sublane group
K_PAD = 528          # 518 low-poly verts padded to a multiple of 16 (bf16 pack)
TN = 3456            # output tile along the high-poly vertex axis (27 * 128)


def _decoder_kernel(x_ref, cw_ref, b_ref, w_ref, o_ref):
    # x_ref : (8, 528)  f32   low-poly mesh, xyz on sublanes, verts on lanes
    # cw_ref: (1, 528)  f32   center weights scattered over the low-poly verts
    # b_ref : (1, TN)   f32   folded-bias tile
    # w_ref : (528, TN) bf16  one contiguous pre-tiled slab of W_fold^T
    # o_ref : (8, TN)   f32   output tile (rows 3..7 are scratch / ignored)
    x = x_ref[...]
    center = jnp.sum(x * cw_ref[...], axis=1, keepdims=True)          # (8, 1) f32
    xc = (x - center).astype(jnp.bfloat16)                            # (8, 528) bf16
    acc = jnp.dot(xc, w_ref[...], preferred_element_type=jnp.float32)  # (8, TN) f32
    o_ref[...] = acc + b_ref[...] + center


def prepare_decoder_params(w1, b1, w2, b2):
    """One-time (model-load) preprocessing, kept OUT of the per-call hot path.

    Folds the two affine layers, transposes / pads / pre-tiles, bf16-casts the
    streamed weight.  Torch Linear layout: w1 (1723, 518), b1 (1723,),
    w2 (6890, 1723), b2 (6890,).
    """
    hp = jax.lax.Precision.HIGHEST
    w1f = w1.astype(jnp.float32)
    b1f = b1.astype(jnp.float32)
    w2f = w2.astype(jnp.float32)
    b2f = b2.astype(jnp.float32)

    # Linear2(Linear1(x)) == x @ (W2 @ W1)^T + (W2 @ b1 + b2)  (no nonlinearity)
    w_fold = jnp.dot(w2f, w1f, precision=hp)                    # (6890, 518) f32
    b_fold = jnp.dot(w2f, b1f, precision=hp) + b2f               # (6890,)     f32

    n_tiles = pl.cdiv(NUM_HIGH, TN)                               # 2
    n_pad = n_tiles * TN                                          # 6912

    wt = jnp.zeros((K_PAD, n_pad), jnp.bfloat16)
    wt = wt.at[:NUM_LOW, :NUM_HIGH].set(w_fold.T.astype(jnp.bfloat16))
    # pre-tiled: tile j is one contiguous (K_PAD, TN) slab -> one contiguous DMA/step
    w_tiled = wt.reshape(K_PAD, n_tiles, TN).transpose(1, 0, 2)   # (2, 528, 3456)

    b_pad = jnp.zeros((1, n_pad), jnp.float32).at[0, :NUM_HIGH].set(b_fold)

    cw_row = jnp.zeros((1, K_PAD), jnp.float32)
    cw_row = cw_row.at[0, jnp.asarray(MESH_CENTER_INDICES, jnp.int32)].set(
        jnp.asarray(MESH_CENTER_WEIGHTS, jnp.float32))

    return w_tiled, b_pad, cw_row


@jax.jit
def mesh_upsampling_decoder(mesh, w_tiled, b_pad, cw_row):
    """mesh: (1, 518, 3) f32; params pre-packed by prepare_decoder_params."""
    assert mesh.shape == (1, NUM_LOW, 3)
    n_tiles, k_pad, tn = w_tiled.shape
    n_pad = n_tiles * tn

    # (3, 518) layout: xyz on the sublane axis, low-poly vertices lane-dense.
    x_pad = jnp.zeros((M_PAD, k_pad), jnp.float32)
    x_pad = x_pad.at[:3, :NUM_LOW].set(mesh[0].T)

    cost = pl.CostEstimate(
        flops=2 * M_PAD * k_pad * n_pad,
        transcendentals=0,
        bytes_accessed=(w_tiled.size * 2          # bf16 W_fold stream (dominant)
                        + x_pad.size * 4
                        + cw_row.size * 4
                        + b_pad.size * 4
                        + M_PAD * n_pad * 4),     # f32 output
    )

    out = pl.pallas_call(
        _decoder_kernel,
        out_shape=jax.ShapeDtypeStruct((M_PAD, n_pad), jnp.float32),
        grid_spec=pltpu.PrefetchScalarGridSpec(
            num_scalar_prefetch=0,
            grid=(n_tiles,),
            in_specs=[
                pl.BlockSpec((M_PAD, k_pad), lambda j: (0, 0)),        # mesh (resident)
                pl.BlockSpec((1, k_pad), lambda j: (0, 0)),            # center weights
                pl.BlockSpec((1, tn), lambda j: (0, j)),               # folded-bias tile
                pl.BlockSpec((None, k_pad, tn), lambda j: (j, 0, 0)),  # W_fold^T tile
            ],
            out_specs=pl.BlockSpec((M_PAD, tn), lambda j: (0, j)),
        ),
        compiler_params=pltpu.CompilerParams(
            dimension_semantics=("parallel",),      # disjoint output tiles -> v7x 2 TCs
            vmem_limit_bytes=32 * 1024 * 1024,      # ~7.6 MiB used (2x 3.6 MiB W bufs)
        ),
        cost_estimate=cost,
    )(x_pad, cw_row, b_pad, w_tiled)

    y = out[:3, :NUM_HIGH].T                                      # (6890, 3)
    return y[None]                                                # (1, 6890, 3)


def _reference_f32(mesh, w1, b1, w2, b2):
    """Exact float32 version of the PyTorch forward (unfused, two Linears)."""
    hp = jax.lax.Precision.HIGHEST
    cw = jnp.asarray(MESH_CENTER_WEIGHTS, jnp.float32).reshape(1, NUM_CTR, 1)
    idx = jnp.asarray(MESH_CENTER_INDICES, jnp.int32)
    center = (mesh[:, idx, :] * cw).sum(1)[None]                  # (1, 1, 3)
    m = mesh - center
    m = jnp.transpose(m, (0, 2, 1))                               # (1, 3, 518)
    m = jnp.dot(m, w1.T, precision=hp) + b1
    m = jnp.dot(m, w2.T, precision=hp) + b2
    m = jnp.transpose(m, (0, 2, 1))                               # (1, 6890, 3)
    return m + center


def _reference_folded_bf16(mesh, w1, b1, w2, b2):
    """Same math, folded in f32 and rounded to bf16 exactly like the kernel path."""
    hp = jax.lax.Precision.HIGHEST
    w_fold = jnp.dot(w2, w1, precision=hp)                        # (6890, 518) f32
    b_fold = jnp.dot(w2, b1, precision=hp) + b2                   # (6890,)     f32
    cw = jnp.asarray(MESH_CENTER_WEIGHTS, jnp.float32).reshape(1, NUM_CTR, 1)
    idx = jnp.asarray(MESH_CENTER_INDICES, jnp.int32)
    center = (mesh[:, idx, :] * cw).sum(1)[None]                  # (1, 1, 3)
    xc = (mesh - center)[0].T.astype(jnp.bfloat16)                # (3, 518) bf16
    y = jnp.dot(xc, w_fold.T.astype(jnp.bfloat16),
                preferred_element_type=jnp.float32) + b_fold      # (3, 6890) f32
    return (y.T + center[0])[None]                                # (1, 6890, 3)


if __name__ == "__main__":
    key = jax.random.PRNGKey(0)
    k_mesh, k_w1, k_b1, k_w2, k_b2 = jax.random.split(key, 5)

    # deterministic synthetic parameters (torch Linear shapes: (out, in))
    w1 = jax.random.normal(k_w1, (NUM_MID, NUM_LOW), jnp.float32) * 0.02
    b1 = jax.random.normal(k_b1, (NUM_MID,), jnp.float32) * 0.02
    w2 = jax.random.normal(k_w2, (NUM_HIGH, NUM_MID), jnp.float32) * 0.02
    b2 = jax.random.normal(k_b2, (NUM_HIGH,), jnp.float32) * 0.02

    mesh = jax.random.normal(k_mesh, (1, NUM_LOW, 3), jnp.float32)

    # one-time weight folding/packing (model-load time), off the per-call hot path
    params = prepare_decoder_params(w1, b1, w2, b2)
    params = jax.block_until_ready(params)

    out = mesh_upsampling_decoder(mesh, *params)
    out = jax.block_until_ready(out)
    assert out.shape == (1, NUM_HIGH, 3), out.shape

    # tight check against a reference that folds/rounds exactly like the kernel path
    ref_fold = _reference_folded_bf16(mesh, w1, b1, w2, b2)
    assert jnp.allclose(out, ref_fold, rtol=2e-3, atol=2e-3), \
        float(jnp.max(jnp.abs(out - ref_fold)))

    # loose sanity check against the exact unfused float32 PyTorch semantics
    ref_f32 = _reference_f32(mesh, w1, b1, w2, b2)
    assert jnp.allclose(out, ref_f32, rtol=0.0, atol=5e-2), \
        float(jnp.max(jnp.abs(out - ref_f32)))

    print("KERNEL_OK")
</pallas_src>

<mosaic_0001>
module attributes {stable_mosaic.version = 11 : i64} {
  func.func @_decoder_kernel(%arg0: i32, %arg1: memref<8x528xf32, #tpu.memory_space<vmem>>, %arg2: memref<1x528xf32, #tpu.memory_space<vmem>>, %arg3: memref<1x3456xf32, #tpu.memory_space<vmem>>, %arg4: memref<1x528x3456xbf16, #tpu.memory_space<vmem>>, %arg5: memref<8x3456xf32, #tpu.memory_space<vmem>>) attributes {dimension_semantics = [#tpu.dimension_semantics<parallel>], iteration_bounds = array<i64: 2>, scalar_prefetch = 0 : i64, scratch_operands = 0 : i64, tpu.core_type = #tpu.core_type<tc>, window_params = [{pipeline_mode = #tpu.pipeline_mode<synchronous>, transform_indices = @transform_0, window_bounds = array<i64: 8, 528>}, {pipeline_mode = #tpu.pipeline_mode<synchronous>, transform_indices = @transform_1, window_bounds = array<i64: 1, 528>}, {transform_indices = @transform_2, window_bounds = array<i64: 1, 3456>}, {transform_indices = @transform_3, window_bounds = array<i64: 1, 528, 3456>}, {transform_indices = @transform_4, window_bounds = array<i64: 8, 3456>}]} {
    %c0 = arith.constant 0 : index
    %c0_0 = arith.constant 0 : index
    %0 = vector.load %arg1[%c0, %c0_0] : memref<8x528xf32, #tpu.memory_space<vmem>>, vector<8x528xf32>
    %c0_1 = arith.constant 0 : index
    %c0_2 = arith.constant 0 : index
    %1 = vector.load %arg2[%c0_1, %c0_2] : memref<1x528xf32, #tpu.memory_space<vmem>>, vector<1x528xf32>
    %2 = vector.broadcast %1 : vector<1x528xf32> to vector<8x528xf32>
    %3 = arith.mulf %0, %2 : vector<8x528xf32>
    %cst = arith.constant dense<0.000000e+00> : vector<8xf32>
    %4 = vector.multi_reduction <add>, %3, %cst [1] : vector<8x528xf32> to vector<8xf32>
    %5 = vector.shape_cast %4 : vector<8xf32> to vector<8x1xf32>
    %6 = vector.broadcast %5 : vector<8x1xf32> to vector<8x528xf32>
    %7 = arith.subf %0, %6 : vector<8x528xf32>
    %8 = arith.truncf %7 : vector<8x528xf32> to vector<8x528xbf16>
    %c0_3 = arith.constant 0 : index
    %c0_4 = arith.constant 0 : index
    %c0_5 = arith.constant 0 : index
    %9 = vector.load %arg4[%c0_3, %c0_4, %c0_5] : memref<1x528x3456xbf16, #tpu.memory_space<vmem>>, vector<1x528x3456xbf16>
    %10 = vector.shape_cast %9 : vector<1x528x3456xbf16> to vector<528x3456xbf16>
    %cst_6 = arith.constant dense<0.000000e+00> : vector<8x3456xf32>
    %11 = tpu.matmul %8, %10, %cst_6 {dimension_numbers = #tpu.dot_dimension_numbers<[1], [0], [0], [1], [0, 0, 1, 1], [], []>} : vector<8x528xbf16>, vector<528x3456xbf16>, vector<8x3456xf32> -> vector<8x3456xf32>
    %c0_7 = arith.constant 0 : index
    %c0_8 = arith.constant 0 : index
    %12 = vector.load %arg3[%c0_7, %c0_8] : memref<1x3456xf32, #tpu.memory_space<vmem>>, vector<1x3456xf32>
    %13 = vector.broadcast %12 : vector<1x3456xf32> to vector<8x3456xf32>
    %14 = arith.addf %11, %13 : vector<8x3456xf32>
    %15 = vector.broadcast %5 : vector<8x1xf32> to vector<8x3456xf32>
    %16 = arith.addf %14, %15 : vector<8x3456xf32>
    %c0_9 = arith.constant 0 : index
    %c0_10 = arith.constant 0 : index
    %17 = vector.load %arg5[%c0_9, %c0_10] : memref<8x3456xf32, #tpu.memory_space<vmem>>, vector<8x3456xf32>
    tpu.vector_store %arg5[%c0_9, %c0_10], %16 {strides = array<i32>} : memref<8x3456xf32, #tpu.memory_space<vmem>>, vector<8x3456xf32>,
    return
  }
  func.func @transform_0(%arg0: i32) -> (i32, i32) {
    %c0_i32 = arith.constant 0 : i32
    %c0_i32_0 = arith.constant 0 : i32
    %c0_i32_1 = arith.constant 0 : i32
    return %c0_i32, %c0_i32_0 : i32, i32
  }
  func.func @transform_1(%arg0: i32) -> (i32, i32) {
    %c0_i32 = arith.constant 0 : i32
    %c0_i32_0 = arith.constant 0 : i32
    %c0_i32_1 = arith.constant 0 : i32
    return %c0_i32, %c0_i32_0 : i32, i32
  }
  func.func @transform_2(%arg0: i32) -> (i32, i32) {
    %c0_i32 = arith.constant 0 : i32
    %c0_i32_0 = arith.constant 0 : i32
    return %c0_i32, %arg0 : i32, i32
  }
  func.func @transform_3(%arg0: i32) -> (i32, i32, i32) {
    %c0_i32 = arith.constant 0 : i32
    %c0_i32_0 = arith.constant 0 : i32
    %c0_i32_1 = arith.constant 0 : i32
    return %arg0, %c0_i32, %c0_i32_0 : i32, i32, i32
  }
  func.func @transform_4(%arg0: i32) -> (i32, i32) {
    %c0_i32 = arith.constant 0 : i32
    %c0_i32_0 = arith.constant 0 : i32
    return %c0_i32, %arg0 : i32, i32
  }
}

</mosaic_0001>

<llo_original>
// kernel: mesh_upsampling_decoder.1
$region0: #{mesh_upsampling_decoder.1}
  #allocation0 [shape = 'u32[]', space=smem, size = 0x4, offset = 0x4, fixed_abs, tag = 'smem constant byte address 0x4 - core index']
  #allocation1 [shape = 'u32[72,128]{1,0:T(1,128)}', space=vmem, size = 0x9000, scoped, tag = 'internal scratch']
  %s0 = inlined_call_operand.vmem [shape: f32[8,528], index: 0, kind: input, shape index: {}]
  %s1 = inlined_call_operand.hbm [shape: f32[1,528], index: 1, kind: input, shape index: {}]
  %s2 = inlined_call_operand.hbm [shape: f32[1,6912], index: 2, kind: input, shape index: {}]
  %s3 = inlined_call_operand.hbm [shape: bf16[2,528,3456], index: 3, kind: input, shape index: {}]
  %s4 = inlined_call_operand.vmem [shape: f32[8,6912], index: 4, kind: output, shape index: {}]
  %s5 = sld [smem:[#allocation0]]
  $region61: #{mesh_upsampling_decoder.1} parent=0
    _
  %s7 = ssub.s32 1, %s5
  %s8 = scalar_select 0, %s7, %s5
  $region1: #{mesh_upsampling_decoder.1} parent=0
    #allocation2 [shape = 'u8[2560]{0}', space=vmem, size = 0xc00, scoped, tag = 'input window, operand 1, single buffered']
    #allocation3 [shape = 's32[2]{0}', space=sflag, size = 0x8, scoped, tag = 'scoped memory for mesh_upsampling_decoder.1']
    #allocation4 [shape = 'u8[27648]{0}', space=vmem, size = 0x6c00, scoped, tag = 'input window, operand 2']
    #allocation5 [shape = 's32[2]{0}', space=sflag, size = 0x8, scoped, tag = 'scoped memory for mesh_upsampling_decoder.1']
    #allocation6 [shape = 'u8[7299072]{0}', space=vmem, size = 0x6f6000, scoped, tag = 'input window, operand 3']
    %9 = vsyncpa [#allocation3], 0
    %10 = vsyncpa [#allocation5], 0
    %s11 = scalar_lea.sflag [#allocation5], 1
    %12 = vsyncpa %s11, 0
    loop: start=0, step=1, limit=4
    $region2: #{mesh_upsampling_decoder.1} parent=1 // loop_pre_header
      _
    $region3: #{mesh_upsampling_decoder.1} parent=1 // loop_header
      %s14 = sphi 0, %s18
      %p15 = scmp.ge.s32.totalorder %s14, 4
      %s22 = sphi 0, %s22
      %s24 = sphi 0, %s22
      %s25 = sphi 0, %s24
      %s39 = sphi 0, %s25
      %s43 = sphi 0, %s43
      %s45 = sphi 0, %s43
      %s46 = sphi 0, %s45
      %s60 = sphi 0, %s46
      %s66 = sphi 0, %s68
      %s69 = sphi 0, %s66
      %s70 = sphi 0, %s69
      %s86 = sphi 0, %s70
      %s92 = sphi 0, %s94
      %s95 = sphi 0, %s92
      %s96 = sphi 0, %s95
      %s112 = sphi 0, %s96
      %s118 = sphi 0, %s120
      %s121 = sphi 0, %s118
      %s122 = sphi 0, %s121
      %s138 = sphi 0, %s122
    $region4: #{mesh_upsampling_decoder.1} parent=1 // loop_header_branch
      %17 = sbr.rel (%p15) target = $region8
    $region5: #{mesh_upsampling_decoder.1} parent=1 // loop_body
      %s19 = ssub.s32 %s14, 1
      %s20 = ssub.s32 %s14, 2
      %s21 = sadd.s32 %s14, 1
      %s23 = sadd.s32 %s22, 1
      %p26 = scmp.eq.s32.totalorder %s14, 1
      %p27 = scmp.ne.s32.totalorder %s22, %s24
      %p28 = scmp.eq.s32.totalorder %s14, 0
      %p29 = por %p27, %p28
      %p30 = scmp.ne.s32.totalorder %s22, %s24
      %p31 = scmp.eq.s32.totalorder %s19, 1
      %p32 = por %p30, %p31
      %p33 = scmp.ne.s32.totalorder %s24, %s25
      %p34 = scmp.eq.s32.totalorder %s19, 0
      %p35 = por %p33, %p34
      %p36 = scmp.ne.s32.totalorder %s24, %s25
      %p37 = scmp.eq.s32.totalorder %s20, 1
      %p38 = por %p36, %p37
      %p40 = scmp.ne.s32.totalorder %s25, %s39
      %p41 = scmp.eq.s32.totalorder %s20, 0
      %p42 = por %p40, %p41
      %s44 = sadd.s32 %s43, 1
      %p47 = scmp.eq.s32.totalorder %s14, 1
      %p48 = scmp.ne.s32.totalorder %s43, %s45
      %p49 = scmp.eq.s32.totalorder %s14, 0
      %p50 = por %p48, %p49
      %p51 = scmp.ne.s32.totalorder %s43, %s45
      %p52 = scmp.eq.s32.totalorder %s19, 1
      %p53 = por %p51, %p52
      %p54 = scmp.ne.s32.totalorder %s45, %s46
      %p55 = scmp.eq.s32.totalorder %s19, 0
      %p56 = por %p54, %p55
      %p57 = scmp.ne.s32.totalorder %s45, %s46
      %p58 = scmp.eq.s32.totalorder %s20, 1
      %p59 = por %p57, %p58
      %p61 = scmp.ne.s32.totalorder %s46, %s60
      %p62 = scmp.eq.s32.totalorder %s20, 0
      %p63 = por %p61, %p62
      %s64 = ssub.s32 %s14, %s21
      %p65 = scmp.eq.s32.totalorder %s64, 0
      %s67 = sadd.s32 %s66, 1
      %s68 = scalar_select %p65, %s66, %s67
      %p71 = pneg %p65
      %p72 = scmp.eq.s32.totalorder %s14, 1
      %p73 = por %p71, %p72
      %p74 = scmp.ne.s32.totalorder %s66, %s69
      %p75 = scmp.eq.s32.totalorder %s14, 0
      %p76 = por %p74, %p75
      %p77 = scmp.ne.s32.totalorder %s66, %s69
      %p78 = scmp.eq.s32.totalorder %s19, 1
      %p79 = por %p77, %p78
      %p80 = scmp.ne.s32.totalorder %s69, %s70
      %p81 = scmp.eq.s32.totalorder %s19, 0
      %p82 = por %p80, %p81
      %p83 = scmp.ne.s32.totalorder %s69, %s70
      %p84 = scmp.eq.s32.totalorder %s20, 1
      %p85 = por %p83, %p84
      %p87 = scmp.ne.s32.totalorder %s70, %s86
      %p88 = scmp.eq.s32.totalorder %s20, 0
      %p89 = por %p87, %p88
      %s90 = ssub.s32 %s14, %s21
      %p91 = scmp.eq.s32.totalorder %s90, 0
      %s93 = sadd.s32 %s92, 1
      %s94 = scalar_select %p91, %s92, %s93
      %p97 = pneg %p91
      %p98 = scmp.eq.s32.totalorder %s14, 1
      %p99 = por %p97, %p98
      %p100 = scmp.ne.s32.totalorder %s92, %s95
      %p101 = scmp.eq.s32.totalorder %s14, 0
      %p102 = por %p100, %p101
      %p103 = scmp.ne.s32.totalorder %s92, %s95
      %p104 = scmp.eq.s32.totalorder %s19, 1
      %p105 = por %p103, %p104
      %p106 = scmp.ne.s32.totalorder %s95, %s96
      %p107 = scmp.eq.s32.totalorder %s19, 0
      %p108 = por %p106, %p107
      %p109 = scmp.ne.s32.totalorder %s95, %s96
      %p110 = scmp.eq.s32.totalorder %s20, 1
      %p111 = por %p109, %p110
      %p113 = scmp.ne.s32.totalorder %s96, %s112
      %p114 = scmp.eq.s32.totalorder %s20, 0
      %p115 = por %p113, %p114
      %s116 = ssub.s32 %s14, %s21
      %p117 = scmp.eq.s32.totalorder %s116, 0
      %s119 = sadd.s32 %s118, 1
      %s120 = scalar_select %p117, %s118, %s119
      %p123 = pneg %p117
      %p124 = scmp.eq.s32.totalorder %s14, 1
      %p125 = por %p123, %p124
      %p126 = scmp.ne.s32.totalorder %s118, %s121
      %p127 = scmp.eq.s32.totalorder %s14, 0
      %p128 = por %p126, %p127
      %p129 = scmp.ne.s32.totalorder %s118, %s121
      %p130 = scmp.eq.s32.totalorder %s19, 1
      %p131 = por %p129, %p130
      %p132 = scmp.ne.s32.totalorder %s121, %s122
      %p133 = scmp.eq.s32.totalorder %s19, 0
      %p134 = por %p132, %p133
      %p135 = scmp.ne.s32.totalorder %s121, %s122
      %p136 = scmp.eq.s32.totalorder %s20, 1
      %p137 = por %p135, %p136
      %p139 = scmp.ne.s32.totalorder %s122, %s138
      %p140 = scmp.eq.s32.totalorder %s20, 0
      %p141 = por %p139, %p140
      %p142 = scmp.le.s32.totalorder 1, %s14
      %p143 = scmp.lt.s32.totalorder %s14, 3
      %p144 = pnand %p142, %p143
      %p145 = pneg %p144
      // Predicated region
      $region9: #{mesh_upsampling_decoder.1} parent=5 // pred_check
        _
      $region10: #{mesh_upsampling_decoder.1} parent=5 // pred_check_branch
        %147 = sbr.rel (%p144) target = $region12
      $region11: #{mesh_upsampling_decoder.1} parent=5 // pred_region
        %s148 = ssub.s32 %s14, 1
        // Predicated region
        $region13: #{mesh_upsampling_decoder.1} parent=11 // pred_check
          %p149 = pneg %p35
        $region14: #{mesh_upsampling_decoder.1} parent=11 // pred_check_branch
          %151 = sbr.rel (%p149) target = $region16
        $region15: #{mesh_upsampling_decoder.1} parent=11 // pred_region
          _
        $region16: #{mesh_upsampling_decoder.1} parent=11 // pred_fallthru
          _
        // Predicated region
        $region17: #{mesh_upsampling_decoder.1} parent=11 // pred_check
          %p152 = pneg %p56
        $region18: #{mesh_upsampling_decoder.1} parent=11 // pred_check_branch
          %154 = sbr.rel (%p152) target = $region20
        $region19: #{mesh_upsampling_decoder.1} parent=11 // pred_region
          %156 = vsyncadd [#allocation3], 0
          %s158 = sshll.u32 %s1, 4
          %s159 = int_to_ptr.hbm [resolvable:$true] %s158
          %s160 = sshll.u32 [#allocation2], 4
          %s161 = int_to_ptr.vmem [resolvable:$true] %s160
          %163 = dma.hbm_to_vmem [thread:$0]  %s159, 80, %s161, [#allocation3]
        $region20: #{mesh_upsampling_decoder.1} parent=11 // pred_fallthru
          _
      $region12: #{mesh_upsampling_decoder.1} parent=5 // pred_fallthru
        _
      %p164 = scmp.lt.s32.totalorder %s14, 2
      // Predicated region
      $region21: #{mesh_upsampling_decoder.1} parent=5 // pred_check
        %p165 = pneg %p164
      $region22: #{mesh_upsampling_decoder.1} parent=5 // pred_check_branch
        %167 = sbr.rel (%p165) target = $region24
      $region23: #{mesh_upsampling_decoder.1} parent=5 // pred_region
        // Predicated region
        $region25: #{mesh_upsampling_decoder.1} parent=23 // pred_check
          %p168 = pneg %p76
        $region26: #{mesh_upsampling_decoder.1} parent=23 // pred_check_branch
          %170 = sbr.rel (%p168) target = $region28
        $region27: #{mesh_upsampling_decoder.1} parent=23 // pred_region
          %s171 = sand.u32 %s14, 1
          %s172 = scalar_lea.sflag [#allocation5], %s171
          %s173 = sand.u32 %s66, 1
          %s174 = smul.addr %s173, 27
          %s175 = scalar_lea.vmem [#allocation4], %s174
          %s176 = smul.u32 27, %s14
          %178 = vsyncadd %s172, 0
          %s179 = scalar_lea.hbm %s2, %s176
          %s181 = sshll.u32 %s179, 4
          %s182 = int_to_ptr.hbm [resolvable:$true] %s181
          %s183 = sshll.u32 %s175, 4
          %s184 = int_to_ptr.vmem [resolvable:$true] %s183
          %186 = dma.hbm_to_vmem [thread:$0]  %s182, 432, %s184, %s172
        $region28: #{mesh_upsampling_decoder.1} parent=23 // pred_fallthru
          _
        // Predicated region
        $region29: #{mesh_upsampling_decoder.1} parent=23 // pred_check
          %p187 = pneg %p102
        $region30: #{mesh_upsampling_decoder.1} parent=23 // pred_check_branch
          %189 = sbr.rel (%p187) target = $region32
        $region31: #{mesh_upsampling_decoder.1} parent=23 // pred_region
          %s190 = sand.u32 %s14, 1
          %s191 = scalar_lea.sflag [#allocation5], %s190
          %s192 = sand.u32 %s92, 1
          %s193 = smul.addr %s192, 7128
          %s194 = scalar_lea.vmem [#allocation6], %s193
          %196 = vsyncadd %s191, 0
          %s197 = smul.addr %s14, 1782
          %s198 = smul.addr %s197, 4
          %s199 = scalar_lea.hbm %s3, %s198
          %s200 = sshll.u32 %s199, 4
          %s201 = int_to_ptr.hbm [resolvable:$true] %s200
          %s202 = sshll.u32 %s194, 4
          %s203 = int_to_ptr.vmem [resolvable:$true] %s202
          %208 = dma.hbm_to_vmem [thread:$0]  %s201, 114048, %s203, %s191, 1728, 1728, 108
        $region32: #{mesh_upsampling_decoder.1} parent=23 // pred_fallthru
          _
      $region24: #{mesh_upsampling_decoder.1} parent=5 // pred_fallthru
        _
      %p209 = scmp.le.s32.totalorder 1, %s14
      %p210 = scmp.lt.s32.totalorder %s14, 3
      %p211 = pnand %p209, %p210
      %p212 = pneg %p211
      // Predicated region
      $region33: #{mesh_upsampling_decoder.1} parent=5 // pred_check
        _
      $region34: #{mesh_upsampling_decoder.1} parent=5 // pred_check_branch
        %214 = sbr.rel (%p211) target = $region36
      $region35: #{mesh_upsampling_decoder.1} parent=5 // pred_region
        %s215 = ssub.s32 %s14, 1
        // Predicated region
        $region37: #{mesh_upsampling_decoder.1} parent=35 // pred_check
          %p216 = pneg %p56
        $region38: #{mesh_upsampling_decoder.1} parent=35 // pred_check_branch
          %218 = sbr.rel (%p216) target = $region40
        $region39: #{mesh_upsampling_decoder.1} parent=35 // pred_region
          %220 = dma.done [#allocation3], 80
        $region40: #{mesh_upsampling_decoder.1} parent=35 // pred_fallthru
          _
        %s221 = sand.u32 %s19, 1
        %s222 = scalar_lea.sflag [#allocation5], %s221
        %s223 = sand.u32 %s69, 1
        %s224 = smul.addr %s223, 27
        %s225 = scalar_lea.vmem [#allocation4], %s224
        // Predicated region
        $region41: #{mesh_upsampling_decoder.1} parent=35 // pred_check
          %p226 = pneg %p82
        $region42: #{mesh_upsampling_decoder.1} parent=35 // pred_check_branch
          %228 = sbr.rel (%p226) target = $region44
        $region43: #{mesh_upsampling_decoder.1} parent=35 // pred_region
          %230 = dma.done %s222, 432
        $region44: #{mesh_upsampling_decoder.1} parent=35 // pred_fallthru
          _
        %s231 = sand.u32 %s19, 1
        %s232 = scalar_lea.sflag [#allocation5], %s231
        %s233 = sand.u32 %s95, 1
        %s234 = smul.addr %s233, 7128
        %s235 = scalar_lea.vmem [#allocation6], %s234
        // Predicated region
        $region45: #{mesh_upsampling_decoder.1} parent=35 // pred_check
          %p236 = pneg %p108
        $region46: #{mesh_upsampling_decoder.1} parent=35 // pred_check_branch
          %238 = sbr.rel (%p236) target = $region48
        $region47: #{mesh_upsampling_decoder.1} parent=35 // pred_region
          %240 = dma.done %s232, 114048
        $region48: #{mesh_upsampling_decoder.1} parent=35 // pred_fallthru
          _
        %p241 = pneg %p35
        %p242 = pneg %p32
        %p243 = pneg %p56
        %p244 = pneg %p53
        %s245 = sand.u32 %s19, 1
        %s246 = scalar_lea.sflag [#allocation5], %s245
        %s247 = sand.u32 %s69, 1
        %s248 = smul.addr %s247, 27
        %s249 = scalar_lea.vmem [#allocation4], %s248
        %p250 = pneg %p82
        %p251 = pneg %p79
        %s252 = sand.u32 %s19, 1
        %s253 = scalar_lea.sflag [#allocation5], %s252
        %s254 = sand.u32 %s95, 1
        %s255 = smul.addr %s254, 7128
        %s256 = scalar_lea.vmem [#allocation6], %s255
        %p257 = pneg %p108
        %p258 = pneg %p105
        %p259 = pneg %p134
        %p260 = pneg %p131
        %s261 = smul.u32 27, %s19
        %p262 = scmp.lt.s32.totalorder %s261, 53
        %s263 = scalar_select %p262, %s261, 53
        %s264 = smul.addr %s263, 8
        %s265 = scalar_lea.vmem %s4, %s264
        %s266 = smul.u32 27, %s19
        %s267 = smul.u32 27, %s19
        %p268 = scmp.lt.s32.totalorder %s267, 53
        %s269 = scalar_select %p268, %s267, 53
        %s270 = smul.addr %s269, 8
        %s271 = scalar_lea.vmem %s4, %s270
        %s272 = smul.u32 27, %s19
        %v274 = vld [vmem:[%s0] sm:$0xff]
        %v275 = vld [vmem:[%s0 + $0x8] sm:$0xff]
        %v276 = vld [vmem:[%s0 + $0x10] sm:$0xff]
        %v277 = vld [vmem:[%s0 + $0x18] sm:$0xff]
        %v278 = vld [vmem:[%s0 + $0x20] sm:$0xff]
        %v279 = vld [vmem:[#allocation2] sm:$0x1f]
        %v281 = vperm.slane %v279, 0
        %v282 = vperm.slane %v279, 1
        %v283 = vperm.slane %v279, 2
        %v284 = vperm.slane %v279, 3
        %v285 = vperm.slane %v279, 4
        %v291 = vmul.f32 %v274, %v281
        %v292 = vmul.f32 %v275, %v282
        %v293 = vmul.f32 %v276, %v283
        %v294 = vmul.f32 %v277, %v284
        %v295 = vmul.f32 %v278, %v285
        %v296 = vadd.f32 %v291, %v292
        %v297 = vadd.f32 %v296, %v293
        %v298 = vadd.f32 %v297, %v294
        %vm299 = vcmask 130048
        %v300 = vsel %vm299, %v295, 0.0
        %v301 = vadd.f32 %v298, %v300
        %302 = vadd.xlane.f32.xlu0 %v301
        %v303 = vpop.xlane.xlu0 %302
        %v304 = vsub.f32 %v274, %v303
        %v305 = vsub.f32 %v275, %v303
        %v306 = vsub.f32 %v276, %v303
        %v307 = vsub.f32 %v277, %v303
        %v308 = vsub.f32 %v278, %v303
        %v309 = vpack.c.bf16 %v304, %v304
        %v310 = vpack.c.bf16 %v305, %v305
        %v311 = vpack.c.bf16 %v306, %v306
        %v312 = vpack.c.bf16 %v307, %v307
        %v313 = vpack.c.bf16 %v308, %v308
        %v314 = vld [vmem:[%s235] sm:$0xff]
        %v315 = vld [vmem:[%s235 + $0x8] sm:$0xff]
        %v316 = vld [vmem:[%s235 + $0x10] sm:$0xff]
        %v317 = vld [vmem:[%s235 + $0x18] sm:$0xff]
        %v318 = vld [vmem:[%s235 + $0x20] sm:$0xff]
        %v319 = vld [vmem:[%s235 + $0x28] sm:$0xff]
        %v320 = vld [vmem:[%s235 + $0x30] sm:$0xff]
        %v321 = vld [vmem:[%s235 + $0x38] sm:$0xff]
        %v322 = vld [vmem:[%s235 + $0x40] sm:$0xff]
        %v323 = vld [vmem:[%s235 + $0x48] sm:$0xff]
        %v324 = vld [vmem:[%s235 + $0x50] sm:$0xff]
        %v325 = vld [vmem:[%s235 + $0x58] sm:$0xff]
        %v326 = vld [vmem:[%s235 + $0x60] sm:$0xff]
        %v327 = vld [vmem:[%s235 + $0x68] sm:$0xf]
        %v328 = vld [vmem:[%s235 + $0x6c] sm:$0xff]
        %v329 = vld [vmem:[%s235 + $0x74] sm:$0xff]
        %v330 = vld [vmem:[%s235 + $0x7c] sm:$0xff]
        %v331 = vld [vmem:[%s235 + $0x84] sm:$0xff]
        %v332 = vld [vmem:[%s235 + $0x8c] sm:$0xff]
        %v333 = vld [vmem:[%s235 + $0x94] sm:$0xff]
        %v334 = vld [vmem:[%s235 + $0x9c] sm:$0xff]
        %v335 = vld [vmem:[%s235 + $0xa4] sm:$0xff]
        %v336 = vld [vmem:[%s235 + $0xac] sm:$0xff]
        %v337 = vld [vmem:[%s235 + $0xb4] sm:$0xff]
        %v338 = vld [vmem:[%s235 + $0xbc] sm:$0xff]
        %v339 = vld [vmem:[%s235 + $0xc4] sm:$0xff]
        %v340 = vld [vmem:[%s235 + $0xcc] sm:$0xff]
        %v341 = vld [vmem:[%s235 + $0xd4] sm:$0xf]
        %v342 = vld [vmem:[%s235 + $0xd8] sm:$0xff]
        %v343 = vld [vmem:[%s235 + $0xe0] sm:$0xff]
        %v344 = vld [vmem:[%s235 + $0xe8] sm:$0xff]
        %v345 = vld [vmem:[%s235 + $0xf0] sm:$0xff]
        %v346 = vld [vmem:[%s235 + $0xf8] sm:$0xff]
        %v347 = vld [vmem:[%s235 + $0x100] sm:$0xff]
        %v348 = vld [vmem:[%s235 + $0x108] sm:$0xff]
        %v349 = vld [vmem:[%s235 + $0x110] sm:$0xff]
        %v350 = vld [vmem:[%s235 + $0x118] sm:$0xff]
        %v351 = vld [vmem:[%s235 + $0x120] sm:$0xff]
        %v352 = vld [vmem:[%s235 + $0x128] sm:$0xff]
        %v353 = vld [vmem:[%s235 + $0x130] sm:$0xff]
        %v354 = vld [vmem:[%s235 + $0x138] sm:$0xff]
        %v355 = vld [vmem:[%s235 + $0x140] sm:$0xf]
        %v356 = vld [vmem:[%s235 + $0x144] sm:$0xff]
        %v357 = vld [vmem:[%s235 + $0x14c] sm:$0xff]
        %v358 = vld [vmem:[%s235 + $0x154] sm:$0xff]
        %v359 = vld [vmem:[%s235 + $0x15c] sm:$0xff]
        %v360 = vld [vmem:[%s235 + $0x164] sm:$0xff]
        %v361 = vld [vmem:[%s235 + $0x16c] sm:$0xff]
        %v362 = vld [vmem:[%s235 + $0x174] sm:$0xff]
        %v363 = vld [vmem:[%s235 + $0x17c] sm:$0xff]
        %v364 = vld [vmem:[%s235 + $0x184] sm:$0xff]
        %v365 = vld [vmem:[%s235 + $0x18c] sm:$0xff]
        %v366 = vld [vmem:[%s235 + $0x194] sm:$0xff]
        %v367 = vld [vmem:[%s235 + $0x19c] sm:$0xff]
        %v368 = vld [vmem:[%s235 + $0x1a4] sm:$0xff]
        %v369 = vld [vmem:[%s235 + $0x1ac] sm:$0xf]
        %v370 = vld [vmem:[%s235 + $0x1b0] sm:$0xff]
        %v371 = vld [vmem:[%s235 + $0x1b8] sm:$0xff]
        %v372 = vld [vmem:[%s235 + $0x1c0] sm:$0xff]
        %v373 = vld [vmem:[%s235 + $0x1c8] sm:$0xff]
        %v374 = vld [vmem:[%s235 + $0x1d0] sm:$0xff]
        %v375 = vld [vmem:[%s235 + $0x1d8] sm:$0xff]
        %v376 = vld [vmem:[%s235 + $0x1e0] sm:$0xff]
        %v377 = vld [vmem:[%s235 + $0x1e8] sm:$0xff]
        %v378 = vld [vmem:[%s235 + $0x1f0] sm:$0xff]
        %v379 = vld [vmem:[%s235 + $0x1f8] sm:$0xff]
        %v380 = vld [vmem:[%s235 + $0x200] sm:$0xff]
        %v381 = vld [vmem:[%s235 + $0x208] sm:$0xff]
        %v382 = vld [vmem:[%s235 + $0x210] sm:$0xff]
        %v383 = vld [vmem:[%s235 + $0x218] sm:$0xf]
        %v384 = vld [vmem:[%s235 + $0x21c] sm:$0xff]
        %v385 = vld [vmem:[%s235 + $0x224] sm:$0xff]
        %v386 = vld [vmem:[%s235 + $0x22c] sm:$0xff]
        %v387 = vld [vmem:[%s235 + $0x234] sm:$0xff]
        %v388 = vld [vmem:[%s235 + $0x23c] sm:$0xff]
        %v389 = vld [vmem:[%s235 + $0x244] sm:$0xff]
        %v390 = vld [vmem:[%s235 + $0x24c] sm:$0xff]
        %v391 = vld [vmem:[%s235 + $0x254] sm:$0xff]
        %v392 = vld [vmem:[%s235 + $0x25c] sm:$0xff]
        %v393 = vld [vmem:[%s235 + $0x264] sm:$0xff]
        %v394 = vld [vmem:[%s235 + $0x26c] sm:$0xff]
        %v395 = vld [vmem:[%s235 + $0x274] sm:$0xff]
        %v396 = vld [vmem:[%s235 + $0x27c] sm:$0xff]
        %v397 = vld [vmem:[%s235 + $0x284] sm:$0xf]
        %v398 = vld [vmem:[%s235 + $0x288] sm:$0xff]
        %v399 = vld [vmem:[%s235 + $0x290] sm:$0xff]
        %v400 = vld [vmem:[%s235 + $0x298] sm:$0xff]
        %v401 = vld [vmem:[%s235 + $0x2a0] sm:$0xff]
        %v402 = vld [vmem:[%s235 + $0x2a8] sm:$0xff]
        %v403 = vld [vmem:[%s235 + $0x2b0] sm:$0xff]
        %v404 = vld [vmem:[%s235 + $0x2b8] sm:$0xff]
        %v405 = vld [vmem:[%s235 + $0x2c0] sm:$0xff]
        %v406 = vld [vmem:[%s235 + $0x2c8] sm:$0xff]
        %v407 = vld [vmem:[%s235 + $0x2d0] sm:$0xff]
        %v408 = vld [vmem:[%s235 + $0x2d8] sm:$0xff]
        %v409 = vld [vmem:[%s235 + $0x2e0] sm:$0xff]
        %v410 = vld [vmem:[%s235 + $0x2e8] sm:$0xff]
        %v411 = vld [vmem:[%s235 + $0x2f0] sm:$0xf]
        %v412 = vld [vmem:[%s235 + $0x2f4] sm:$0xff]
        %v413 = vld [vmem:[%s235 + $0x2fc] sm:$0xff]
        %v414 = vld [vmem:[%s235 + $0x304] sm:$0xff]
        %v415 = vld [vmem:[%s235 + $0x30c] sm:$0xff]
        %v416 = vld [vmem:[%s235 + $0x314] sm:$0xff]
        %v417 = vld [vmem:[%s235 + $0x31c] sm:$0xff]
        %v418 = vld [vmem:[%s235 + $0x324] sm:$0xff]
        %v419 = vld [vmem:[%s235 + $0x32c] sm:$0xff]
        %v420 = vld [vmem:[%s235 + $0x334] sm:$0xff]
        %v421 = vld [vmem:[%s235 + $0x33c] sm:$0xff]
        %v422 = vld [vmem:[%s235 + $0x344] sm:$0xff]
        %v423 = vld [vmem:[%s235 + $0x34c] sm:$0xff]
        %v424 = vld [vmem:[%s235 + $0x354] sm:$0xff]
        %v425 = vld [vmem:[%s235 + $0x35c] sm:$0xf]
        %v426 = vld [vmem:[%s235 + $0x360] sm:$0xff]
        %v427 = vld [vmem:[%s235 + $0x368] sm:$0xff]
        %v428 = vld [vmem:[%s235 + $0x370] sm:$0xff]
        %v429 = vld [vmem:[%s235 + $0x378] sm:$0xff]
        %v430 = vld [vmem:[%s235 + $0x380] sm:$0xff]
        %v431 = vld [vmem:[%s235 + $0x388] sm:$0xff]
        %v432 = vld [vmem:[%s235 + $0x390] sm:$0xff]
        %v433 = vld [vmem:[%s235 + $0x398] sm:$0xff]
        %v434 = vld [vmem:[%s235 + $0x3a0] sm:$0xff]
        %v435 = vld [vmem:[%s235 + $0x3a8] sm:$0xff]
        %v436 = vld [vmem:[%s235 + $0x3b0] sm:$0xff]
        %v437 = vld [vmem:[%s235 + $0x3b8] sm:$0xff]
        %v438 = vld [vmem:[%s235 + $0x3c0] sm:$0xff]
        %v439 = vld [vmem:[%s235 + $0x3c8] sm:$0xf]
        %v440 = vld [vmem:[%s235 + $0x3cc] sm:$0xff]
        %v441 = vld [vmem:[%s235 + $0x3d4] sm:$0xff]
        %v442 = vld [vmem:[%s235 + $0x3dc] sm:$0xff]
        %v443 = vld [vmem:[%s235 + $0x3e4] sm:$0xff]
        %v444 = vld [vmem:[%s235 + $0x3ec] sm:$0xff]
        %v445 = vld [vmem:[%s235 + $0x3f4] sm:$0xff]
        %v446 = vld [vmem:[%s235 + $0x3fc] sm:$0xff]
        %v447 = vld [vmem:[%s235 + $0x404] sm:$0xff]
        %v448 = vld [vmem:[%s235 + $0x40c] sm:$0xff]
        %v449 = vld [vmem:[%s235 + $0x414] sm:$0xff]
        %v450 = vld [vmem:[%s235 + $0x41c] sm:$0xff]
        %v451 = vld [vmem:[%s235 + $0x424] sm:$0xff]
        %v452 = vld [vmem:[%s235 + $0x42c] sm:$0xff]
        %v453 = vld [vmem:[%s235 + $0x434] sm:$0xf]
        %v454 = vld [vmem:[%s235 + $0x438] sm:$0xff]
        %v455 = vld [vmem:[%s235 + $0x440] sm:$0xff]
        %v456 = vld [vmem:[%s235 + $0x448] sm:$0xff]
        %v457 = vld [vmem:[%s235 + $0x450] sm:$0xff]
        %v458 = vld [vmem:[%s235 + $0x458] sm:$0xff]
        %v459 = vld [vmem:[%s235 + $0x460] sm:$0xff]
        %v460 = vld [vmem:[%s235 + $0x468] sm:$0xff]
        %v461 = vld [vmem:[%s235 + $0x470] sm:$0xff]
        %v462 = vld [vmem:[%s235 + $0x478] sm:$0xff]
        %v463 = vld [vmem:[%s235 + $0x480] sm:$0xff]
        %v464 = vld [vmem:[%s235 + $0x488] sm:$0xff]
        %v465 = vld [vmem:[%s235 + $0x490] sm:$0xff]
        %v466 = vld [vmem:[%s235 + $0x498] sm:$0xff]
        %v467 = vld [vmem:[%s235 + $0x4a0] sm:$0xf]
        %v468 = vld [vmem:[%s235 + $0x4a4] sm:$0xff]
        %v469 = vld [vmem:[%s235 + $0x4ac] sm:$0xff]
        %v470 = vld [vmem:[%s235 + $0x4b4] sm:$0xff]
        %v471 = vld [vmem:[%s235 + $0x4bc] sm:$0xff]
        %v472 = vld [vmem:[%s235 + $0x4c4] sm:$0xff]
        %v473 = vld [vmem:[%s235 + $0x4cc] sm:$0xff]
        %v474 = vld [vmem:[%s235 + $0x4d4] sm:$0xff]
        %v475 = vld [vmem:[%s235 + $0x4dc] sm:$0xff]
        %v476 = vld [vmem:[%s235 + $0x4e4] sm:$0xff]
        %v477 = vld [vmem:[%s235 + $0x4ec] sm:$0xff]
        %v478 = vld [vmem:[%s235 + $0x4f4] sm:$0xff]
        %v479 = vld [vmem:[%s235 + $0x4fc] sm:$0xff]
        %v480 = vld [vmem:[%s235 + $0x504] sm:$0xff]
        %v481 = vld [vmem:[%s235 + $0x50c] sm:$0xf]
        %v482 = vld [vmem:[%s235 + $0x510] sm:$0xff]
        %v483 = vld [vmem:[%s235 + $0x518] sm:$0xff]
        %v484 = vld [vmem:[%s235 + $0x520] sm:$0xff]
        %v485 = vld [vmem:[%s235 + $0x528] sm:$0xff]
        %v486 = vld [vmem:[%s235 + $0x530] sm:$0xff]
        %v487 = vld [vmem:[%s235 + $0x538] sm:$0xff]
        %v488 = vld [vmem:[%s235 + $0x540] sm:$0xff]
        %v489 = vld [vmem:[%s235 + $0x548] sm:$0xff]
        %v490 = vld [vmem:[%s235 + $0x550] sm:$0xff]
        %v491 = vld [vmem:[%s235 + $0x558] sm:$0xff]
        %v492 = vld [vmem:[%s235 + $0x560] sm:$0xff]
        %v493 = vld [vmem:[%s235 + $0x568] sm:$0xff]
        %v494 = vld [vmem:[%s235 + $0x570] sm:$0xff]
        %v495 = vld [vmem:[%s235 + $0x578] sm:$0xf]
        %v496 = vld [vmem:[%s235 + $0x57c] sm:$0xff]
        %v497 = vld [vmem:[%s235 + $0x584] sm:$0xff]
        %v498 = vld [vmem:[%s235 + $0x58c] sm:$0xff]
        %v499 = vld [vmem:[%s235 + $0x594] sm:$0xff]
        %v500 = vld [vmem:[%s235 + $0x59c] sm:$0xff]
        %v501 = vld [vmem:[%s235 + $0x5a4] sm:$0xff]
        %v502 = vld [vmem:[%s235 + $0x5ac] sm:$0xff]
        %v503 = vld [vmem:[%s235 + $0x5b4] sm:$0xff]
        %v504 = vld [vmem:[%s235 + $0x5bc] sm:$0xff]
        %v505 = vld [vmem:[%s235 + $0x5c4] sm:$0xff]
        %v506 = vld [vmem:[%s235 + $0x5cc] sm:$0xff]
        %v507 = vld [vmem:[%s235 + $0x5d4] sm:$0xff]
        %v508 = vld [vmem:[%s235 + $0x5dc] sm:$0xff]
        %v509 = vld [vmem:[%s235 + $0x5e4] sm:$0xf]
        %v510 = vld [vmem:[%s235 + $0x5e8] sm:$0xff]
        %v511 = vld [vmem:[%s235 + $0x5f0] sm:$0xff]
        %v512 = vld [vmem:[%s235 + $0x5f8] sm:$0xff]
        %v513 = vld [vmem:[%s235 + $0x600] sm:$0xff]
        %v514 = vld [vmem:[%s235 + $0x608] sm:$0xff]
        %v515 = vld [vmem:[%s235 + $0x610] sm:$0xff]
        %v516 = vld [vmem:[%s235 + $0x618] sm:$0xff]
        %v517 = vld [vmem:[%s235 + $0x620] sm:$0xff]
        %v518 = vld [vmem:[%s235 + $0x628] sm:$0xff]
        %v519 = vld [vmem:[%s235 + $0x630] sm:$0xff]
        %v520 = vld [vmem:[%s235 + $0x638] sm:$0xff]
        %v521 = vld [vmem:[%s235 + $0x640] sm:$0xff]
        %v522 = vld [vmem:[%s235 + $0x648] sm:$0xff]
        %v523 = vld [vmem:[%s235 + $0x650] sm:$0xf]
        %v524 = vld [vmem:[%s235 + $0x654] sm:$0xff]
        %v525 = vld [vmem:[%s235 + $0x65c] sm:$0xff]
        %v526 = vld [vmem:[%s235 + $0x664] sm:$0xff]
        %v527 = vld [vmem:[%s235 + $0x66c] sm:$0xff]
        %v528 = vld [vmem:[%s235 + $0x674] sm:$0xff]
        %v529 = vld [vmem:[%s235 + $0x67c] sm:$0xff]
        %v530 = vld [vmem:[%s235 + $0x684] sm:$0xff]
        %v531 = vld [vmem:[%s235 + $0x68c] sm:$0xff]
        %v532 = vld [vmem:[%s235 + $0x694] sm:$0xff]
        %v533 = vld [vmem:[%s235 + $0x69c] sm:$0xff]
        %v534 = vld [vmem:[%s235 + $0x6a4] sm:$0xff]
        %v535 = vld [vmem:[%s235 + $0x6ac] sm:$0xff]
        %v536 = vld [vmem:[%s235 + $0x6b4] sm:$0xff]
        %v537 = vld [vmem:[%s235 + $0x6bc] sm:$0xf]
        %v538 = vld [vmem:[%s235 + $0x6c0] sm:$0xff]
        %v539 = vld [vmem:[%s235 + $0x6c8] sm:$0xff]
        %v540 = vld [vmem:[%s235 + $0x6d0] sm:$0xff]
        %v541 = vld [vmem:[%s235 + $0x6d8] sm:$0xff]
        %v542 = vld [vmem:[%s235 + $0x6e0] sm:$0xff]
        %v543 = vld [vmem:[%s235 + $0x6e8] sm:$0xff]
        %v544 = vld [vmem:[%s235 + $0x6f0] sm:$0xff]
        %v545 = vld [vmem:[%s235 + $0x6f8] sm:$0xff]
        %v546 = vld [vmem:[%s235 + $0x700] sm:$0xff]
        %v547 = vld [vmem:[%s235 + $0x708] sm:$0xff]
        %v548 = vld [vmem:[%s235 + $0x710] sm:$0xff]
        %v549 = vld [vmem:[%s235 + $0x718] sm:$0xff]
        %v550 = vld [vmem:[%s235 + $0x720] sm:$0xff]
        %v551 = vld [vmem:[%s235 + $0x728] sm:$0xf]
        %v552 = vld [vmem:[%s235 + $0x72c] sm:$0xff]
        %v553 = vld [vmem:[%s235 + $0x734] sm:$0xff]
        %v554 = vld [vmem:[%s235 + $0x73c] sm:$0xff]
        %v555 = vld [vmem:[%s235 + $0x744] sm:$0xff]
        %v556 = vld [vmem:[%s235 + $0x74c] sm:$0xff]
        %v557 = vld [vmem:[%s235 + $0x754] sm:$0xff]
        %v558 = vld [vmem:[%s235 + $0x75c] sm:$0xff]
        %v559 = vld [vmem:[%s235 + $0x764] sm:$0xff]
        %v560 = vld [vmem:[%s235 + $0x76c] sm:$0xff]
        %v561 = vld [vmem:[%s235 + $0x774] sm:$0xff]
        %v562 = vld [vmem:[%s235 + $0x77c] sm:$0xff]
        %v563 = vld [vmem:[%s235 + $0x784] sm:$0xff]
        %v564 = vld [vmem:[%s235 + $0x78c] sm:$0xff]
        %v565 = vld [vmem:[%s235 + $0x794] sm:$0xf]
        %v566 = vld [vmem:[%s235 + $0x798] sm:$0xff]
        %v567 = vld [vmem:[%s235 + $0x7a0] sm:$0xff]
        %v568 = vld [vmem:[%s235 + $0x7a8] sm:$0xff]
        %v569 = vld [vmem:[%s235 + $0x7b0] sm:$0xff]
        %v570 = vld [vmem:[%s235 + $0x7b8] sm:$0xff]
        %v571 = vld [vmem:[%s235 + $0x7c0] sm:$0xff]
        %v572 = vld [vmem:[%s235 + $0x7c8] sm:$0xff]
        %v573 = vld [vmem:[%s235 + $0x7d0] sm:$0xff]
        %v574 = vld [vmem:[%s235 + $0x7d8] sm:$0xff]
        %v575 = vld [vmem:[%s235 + $0x7e0] sm:$0xff]
        %v576 = vld [vmem:[%s235 + $0x7e8] sm:$0xff]
        %v577 = vld [vmem:[%s235 + $0x7f0] sm:$0xff]
        %v578 = vld [vmem:[%s235 + $0x7f8] sm:$0xff]
        %v579 = vld [vmem:[%s235 + $0x800] sm:$0xf]
        %v580 = vld [vmem:[%s235 + $0x804] sm:$0xff]
        %v581 = vld [vmem:[%s235 + $0x80c] sm:$0xff]
        %v582 = vld [vmem:[%s235 + $0x814] sm:$0xff]
        %v583 = vld [vmem:[%s235 + $0x81c] sm:$0xff]
        %v584 = vld [vmem:[%s235 + $0x824] sm:$0xff]
        %v585 = vld [vmem:[%s235 + $0x82c] sm:$0xff]
        %v586 = vld [vmem:[%s235 + $0x834] sm:$0xff]
        %v587 = vld [vmem:[%s235 + $0x83c] sm:$0xff]
        %v588 = vld [vmem:[%s235 + $0x844] sm:$0xff]
        %v589 = vld [vmem:[%s235 + $0x84c] sm:$0xff]
        %v590 = vld [vmem:[%s235 + $0x854] sm:$0xff]
        %v591 = vld [vmem:[%s235 + $0x85c] sm:$0xff]
        %v592 = vld [vmem:[%s235 + $0x864] sm:$0xff]
        %v593 = vld [vmem:[%s235 + $0x86c] sm:$0xf]
        %v594 = vld [vmem:[%s235 + $0x870] sm:$0xff]
        %v595 = vld [vmem:[%s235 + $0x878] sm:$0xff]
        %v596 = vld [vmem:[%s235 + $0x880] sm:$0xff]
        %v597 = vld [vmem:[%s235 + $0x888] sm:$0xff]
        %v598 = vld [vmem:[%s235 + $0x890] sm:$0xff]
        %v599 = vld [vmem:[%s235 + $0x898] sm:$0xff]
        %v600 = vld [vmem:[%s235 + $0x8a0] sm:$0xff]
        %v601 = vld [vmem:[%s235 + $0x8a8] sm:$0xff]
        %v602 = vld [vmem:[%s235 + $0x8b0] sm:$0xff]
        %v603 = vld [vmem:[%s235 + $0x8b8] sm:$0xff]
        %v604 = vld [vmem:[%s235 + $0x8c0] sm:$0xff]
        %v605 = vld [vmem:[%s235 + $0x8c8] sm:$0xff]
        %v606 = vld [vmem:[%s235 + $0x8d0] sm:$0xff]
        %v607 = vld [vmem:[%s235 + $0x8d8] sm:$0xf]
        %v608 = vld [vmem:[%s235 + $0x8dc] sm:$0xff]
        %v609 = vld [vmem:[%s235 + $0x8e4] sm:$0xff]
        %v610 = vld [vmem:[%s235 + $0x8ec] sm:$0xff]
        %v611 = vld [vmem:[%s235 + $0x8f4] sm:$0xff]
        %v612 = vld [vmem:[%s235 + $0x8fc] sm:$0xff]
        %v613 = vld [vmem:[%s235 + $0x904] sm:$0xff]
        %v614 = vld [vmem:[%s235 + $0x90c] sm:$0xff]
        %v615 = vld [vmem:[%s235 + $0x914] sm:$0xff]
        %v616 = vld [vmem:[%s235 + $0x91c] sm:$0xff]
        %v617 = vld [vmem:[%s235 + $0x924] sm:$0xff]
        %v618 = vld [vmem:[%s235 + $0x92c] sm:$0xff]
        %v619 = vld [vmem:[%s235 + $0x934] sm:$0xff]
        %v620 = vld [vmem:[%s235 + $0x93c] sm:$0xff]
        %v621 = vld [vmem:[%s235 + $0x944] sm:$0xf]
        %v622 = vld [vmem:[%s235 + $0x948] sm:$0xff]
        %v623 = vld [vmem:[%s235 + $0x950] sm:$0xff]
        %v624 = vld [vmem:[%s235 + $0x958] sm:$0xff]
        %v625 = vld [vmem:[%s235 + $0x960] sm:$0xff]
        %v626 = vld [vmem:[%s235 + $0x968] sm:$0xff]
        %v627 = vld [vmem:[%s235 + $0x970] sm:$0xff]
        %v628 = vld [vmem:[%s235 + $0x978] sm:$0xff]
        %v629 = vld [vmem:[%s235 + $0x980] sm:$0xff]
        %v630 = vld [vmem:[%s235 + $0x988] sm:$0xff]
        %v631 = vld [vmem:[%s235 + $0x990] sm:$0xff]
        %v632 = vld [vmem:[%s235 + $0x998] sm:$0xff]
        %v633 = vld [vmem:[%s235 + $0x9a0] sm:$0xff]
        %v634 = vld [vmem:[%s235 + $0x9a8] sm:$0xff]
        %v635 = vld [vmem:[%s235 + $0x9b0] sm:$0xf]
        %v636 = vld [vmem:[%s235 + $0x9b4] sm:$0xff]
        %v637 = vld [vmem:[%s235 + $0x9bc] sm:$0xff]
        %v638 = vld [vmem:[%s235 + $0x9c4] sm:$0xff]
        %v639 = vld [vmem:[%s235 + $0x9cc] sm:$0xff]
        %v640 = vld [vmem:[%s235 + $0x9d4] sm:$0xff]
        %v641 = vld [vmem:[%s235 + $0x9dc] sm:$0xff]
        %v642 = vld [vmem:[%s235 + $0x9e4] sm:$0xff]
        %v643 = vld [vmem:[%s235 + $0x9ec] sm:$0xff]
        %v644 = vld [vmem:[%s235 + $0x9f4] sm:$0xff]
        %v645 = vld [vmem:[%s235 + $0x9fc] sm:$0xff]
        %v646 = vld [vmem:[%s235 + $0xa04] sm:$0xff]
        %v647 = vld [vmem:[%s235 + $0xa0c] sm:$0xff]
        %v648 = vld [vmem:[%s235 + $0xa14] sm:$0xff]
        %v649 = vld [vmem:[%s235 + $0xa1c] sm:$0xf]
        %v650 = vld [vmem:[%s235 + $0xa20] sm:$0xff]
        %v651 = vld [vmem:[%s235 + $0xa28] sm:$0xff]
        %v652 = vld [vmem:[%s235 + $0xa30] sm:$0xff]
        %v653 = vld [vmem:[%s235 + $0xa38] sm:$0xff]
        %v654 = vld [vmem:[%s235 + $0xa40] sm:$0xff]
        %v655 = vld [vmem:[%s235 + $0xa48] sm:$0xff]
        %v656 = vld [vmem:[%s235 + $0xa50] sm:$0xff]
        %v657 = vld [vmem:[%s235 + $0xa58] sm:$0xff]
        %v658 = vld [vmem:[%s235 + $0xa60] sm:$0xff]
        %v659 = vld [vmem:[%s235 + $0xa68] sm:$0xff]
        %v660 = vld [vmem:[%s235 + $0xa70] sm:$0xff]
        %v661 = vld [vmem:[%s235 + $0xa78] sm:$0xff]
        %v662 = vld [vmem:[%s235 + $0xa80] sm:$0xff]
        %v663 = vld [vmem:[%s235 + $0xa88] sm:$0xf]
        %v664 = vld [vmem:[%s235 + $0xa8c] sm:$0xff]
        %v665 = vld [vmem:[%s235 + $0xa94] sm:$0xff]
        %v666 = vld [vmem:[%s235 + $0xa9c] sm:$0xff]
        %v667 = vld [vmem:[%s235 + $0xaa4] sm:$0xff]
        %v668 = vld [vmem:[%s235 + $0xaac] sm:$0xff]
        %v669 = vld [vmem:[%s235 + $0xab4] sm:$0xff]
        %v670 = vld [vmem:[%s235 + $0xabc] sm:$0xff]
        %v671 = vld [vmem:[%s235 + $0xac4] sm:$0xff]
        %v672 = vld [vmem:[%s235 + $0xacc] sm:$0xff]
        %v673 = vld [vmem:[%s235 + $0xad4] sm:$0xff]
        %v674 = vld [vmem:[%s235 + $0xadc] sm:$0xff]
        %v675 = vld [vmem:[%s235 + $0xae4] sm:$0xff]
        %v676 = vld [vmem:[%s235 + $0xaec] sm:$0xff]
        %v677 = vld [vmem:[%s235 + $0xaf4] sm:$0xf]
        %v678 = vld [vmem:[%s235 + $0xaf8] sm:$0xff]
        %v679 = vld [vmem:[%s235 + $0xb00] sm:$0xff]
        %v680 = vld [vmem:[%s235 + $0xb08] sm:$0xff]
        %v681 = vld [vmem:[%s235 + $0xb10] sm:$0xff]
        %v682 = vld [vmem:[%s235 + $0xb18] sm:$0xff]
        %v683 = vld [vmem:[%s235 + $0xb20] sm:$0xff]
        %v684 = vld [vmem:[%s235 + $0xb28] sm:$0xff]
        %v685 = vld [vmem:[%s235 + $0xb30] sm:$0xff]
        %v686 = vld [vmem:[%s235 + $0xb38] sm:$0xff]
        %v687 = vld [vmem:[%s235 + $0xb40] sm:$0xff]
        %v688 = vld [vmem:[%s235 + $0xb48] sm:$0xff]
        %v689 = vld [vmem:[%s235 + $0xb50] sm:$0xff]
        %v690 = vld [vmem:[%s235 + $0xb58] sm:$0xff]
        %v691 = vld [vmem:[%s235 + $0xb60] sm:$0xf]
        %v692 = vld [vmem:[%s235 + $0xb64] sm:$0xff]
        %v693 = vld [vmem:[%s235 + $0xb6c] sm:$0xff]
        %v694 = vld [vmem:[%s235 + $0xb74] sm:$0xff]
        %v695 = vld [vmem:[%s235 + $0xb7c] sm:$0xff]
        %v696 = vld [vmem:[%s235 + $0xb84] sm:$0xff]
        %v697 = vld [vmem:[%s235 + $0xb8c] sm:$0xff]
        %v698 = vld [vmem:[%s235 + $0xb94] sm:$0xff]
        %v699 = vld [vmem:[%s235 + $0xb9c] sm:$0xff]
        %v700 = vld [vmem:[%s235 + $0xba4] sm:$0xff]
        %v701 = vld [vmem:[%s235 + $0xbac] sm:$0xff]
        %v702 = vld [vmem:[%s235 + $0xbb4] sm:$0xff]
        %v703 = vld [vmem:[%s235 + $0xbbc] sm:$0xff]
        %v704 = vld [vmem:[%s235 + $0xbc4] sm:$0xff]
        %v705 = vld [vmem:[%s235 + $0xbcc] sm:$0xf]
        %v706 = vld [vmem:[%s235 + $0xbd0] sm:$0xff]
        %v707 = vld [vmem:[%s235 + $0xbd8] sm:$0xff]
        %v708 = vld [vmem:[%s235 + $0xbe0] sm:$0xff]
        %v709 = vld [vmem:[%s235 + $0xbe8] sm:$0xff]
        %v710 = vld [vmem:[%s235 + $0xbf0] sm:$0xff]
        %v711 = vld [vmem:[%s235 + $0xbf8] sm:$0xff]
        %v712 = vld [vmem:[%s235 + $0xc00] sm:$0xff]
        %v713 = vld [vmem:[%s235 + $0xc08] sm:$0xff]
        %v714 = vld [vmem:[%s235 + $0xc10] sm:$0xff]
        %v715 = vld [vmem:[%s235 + $0xc18] sm:$0xff]
        %v716 = vld [vmem:[%s235 + $0xc20] sm:$0xff]
        %v717 = vld [vmem:[%s235 + $0xc28] sm:$0xff]
        %v718 = vld [vmem:[%s235 + $0xc30] sm:$0xff]
        %v719 = vld [vmem:[%s235 + $0xc38] sm:$0xf]
        %v720 = vld [vmem:[%s235 + $0xc3c] sm:$0xff]
        %v721 = vld [vmem:[%s235 + $0xc44] sm:$0xff]
        %v722 = vld [vmem:[%s235 + $0xc4c] sm:$0xff]
        %v723 = vld [vmem:[%s235 + $0xc54] sm:$0xff]
        %v724 = vld [vmem:[%s235 + $0xc5c] sm:$0xff]
        %v725 = vld [vmem:[%s235 + $0xc64] sm:$0xff]
        %v726 = vld [vmem:[%s235 + $0xc6c] sm:$0xff]
        %v727 = vld [vmem:[%s235 + $0xc74] sm:$0xff]
        %v728 = vld [vmem:[%s235 + $0xc7c] sm:$0xff]
        %v729 = vld [vmem:[%s235 + $0xc84] sm:$0xff]
        %v730 = vld [vmem:[%s235 + $0xc8c] sm:$0xff]
        %v731 = vld [vmem:[%s235 + $0xc94] sm:$0xff]
        %v732 = vld [vmem:[%s235 + $0xc9c] sm:$0xff]
        %v733 = vld [vmem:[%s235 + $0xca4] sm:$0xf]
        %v734 = vld [vmem:[%s235 + $0xca8] sm:$0xff]
        %v735 = vld [vmem:[%s235 + $0xcb0] sm:$0xff]
        %v736 = vld [vmem:[%s235 + $0xcb8] sm:$0xff]
        %v737 = vld [vmem:[%s235 + $0xcc0] sm:$0xff]
        %v738 = vld [vmem:[%s235 + $0xcc8] sm:$0xff]
        %v739 = vld [vmem:[%s235 + $0xcd0] sm:$0xff]
        %v740 = vld [vmem:[%s235 + $0xcd8] sm:$0xff]
        %v741 = vld [vmem:[%s235 + $0xce0] sm:$0xff]
        %v742 = vld [vmem:[%s235 + $0xce8] sm:$0xff]
        %v743 = vld [vmem:[%s235 + $0xcf0] sm:$0xff]
        %v744 = vld [vmem:[%s235 + $0xcf8] sm:$0xff]
        %v745 = vld [vmem:[%s235 + $0xd00] sm:$0xff]
        %v746 = vld [vmem:[%s235 + $0xd08] sm:$0xff]
        %v747 = vld [vmem:[%s235 + $0xd10] sm:$0xf]
        %v748 = vld [vmem:[%s235 + $0xd14] sm:$0xff]
        %v749 = vld [vmem:[%s235 + $0xd1c] sm:$0xff]
        %v750 = vld [vmem:[%s235 + $0xd24] sm:$0xff]
        %v751 = vld [vmem:[%s235 + $0xd2c] sm:$0xff]
        %v752 = vld [vmem:[%s235 + $0xd34] sm:$0xff]
        %v753 = vld [vmem:[%s235 + $0xd3c] sm:$0xff]
        %v754 = vld [vmem:[%s235 + $0xd44] sm:$0xff]
        %v755 = vld [vmem:[%s235 + $0xd4c] sm:$0xff]
        %v756 = vld [vmem:[%s235 + $0xd54] sm:$0xff]
        %v757 = vld [vmem:[%s235 + $0xd5c] sm:$0xff]
        %v758 = vld [vmem:[%s235 + $0xd64] sm:$0xff]
        %v759 = vld [vmem:[%s235 + $0xd6c] sm:$0xff]
        %v760 = vld [vmem:[%s235 + $0xd74] sm:$0xff]
        %v761 = vld [vmem:[%s235 + $0xd7c] sm:$0xf]
        %v762 = vld [vmem:[%s235 + $0xd80] sm:$0xff]
        %v763 = vld [vmem:[%s235 + $0xd88] sm:$0xff]
        %v764 = vld [vmem:[%s235 + $0xd90] sm:$0xff]
        %v765 = vld [vmem:[%s235 + $0xd98] sm:$0xff]
        %v766 = vld [vmem:[%s235 + $0xda0] sm:$0xff]
        %v767 = vld [vmem:[%s235 + $0xda8] sm:$0xff]
        %v768 = vld [vmem:[%s235 + $0xdb0] sm:$0xff]
        %v769 = vld [vmem:[%s235 + $0xdb8] sm:$0xff]
        %v770 = vld [vmem:[%s235 + $0xdc0] sm:$0xff]
        %v771 = vld [vmem:[%s235 + $0xdc8] sm:$0xff]
        %v772 = vld [vmem:[%s235 + $0xdd0] sm:$0xff]
        %v773 = vld [vmem:[%s235 + $0xdd8] sm:$0xff]
        %v774 = vld [vmem:[%s235 + $0xde0] sm:$0xff]
        %v775 = vld [vmem:[%s235 + $0xde8] sm:$0xf]
        %v776 = vld [vmem:[%s235 + $0xdec] sm:$0xff]
        %v777 = vld [vmem:[%s235 + $0xdf4] sm:$0xff]
        %v778 = vld [vmem:[%s235 + $0xdfc] sm:$0xff]
        %v779 = vld [vmem:[%s235 + $0xe04] sm:$0xff]
        %v780 = vld [vmem:[%s235 + $0xe0c] sm:$0xff]
        %v781 = vld [vmem:[%s235 + $0xe14] sm:$0xff]
        %v782 = vld [vmem:[%s235 + $0xe1c] sm:$0xff]
        %v783 = vld [vmem:[%s235 + $0xe24] sm:$0xff]
        %v784 = vld [vmem:[%s235 + $0xe2c] sm:$0xff]
        %v785 = vld [vmem:[%s235 + $0xe34] sm:$0xff]
        %v786 = vld [vmem:[%s235 + $0xe3c] sm:$0xff]
        %v787 = vld [vmem:[%s235 + $0xe44] sm:$0xff]
        %v788 = vld [vmem:[%s235 + $0xe4c] sm:$0xff]
        %v789 = vld [vmem:[%s235 + $0xe54] sm:$0xf]
        %v790 = vld [vmem:[%s235 + $0xe58] sm:$0xff]
        %v791 = vld [vmem:[%s235 + $0xe60] sm:$0xff]
        %v792 = vld [vmem:[%s235 + $0xe68] sm:$0xff]
        %v793 = vld [vmem:[%s235 + $0xe70] sm:$0xff]
        %v794 = vld [vmem:[%s235 + $0xe78] sm:$0xff]
        %v795 = vld [vmem:[%s235 + $0xe80] sm:$0xff]
        %v796 = vld [vmem:[%s235 + $0xe88] sm:$0xff]
        %v797 = vld [vmem:[%s235 + $0xe90] sm:$0xff]
        %v798 = vld [vmem:[%s235 + $0xe98] sm:$0xff]
        %v799 = vld [vmem:[%s235 + $0xea0] sm:$0xff]
        %v800 = vld [vmem:[%s235 + $0xea8] sm:$0xff]
        %v801 = vld [vmem:[%s235 + $0xeb0] sm:$0xff]
        %v802 = vld [vmem:[%s235 + $0xeb8] sm:$0xff]
        %v803 = vld [vmem:[%s235 + $0xec0] sm:$0xf]
        %v804 = vld [vmem:[%s235 + $0xec4] sm:$0xff]
        %v805 = vld [vmem:[%s235 + $0xecc] sm:$0xff]
        %v806 = vld [vmem:[%s235 + $0xed4] sm:$0xff]
        %v807 = vld [vmem:[%s235 + $0xedc] sm:$0xff]
        %v808 = vld [vmem:[%s235 + $0xee4] sm:$0xff]
        %v809 = vld [vmem:[%s235 + $0xeec] sm:$0xff]
        %v810 = vld [vmem:[%s235 + $0xef4] sm:$0xff]
        %v811 = vld [vmem:[%s235 + $0xefc] sm:$0xff]
        %v812 = vld [vmem:[%s235 + $0xf04] sm:$0xff]
        %v813 = vld [vmem:[%s235 + $0xf0c] sm:$0xff]
        %v814 = vld [vmem:[%s235 + $0xf14] sm:$0xff]
        %v815 = vld [vmem:[%s235 + $0xf1c] sm:$0xff]
        %v816 = vld [vmem:[%s235 + $0xf24] sm:$0xff]
        %v817 = vld [vmem:[%s235 + $0xf2c] sm:$0xf]
        %v818 = vld [vmem:[%s235 + $0xf30] sm:$0xff]
        %v819 = vld [vmem:[%s235 + $0xf38] sm:$0xff]
        %v820 = vld [vmem:[%s235 + $0xf40] sm:$0xff]
        %v821 = vld [vmem:[%s235 + $0xf48] sm:$0xff]
        %v822 = vld [vmem:[%s235 + $0xf50] sm:$0xff]
        %v823 = vld [vmem:[%s235 + $0xf58] sm:$0xff]
        %v824 = vld [vmem:[%s235 + $0xf60] sm:$0xff]
        %v825 = vld [vmem:[%s235 + $0xf68] sm:$0xff]
        %v826 = vld [vmem:[%s235 + $0xf70] sm:$0xff]
        %v827 = vld [vmem:[%s235 + $0xf78] sm:$0xff]
        %v828 = vld [vmem:[%s235 + $0xf80] sm:$0xff]
        %v829 = vld [vmem:[%s235 + $0xf88] sm:$0xff]
        %v830 = vld [vmem:[%s235 + $0xf90] sm:$0xff]
        %v831 = vld [vmem:[%s235 + $0xf98] sm:$0xf]
        %v832 = vld [vmem:[%s235 + $0xf9c] sm:$0xff]
        %v833 = vld [vmem:[%s235 + $0xfa4] sm:$0xff]
        %v834 = vld [vmem:[%s235 + $0xfac] sm:$0xff]
        %v835 = vld [vmem:[%s235 + $0xfb4] sm:$0xff]
        %v836 = vld [vmem:[%s235 + $0xfbc] sm:$0xff]
        %v837 = vld [vmem:[%s235 + $0xfc4] sm:$0xff]
        %v838 = vld [vmem:[%s235 + $0xfcc] sm:$0xff]
        %v839 = vld [vmem:[%s235 + $0xfd4] sm:$0xff]
        %v840 = vld [vmem:[%s235 + $0xfdc] sm:$0xff]
        %v841 = vld [vmem:[%s235 + $0xfe4] sm:$0xff]
        %v842 = vld [vmem:[%s235 + $0xfec] sm:$0xff]
        %v843 = vld [vmem:[%s235 + $0xff4] sm:$0xff]
        %v844 = vld [vmem:[%s235 + $0xffc] sm:$0xff]
        %v845 = vld [vmem:[%s235 + $0x1004] sm:$0xf]
        %v846 = vld [vmem:[%s235 + $0x1008] sm:$0xff]
        %v847 = vld [vmem:[%s235 + $0x1010] sm:$0xff]
        %v848 = vld [vmem:[%s235 + $0x1018] sm:$0xff]
        %v849 = vld [vmem:[%s235 + $0x1020] sm:$0xff]
        %v850 = vld [vmem:[%s235 + $0x1028] sm:$0xff]
        %v851 = vld [vmem:[%s235 + $0x1030] sm:$0xff]
        %v852 = vld [vmem:[%s235 + $0x1038] sm:$0xff]
        %v853 = vld [vmem:[%s235 + $0x1040] sm:$0xff]
        %v854 = vld [vmem:[%s235 + $0x1048] sm:$0xff]
        %v855 = vld [vmem:[%s235 + $0x1050] sm:$0xff]
        %v856 = vld [vmem:[%s235 + $0x1058] sm:$0xff]
        %v857 = vld [vmem:[%s235 + $0x1060] sm:$0xff]
        %v858 = vld [vmem:[%s235 + $0x1068] sm:$0xff]
        %v859 = vld [vmem:[%s235 + $0x1070] sm:$0xf]
        %v860 = vld [vmem:[%s235 + $0x1074] sm:$0xff]
        %v861 = vld [vmem:[%s235 + $0x107c] sm:$0xff]
        %v862 = vld [vmem:[%s235 + $0x1084] sm:$0xff]
        %v863 = vld [vmem:[%s235 + $0x108c] sm:$0xff]
        %v864 = vld [vmem:[%s235 + $0x1094] sm:$0xff]
        %v865 = vld [vmem:[%s235 + $0x109c] sm:$0xff]
        %v866 = vld [vmem:[%s235 + $0x10a4] sm:$0xff]
        %v867 = vld [vmem:[%s235 + $0x10ac] sm:$0xff]
        %v868 = vld [vmem:[%s235 + $0x10b4] sm:$0xff]
        %v869 = vld [vmem:[%s235 + $0x10bc] sm:$0xff]
        %v870 = vld [vmem:[%s235 + $0x10c4] sm:$0xff]
        %v871 = vld [vmem:[%s235 + $0x10cc] sm:$0xff]
        %v872 = vld [vmem:[%s235 + $0x10d4] sm:$0xff]
        %v873 = vld [vmem:[%s235 + $0x10dc] sm:$0xf]
        %v874 = vld [vmem:[%s235 + $0x10e0] sm:$0xff]
        %v875 = vld [vmem:[%s235 + $0x10e8] sm:$0xff]
        %v876 = vld [vmem:[%s235 + $0x10f0] sm:$0xff]
        %v877 = vld [vmem:[%s235 + $0x10f8] sm:$0xff]
        %v878 = vld [vmem:[%s235 + $0x1100] sm:$0xff]
        %v879 = vld [vmem:[%s235 + $0x1108] sm:$0xff]
        %v880 = vld [vmem:[%s235 + $0x1110] sm:$0xff]
        %v881 = vld [vmem:[%s235 + $0x1118] sm:$0xff]
        %v882 = vld [vmem:[%s235 + $0x1120] sm:$0xff]
        %v883 = vld [vmem:[%s235 + $0x1128] sm:$0xff]
        %v884 = vld [vmem:[%s235 + $0x1130] sm:$0xff]
        %v885 = vld [vmem:[%s235 + $0x1138] sm:$0xff]
        %v886 = vld [vmem:[%s235 + $0x1140] sm:$0xff]
        %v887 = vld [vmem:[%s235 + $0x1148] sm:$0xf]
        %v888 = vld [vmem:[%s235 + $0x114c] sm:$0xff]
        %v889 = vld [vmem:[%s235 + $0x1154] sm:$0xff]
        %v890 = vld [vmem:[%s235 + $0x115c] sm:$0xff]
        %v891 = vld [vmem:[%s235 + $0x1164] sm:$0xff]
        %v892 = vld [vmem:[%s235 + $0x116c] sm:$0xff]
        %v893 = vld [vmem:[%s235 + $0x1174] sm:$0xff]
        %v894 = vld [vmem:[%s235 + $0x117c] sm:$0xff]
        %v895 = vld [vmem:[%s235 + $0x1184] sm:$0xff]
        %v896 = vld [vmem:[%s235 + $0x118c] sm:$0xff]
        %v897 = vld [vmem:[%s235 + $0x1194] sm:$0xff]
        %v898 = vld [vmem:[%s235 + $0x119c] sm:$0xff]
        %v899 = vld [vmem:[%s235 + $0x11a4] sm:$0xff]
        %v900 = vld [vmem:[%s235 + $0x11ac] sm:$0xff]
        %v901 = vld [vmem:[%s235 + $0x11b4] sm:$0xf]
        %v902 = vld [vmem:[%s235 + $0x11b8] sm:$0xff]
        %v903 = vld [vmem:[%s235 + $0x11c0] sm:$0xff]
        %v904 = vld [vmem:[%s235 + $0x11c8] sm:$0xff]
        %v905 = vld [vmem:[%s235 + $0x11d0] sm:$0xff]
        %v906 = vld [vmem:[%s235 + $0x11d8] sm:$0xff]
        %v907 = vld [vmem:[%s235 + $0x11e0] sm:$0xff]
        %v908 = vld [vmem:[%s235 + $0x11e8] sm:$0xff]
        %v909 = vld [vmem:[%s235 + $0x11f0] sm:$0xff]
        %v910 = vld [vmem:[%s235 + $0x11f8] sm:$0xff]
        %v911 = vld [vmem:[%s235 + $0x1200] sm:$0xff]
        %v912 = vld [vmem:[%s235 + $0x1208] sm:$0xff]
        %v913 = vld [vmem:[%s235 + $0x1210] sm:$0xff]
        %v914 = vld [vmem:[%s235 + $0x1218] sm:$0xff]
        %v915 = vld [vmem:[%s235 + $0x1220] sm:$0xf]
        %v916 = vld [vmem:[%s235 + $0x1224] sm:$0xff]
        %v917 = vld [vmem:[%s235 + $0x122c] sm:$0xff]
        %v918 = vld [vmem:[%s235 + $0x1234] sm:$0xff]
        %v919 = vld [vmem:[%s235 + $0x123c] sm:$0xff]
        %v920 = vld [vmem:[%s235 + $0x1244] sm:$0xff]
        %v921 = vld [vmem:[%s235 + $0x124c] sm:$0xff]
        %v922 = vld [vmem:[%s235 + $0x1254] sm:$0xff]
        %v923 = vld [vmem:[%s235 + $0x125c] sm:$0xff]
        %v924 = vld [vmem:[%s235 + $0x1264] sm:$0xff]
        %v925 = vld [vmem:[%s235 + $0x126c] sm:$0xff]
        %v926 = vld [vmem:[%s235 + $0x1274] sm:$0xff]
        %v927 = vld [vmem:[%s235 + $0x127c] sm:$0xff]
        %v928 = vld [vmem:[%s235 + $0x1284] sm:$0xff]
        %v929 = vld [vmem:[%s235 + $0x128c] sm:$0xf]
        %v930 = vld [vmem:[%s235 + $0x1290] sm:$0xff]
        %v931 = vld [vmem:[%s235 + $0x1298] sm:$0xff]
        %v932 = vld [vmem:[%s235 + $0x12a0] sm:$0xff]
        %v933 = vld [vmem:[%s235 + $0x12a8] sm:$0xff]
        %v934 = vld [vmem:[%s235 + $0x12b0] sm:$0xff]
        %v935 = vld [vmem:[%s235 + $0x12b8] sm:$0xff]
        %v936 = vld [vmem:[%s235 + $0x12c0] sm:$0xff]
        %v937 = vld [vmem:[%s235 + $0x12c8] sm:$0xff]
        %v938 = vld [vmem:[%s235 + $0x12d0] sm:$0xff]
        %v939 = vld [vmem:[%s235 + $0x12d8] sm:$0xff]
        %v940 = vld [vmem:[%s235 + $0x12e0] sm:$0xff]
        %v941 = vld [vmem:[%s235 + $0x12e8] sm:$0xff]
        %v942 = vld [vmem:[%s235 + $0x12f0] sm:$0xff]
        %v943 = vld [vmem:[%s235 + $0x12f8] sm:$0xf]
        %v944 = vld [vmem:[%s235 + $0x12fc] sm:$0xff]
        %v945 = vld [vmem:[%s235 + $0x1304] sm:$0xff]
        %v946 = vld [vmem:[%s235 + $0x130c] sm:$0xff]
        %v947 = vld [vmem:[%s235 + $0x1314] sm:$0xff]
        %v948 = vld [vmem:[%s235 + $0x131c] sm:$0xff]
        %v949 = vld [vmem:[%s235 + $0x1324] sm:$0xff]
        %v950 = vld [vmem:[%s235 + $0x132c] sm:$0xff]
        %v951 = vld [vmem:[%s235 + $0x1334] sm:$0xff]
        %v952 = vld [vmem:[%s235 + $0x133c] sm:$0xff]
        %v953 = vld [vmem:[%s235 + $0x1344] sm:$0xff]
        %v954 = vld [vmem:[%s235 + $0x134c] sm:$0xff]
        %v955 = vld [vmem:[%s235 + $0x1354] sm:$0xff]
        %v956 = vld [vmem:[%s235 + $0x135c] sm:$0xff]
        %v957 = vld [vmem:[%s235 + $0x1364] sm:$0xf]
        %v958 = vld [vmem:[%s235 + $0x1368] sm:$0xff]
        %v959 = vld [vmem:[%s235 + $0x1370] sm:$0xff]
        %v960 = vld [vmem:[%s235 + $0x1378] sm:$0xff]
        %v961 = vld [vmem:[%s235 + $0x1380] sm:$0xff]
        %v962 = vld [vmem:[%s235 + $0x1388] sm:$0xff]
        %v963 = vld [vmem:[%s235 + $0x1390] sm:$0xff]
        %v964 = vld [vmem:[%s235 + $0x1398] sm:$0xff]
        %v965 = vld [vmem:[%s235 + $0x13a0] sm:$0xff]
        %v966 = vld [vmem:[%s235 + $0x13a8] sm:$0xff]
        %v967 = vld [vmem:[%s235 + $0x13b0] sm:$0xff]
        %v968 = vld [vmem:[%s235 + $0x13b8] sm:$0xff]
        %v969 = vld [vmem:[%s235 + $0x13c0] sm:$0xff]
        %v970 = vld [vmem:[%s235 + $0x13c8] sm:$0xff]
        %v971 = vld [vmem:[%s235 + $0x13d0] sm:$0xf]
        %v972 = vld [vmem:[%s235 + $0x13d4] sm:$0xff]
        %v973 = vld [vmem:[%s235 + $0x13dc] sm:$0xff]
        %v974 = vld [vmem:[%s235 + $0x13e4] sm:$0xff]
        %v975 = vld [vmem:[%s235 + $0x13ec] sm:$0xff]
        %v976 = vld [vmem:[%s235 + $0x13f4] sm:$0xff]
        %v977 = vld [vmem:[%s235 + $0x13fc] sm:$0xff]
        %v978 = vld [vmem:[%s235 + $0x1404] sm:$0xff]
        %v979 = vld [vmem:[%s235 + $0x140c] sm:$0xff]
        %v980 = vld [vmem:[%s235 + $0x1414] sm:$0xff]
        %v981 = vld [vmem:[%s235 + $0x141c] sm:$0xff]
        %v982 = vld [vmem:[%s235 + $0x1424] sm:$0xff]
        %v983 = vld [vmem:[%s235 + $0x142c] sm:$0xff]
        %v984 = vld [vmem:[%s235 + $0x1434] sm:$0xff]
        %v985 = vld [vmem:[%s235 + $0x143c] sm:$0xf]
        %v986 = vld [vmem:[%s235 + $0x1440] sm:$0xff]
        %v987 = vld [vmem:[%s235 + $0x1448] sm:$0xff]
        %v988 = vld [vmem:[%s235 + $0x1450] sm:$0xff]
        %v989 = vld [vmem:[%s235 + $0x1458] sm:$0xff]
        %v990 = vld [vmem:[%s235 + $0x1460] sm:$0xff]
        %v991 = vld [vmem:[%s235 + $0x1468] sm:$0xff]
        %v992 = vld [vmem:[%s235 + $0x1470] sm:$0xff]
        %v993 = vld [vmem:[%s235 + $0x1478] sm:$0xff]
        %v994 = vld [vmem:[%s235 + $0x1480] sm:$0xff]
        %v995 = vld [vmem:[%s235 + $0x1488] sm:$0xff]
        %v996 = vld [vmem:[%s235 + $0x1490] sm:$0xff]
        %v997 = vld [vmem:[%s235 + $0x1498] sm:$0xff]
        %v998 = vld [vmem:[%s235 + $0x14a0] sm:$0xff]
        %v999 = vld [vmem:[%s235 + $0x14a8] sm:$0xf]
        %v1000 = vld [vmem:[%s235 + $0x14ac] sm:$0xff]
        %v1001 = vld [vmem:[%s235 + $0x14b4] sm:$0xff]
        %v1002 = vld [vmem:[%s235 + $0x14bc] sm:$0xff]
        %v1003 = vld [vmem:[%s235 + $0x14c4] sm:$0xff]
        %v1004 = vld [vmem:[%s235 + $0x14cc] sm:$0xff]
        %v1005 = vld [vmem:[%s235 + $0x14d4] sm:$0xff]
        %v1006 = vld [vmem:[%s235 + $0x14dc] sm:$0xff]
        %v1007 = vld [vmem:[%s235 + $0x14e4] sm:$0xff]
        %v1008 = vld [vmem:[%s235 + $0x14ec] sm:$0xff]
        %v1009 = vld [vmem:[%s235 + $0x14f4] sm:$0xff]
        %v1010 = vld [vmem:[%s235 + $0x14fc] sm:$0xff]
        %v1011 = vld [vmem:[%s235 + $0x1504] sm:$0xff]
        %v1012 = vld [vmem:[%s235 + $0x150c] sm:$0xff]
        %v1013 = vld [vmem:[%s235 + $0x1514] sm:$0xf]
        %v1014 = vld [vmem:[%s235 + $0x1518] sm:$0xff]
        %v1015 = vld [vmem:[%s235 + $0x1520] sm:$0xff]
        %v1016 = vld [vmem:[%s235 + $0x1528] sm:$0xff]
        %v1017 = vld [vmem:[%s235 + $0x1530] sm:$0xff]
        %v1018 = vld [vmem:[%s235 + $0x1538] sm:$0xff]
        %v1019 = vld [vmem:[%s235 + $0x1540] sm:$0xff]
        %v1020 = vld [vmem:[%s235 + $0x1548] sm:$0xff]
        %v1021 = vld [vmem:[%s235 + $0x1550] sm:$0xff]
        %v1022 = vld [vmem:[%s235 + $0x1558] sm:$0xff]
        %v1023 = vld [vmem:[%s235 + $0x1560] sm:$0xff]
        %v1024 = vld [vmem:[%s235 + $0x1568] sm:$0xff]
        %v1025 = vld [vmem:[%s235 + $0x1570] sm:$0xff]
        %v1026 = vld [vmem:[%s235 + $0x1578] sm:$0xff]
        %v1027 = vld [vmem:[%s235 + $0x1580] sm:$0xf]
        %v1028 = vld [vmem:[%s235 + $0x1584] sm:$0xff]
        %v1029 = vld [vmem:[%s235 + $0x158c] sm:$0xff]
        %v1030 = vld [vmem:[%s235 + $0x1594] sm:$0xff]
        %v1031 = vld [vmem:[%s235 + $0x159c] sm:$0xff]
        %v1032 = vld [vmem:[%s235 + $0x15a4] sm:$0xff]
        %v1033 = vld [vmem:[%s235 + $0x15ac] sm:$0xff]
        %v1034 = vld [vmem:[%s235 + $0x15b4] sm:$0xff]
        %v1035 = vld [vmem:[%s235 + $0x15bc] sm:$0xff]
        %v1036 = vld [vmem:[%s235 + $0x15c4] sm:$0xff]
        %v1037 = vld [vmem:[%s235 + $0x15cc] sm:$0xff]
        %v1038 = vld [vmem:[%s235 + $0x15d4] sm:$0xff]
        %v1039 = vld [vmem:[%s235 + $0x15dc] sm:$0xff]
        %v1040 = vld [vmem:[%s235 + $0x15e4] sm:$0xff]
        %v1041 = vld [vmem:[%s235 + $0x15ec] sm:$0xf]
        %v1042 = vld [vmem:[%s235 + $0x15f0] sm:$0xff]
        %v1043 = vld [vmem:[%s235 + $0x15f8] sm:$0xff]
        %v1044 = vld [vmem:[%s235 + $0x1600] sm:$0xff]
        %v1045 = vld [vmem:[%s235 + $0x1608] sm:$0xff]
        %v1046 = vld [vmem:[%s235 + $0x1610] sm:$0xff]
        %v1047 = vld [vmem:[%s235 + $0x1618] sm:$0xff]
        %v1048 = vld [vmem:[%s235 + $0x1620] sm:$0xff]
        %v1049 = vld [vmem:[%s235 + $0x1628] sm:$0xff]
        %v1050 = vld [vmem:[%s235 + $0x1630] sm:$0xff]
        %v1051 = vld [vmem:[%s235 + $0x1638] sm:$0xff]
        %v1052 = vld [vmem:[%s235 + $0x1640] sm:$0xff]
        %v1053 = vld [vmem:[%s235 + $0x1648] sm:$0xff]
        %v1054 = vld [vmem:[%s235 + $0x1650] sm:$0xff]
        %v1055 = vld [vmem:[%s235 + $0x1658] sm:$0xf]
        %v1056 = vld [vmem:[%s235 + $0x165c] sm:$0xff]
        %v1057 = vld [vmem:[%s235 + $0x1664] sm:$0xff]
        %v1058 = vld [vmem:[%s235 + $0x166c] sm:$0xff]
        %v1059 = vld [vmem:[%s235 + $0x1674] sm:$0xff]
        %v1060 = vld [vmem:[%s235 + $0x167c] sm:$0xff]
        %v1061 = vld [vmem:[%s235 + $0x1684] sm:$0xff]
        %v1062 = vld [vmem:[%s235 + $0x168c] sm:$0xff]
        %v1063 = vld [vmem:[%s235 + $0x1694] sm:$0xff]
        %v1064 = vld [vmem:[%s235 + $0x169c] sm:$0xff]
        %v1065 = vld [vmem:[%s235 + $0x16a4] sm:$0xff]
        %v1066 = vld [vmem:[%s235 + $0x16ac] sm:$0xff]
        %v1067 = vld [vmem:[%s235 + $0x16b4] sm:$0xff]
        %v1068 = vld [vmem:[%s235 + $0x16bc] sm:$0xff]
        %v1069 = vld [vmem:[%s235 + $0x16c4] sm:$0xf]
        %v1070 = vld [vmem:[%s235 + $0x16c8] sm:$0xff]
        %v1071 = vld [vmem:[%s235 + $0x16d0] sm:$0xff]
        %v1072 = vld [vmem:[%s235 + $0x16d8] sm:$0xff]
        %v1073 = vld [vmem:[%s235 + $0x16e0] sm:$0xff]
        %v1074 = vld [vmem:[%s235 + $0x16e8] sm:$0xff]
        %v1075 = vld [vmem:[%s235 + $0x16f0] sm:$0xff]
        %v1076 = vld [vmem:[%s235 + $0x16f8] sm:$0xff]
        %v1077 = vld [vmem:[%s235 + $0x1700] sm:$0xff]
        %v1078 = vld [vmem:[%s235 + $0x1708] sm:$0xff]
        %v1079 = vld [vmem:[%s235 + $0x1710] sm:$0xff]
        %v1080 = vld [vmem:[%s235 + $0x1718] sm:$0xff]
        %v1081 = vld [vmem:[%s235 + $0x1720] sm:$0xff]
        %v1082 = vld [vmem:[%s235 + $0x1728] sm:$0xff]
        %v1083 = vld [vmem:[%s235 + $0x1730] sm:$0xf]
        %v1084 = vld [vmem:[%s235 + $0x1734] sm:$0xff]
        %v1085 = vld [vmem:[%s235 + $0x173c] sm:$0xff]
        %v1086 = vld [vmem:[%s235 + $0x1744] sm:$0xff]
        %v1087 = vld [vmem:[%s235 + $0x174c] sm:$0xff]
        %v1088 = vld [vmem:[%s235 + $0x1754] sm:$0xff]
        %v1089 = vld [vmem:[%s235 + $0x175c] sm:$0xff]
        %v1090 = vld [vmem:[%s235 + $0x1764] sm:$0xff]
        %v1091 = vld [vmem:[%s235 + $0x176c] sm:$0xff]
        %v1092 = vld [vmem:[%s235 + $0x1774] sm:$0xff]
        %v1093 = vld [vmem:[%s235 + $0x177c] sm:$0xff]
        %v1094 = vld [vmem:[%s235 + $0x1784] sm:$0xff]
        %v1095 = vld [vmem:[%s235 + $0x178c] sm:$0xff]
        %v1096 = vld [vmem:[%s235 + $0x1794] sm:$0xff]
        %v1097 = vld [vmem:[%s235 + $0x179c] sm:$0xf]
        %v1098 = vld [vmem:[%s235 + $0x17a0] sm:$0xff]
        %v1099 = vld [vmem:[%s235 + $0x17a8] sm:$0xff]
        %v1100 = vld [vmem:[%s235 + $0x17b0] sm:$0xff]
        %v1101 = vld [vmem:[%s235 + $0x17b8] sm:$0xff]
        %v1102 = vld [vmem:[%s235 + $0x17c0] sm:$0xff]
        %v1103 = vld [vmem:[%s235 + $0x17c8] sm:$0xff]
        %v1104 = vld [vmem:[%s235 + $0x17d0] sm:$0xff]
        %v1105 = vld [vmem:[%s235 + $0x17d8] sm:$0xff]
        %v1106 = vld [vmem:[%s235 + $0x17e0] sm:$0xff]
        %v1107 = vld [vmem:[%s235 + $0x17e8] sm:$0xff]
        %v1108 = vld [vmem:[%s235 + $0x17f0] sm:$0xff]
        %v1109 = vld [vmem:[%s235 + $0x17f8] sm:$0xff]
        %v1110 = vld [vmem:[%s235 + $0x1800] sm:$0xff]
        %v1111 = vld [vmem:[%s235 + $0x1808] sm:$0xf]
        %v1112 = vld [vmem:[%s235 + $0x180c] sm:$0xff]
        %v1113 = vld [vmem:[%s235 + $0x1814] sm:$0xff]
        %v1114 = vld [vmem:[%s235 + $0x181c] sm:$0xff]
        %v1115 = vld [vmem:[%s235 + $0x1824] sm:$0xff]
        %v1116 = vld [vmem:[%s235 + $0x182c] sm:$0xff]
        %v1117 = vld [vmem:[%s235 + $0x1834] sm:$0xff]
        %v1118 = vld [vmem:[%s235 + $0x183c] sm:$0xff]
        %v1119 = vld [vmem:[%s235 + $0x1844] sm:$0xff]
        %v1120 = vld [vmem:[%s235 + $0x184c] sm:$0xff]
        %v1121 = vld [vmem:[%s235 + $0x1854] sm:$0xff]
        %v1122 = vld [vmem:[%s235 + $0x185c] sm:$0xff]
        %v1123 = vld [vmem:[%s235 + $0x1864] sm:$0xff]
        %v1124 = vld [vmem:[%s235 + $0x186c] sm:$0xff]
        %v1125 = vld [vmem:[%s235 + $0x1874] sm:$0xf]
        %v1126 = vld [vmem:[%s235 + $0x1878] sm:$0xff]
        %v1127 = vld [vmem:[%s235 + $0x1880] sm:$0xff]
        %v1128 = vld [vmem:[%s235 + $0x1888] sm:$0xff]
        %v1129 = vld [vmem:[%s235 + $0x1890] sm:$0xff]
        %v1130 = vld [vmem:[%s235 + $0x1898] sm:$0xff]
        %v1131 = vld [vmem:[%s235 + $0x18a0] sm:$0xff]
        %v1132 = vld [vmem:[%s235 + $0x18a8] sm:$0xff]
        %v1133 = vld [vmem:[%s235 + $0x18b0] sm:$0xff]
        %v1134 = vld [vmem:[%s235 + $0x18b8] sm:$0xff]
        %v1135 = vld [vmem:[%s235 + $0x18c0] sm:$0xff]
        %v1136 = vld [vmem:[%s235 + $0x18c8] sm:$0xff]
        %v1137 = vld [vmem:[%s235 + $0x18d0] sm:$0xff]
        %v1138 = vld [vmem:[%s235 + $0x18d8] sm:$0xff]
        %v1139 = vld [vmem:[%s235 + $0x18e0] sm:$0xf]
        %v1140 = vld [vmem:[%s235 + $0x18e4] sm:$0xff]
        %v1141 = vld [vmem:[%s235 + $0x18ec] sm:$0xff]
        %v1142 = vld [vmem:[%s235 + $0x18f4] sm:$0xff]
        %v1143 = vld [vmem:[%s235 + $0x18fc] sm:$0xff]
        %v1144 = vld [vmem:[%s235 + $0x1904] sm:$0xff]
        %v1145 = vld [vmem:[%s235 + $0x190c] sm:$0xff]
        %v1146 = vld [vmem:[%s235 + $0x1914] sm:$0xff]
        %v1147 = vld [vmem:[%s235 + $0x191c] sm:$0xff]
        %v1148 = vld [vmem:[%s235 + $0x1924] sm:$0xff]
        %v1149 = vld [vmem:[%s235 + $0x192c] sm:$0xff]
        %v1150 = vld [vmem:[%s235 + $0x1934] sm:$0xff]
        %v1151 = vld [vmem:[%s235 + $0x193c] sm:$0xff]
        %v1152 = vld [vmem:[%s235 + $0x1944] sm:$0xff]
        %v1153 = vld [vmem:[%s235 + $0x194c] sm:$0xf]
        %v1154 = vld [vmem:[%s235 + $0x1950] sm:$0xff]
        %v1155 = vld [vmem:[%s235 + $0x1958] sm:$0xff]
        %v1156 = vld [vmem:[%s235 + $0x1960] sm:$0xff]
        %v1157 = vld [vmem:[%s235 + $0x1968] sm:$0xff]
        %v1158 = vld [vmem:[%s235 + $0x1970] sm:$0xff]
        %v1159 = vld [vmem:[%s235 + $0x1978] sm:$0xff]
        %v1160 = vld [vmem:[%s235 + $0x1980] sm:$0xff]
        %v1161 = vld [vmem:[%s235 + $0x1988] sm:$0xff]
        %v1162 = vld [vmem:[%s235 + $0x1990] sm:$0xff]
        %v1163 = vld [vmem:[%s235 + $0x1998] sm:$0xff]
        %v1164 = vld [vmem:[%s235 + $0x19a0] sm:$0xff]
        %v1165 = vld [vmem:[%s235 + $0x19a8] sm:$0xff]
        %v1166 = vld [vmem:[%s235 + $0x19b0] sm:$0xff]
        %v1167 = vld [vmem:[%s235 + $0x19b8] sm:$0xf]
        %v1168 = vld [vmem:[%s235 + $0x19bc] sm:$0xff]
        %v1169 = vld [vmem:[%s235 + $0x19c4] sm:$0xff]
        %v1170 = vld [vmem:[%s235 + $0x19cc] sm:$0xff]
        %v1171 = vld [vmem:[%s235 + $0x19d4] sm:$0xff]
        %v1172 = vld [vmem:[%s235 + $0x19dc] sm:$0xff]
        %v1173 = vld [vmem:[%s235 + $0x19e4] sm:$0xff]
        %v1174 = vld [vmem:[%s235 + $0x19ec] sm:$0xff]
        %v1175 = vld [vmem:[%s235 + $0x19f4] sm:$0xff]
        %v1176 = vld [vmem:[%s235 + $0x19fc] sm:$0xff]
        %v1177 = vld [vmem:[%s235 + $0x1a04] sm:$0xff]
        %v1178 = vld [vmem:[%s235 + $0x1a0c] sm:$0xff]
        %v1179 = vld [vmem:[%s235 + $0x1a14] sm:$0xff]
        %v1180 = vld [vmem:[%s235 + $0x1a1c] sm:$0xff]
        %v1181 = vld [vmem:[%s235 + $0x1a24] sm:$0xf]
        %v1182 = vld [vmem:[%s235 + $0x1a28] sm:$0xff]
        %v1183 = vld [vmem:[%s235 + $0x1a30] sm:$0xff]
        %v1184 = vld [vmem:[%s235 + $0x1a38] sm:$0xff]
        %v1185 = vld [vmem:[%s235 + $0x1a40] sm:$0xff]
        %v1186 = vld [vmem:[%s235 + $0x1a48] sm:$0xff]
        %v1187 = vld [vmem:[%s235 + $0x1a50] sm:$0xff]
        %v1188 = vld [vmem:[%s235 + $0x1a58] sm:$0xff]
        %v1189 = vld [vmem:[%s235 + $0x1a60] sm:$0xff]
        %v1190 = vld [vmem:[%s235 + $0x1a68] sm:$0xff]
        %v1191 = vld [vmem:[%s235 + $0x1a70] sm:$0xff]
        %v1192 = vld [vmem:[%s235 + $0x1a78] sm:$0xff]
        %v1193 = vld [vmem:[%s235 + $0x1a80] sm:$0xff]
        %v1194 = vld [vmem:[%s235 + $0x1a88] sm:$0xff]
        %v1195 = vld [vmem:[%s235 + $0x1a90] sm:$0xf]
        %v1196 = vld [vmem:[%s235 + $0x1a94] sm:$0xff]
        %v1197 = vld [vmem:[%s235 + $0x1a9c] sm:$0xff]
        %v1198 = vld [vmem:[%s235 + $0x1aa4] sm:$0xff]
        %v1199 = vld [vmem:[%s235 + $0x1aac] sm:$0xff]
        %v1200 = vld [vmem:[%s235 + $0x1ab4] sm:$0xff]
        %v1201 = vld [vmem:[%s235 + $0x1abc] sm:$0xff]
        %v1202 = vld [vmem:[%s235 + $0x1ac4] sm:$0xff]
        %v1203 = vld [vmem:[%s235 + $0x1acc] sm:$0xff]
        %v1204 = vld [vmem:[%s235 + $0x1ad4] sm:$0xff]
        %v1205 = vld [vmem:[%s235 + $0x1adc] sm:$0xff]
        %v1206 = vld [vmem:[%s235 + $0x1ae4] sm:$0xff]
        %v1207 = vld [vmem:[%s235 + $0x1aec] sm:$0xff]
        %v1208 = vld [vmem:[%s235 + $0x1af4] sm:$0xff]
        %v1209 = vld [vmem:[%s235 + $0x1afc] sm:$0xf]
        %v1210 = vld [vmem:[%s235 + $0x1b00] sm:$0xff]
        %v1211 = vld [vmem:[%s235 + $0x1b08] sm:$0xff]
        %v1212 = vld [vmem:[%s235 + $0x1b10] sm:$0xff]
        %v1213 = vld [vmem:[%s235 + $0x1b18] sm:$0xff]
        %v1214 = vld [vmem:[%s235 + $0x1b20] sm:$0xff]
        %v1215 = vld [vmem:[%s235 + $0x1b28] sm:$0xff]
        %v1216 = vld [vmem:[%s235 + $0x1b30] sm:$0xff]
        %v1217 = vld [vmem:[%s235 + $0x1b38] sm:$0xff]
        %v1218 = vld [vmem:[%s235 + $0x1b40] sm:$0xff]
        %v1219 = vld [vmem:[%s235 + $0x1b48] sm:$0xff]
        %v1220 = vld [vmem:[%s235 + $0x1b50] sm:$0xff]
        %v1221 = vld [vmem:[%s235 + $0x1b58] sm:$0xff]
        %v1222 = vld [vmem:[%s235 + $0x1b60] sm:$0xff]
        %v1223 = vld [vmem:[%s235 + $0x1b68] sm:$0xf]
        %v1224 = vld [vmem:[%s235 + $0x1b6c] sm:$0xff]
        %v1225 = vld [vmem:[%s235 + $0x1b74] sm:$0xff]
        %v1226 = vld [vmem:[%s235 + $0x1b7c] sm:$0xff]
        %v1227 = vld [vmem:[%s235 + $0x1b84] sm:$0xff]
        %v1228 = vld [vmem:[%s235 + $0x1b8c] sm:$0xff]
        %v1229 = vld [vmem:[%s235 + $0x1b94] sm:$0xff]
        %v1230 = vld [vmem:[%s235 + $0x1b9c] sm:$0xff]
        %v1231 = vld [vmem:[%s235 + $0x1ba4] sm:$0xff]
        %v1232 = vld [vmem:[%s235 + $0x1bac] sm:$0xff]
        %v1233 = vld [vmem:[%s235 + $0x1bb4] sm:$0xff]
        %v1234 = vld [vmem:[%s235 + $0x1bbc] sm:$0xff]
        %v1235 = vld [vmem:[%s235 + $0x1bc4] sm:$0xff]
        %v1236 = vld [vmem:[%s235 + $0x1bcc] sm:$0xff]
        %v1237 = vld [vmem:[%s235 + $0x1bd4] sm:$0xf]
        %v1238 = vld [vmem:[%s225] sm:$0xff]
        %v1239 = vld [vmem:[%s225 + $0x8] sm:$0xff]
        %v1240 = vld [vmem:[%s225 + $0x10] sm:$0xff]
        %v1241 = vld [vmem:[%s225 + $0x18] sm:$0x7]
        %v1246 = vperm.slane %v1238, 0
        %v1247 = vperm.slane %v1238, 1
        %v1248 = vperm.slane %v1238, 2
        %v1249 = vperm.slane %v1238, 3
        %v1250 = vperm.slane %v1238, 4
        %v1251 = vperm.slane %v1238, 5
        %v1252 = vperm.slane %v1238, 6
        %v1253 = vperm.slane %v1238, 7
        %v1254 = vperm.slane %v1239, 0
        %v1255 = vperm.slane %v1239, 1
        %v1256 = vperm.slane %v1239, 2
        %v1257 = vperm.slane %v1239, 3
        %v1258 = vperm.slane %v1239, 4
        %v1259 = vperm.slane %v1239, 5
        %v1260 = vperm.slane %v1239, 6
        %v1261 = vperm.slane %v1239, 7
        %v1262 = vperm.slane %v1240, 0
        %v1263 = vperm.slane %v1240, 1
        %v1264 = vperm.slane %v1240, 2
        %v1265 = vperm.slane %v1240, 3
        %v1266 = vperm.slane %v1240, 4
        %v1267 = vperm.slane %v1240, 5
        %v1268 = vperm.slane %v1240, 6
        %v1269 = vperm.slane %v1240, 7
        %v1270 = vperm.slane %v1241, 0
        %v1271 = vperm.slane %v1241, 1
        %v1272 = vperm.slane %v1241, 2
        %v2224 = vunpack.c.l.b16 %v314
        %v2225 = vunpack.c.h.b16 %v314
        %v2226 = vunpack.c.l.b16 %v315
        %v2227 = vunpack.c.h.b16 %v315
        %v2228 = vunpack.c.l.b16 %v316
        %v2229 = vunpack.c.h.b16 %v316
        %v2230 = vunpack.c.l.b16 %v317
        %v2231 = vunpack.c.h.b16 %v317
        %v2232 = vunpack.c.l.b16 %v318
        %v2233 = vunpack.c.h.b16 %v318
        %v2234 = vunpack.c.l.b16 %v319
        %v2235 = vunpack.c.h.b16 %v319
        %v2236 = vunpack.c.l.b16 %v320
        %v2237 = vunpack.c.h.b16 %v320
        %v2238 = vunpack.c.l.b16 %v321
        %v2239 = vunpack.c.h.b16 %v321
        %v2240 = vunpack.c.l.b16 %v322
        %v2241 = vunpack.c.h.b16 %v322
        %v2242 = vunpack.c.l.b16 %v323
        %v2243 = vunpack.c.h.b16 %v323
        %v2244 = vunpack.c.l.b16 %v324
        %v2245 = vunpack.c.h.b16 %v324
        %v2246 = vunpack.c.l.b16 %v325
        %v2247 = vunpack.c.h.b16 %v325
        %v2248 = vunpack.c.l.b16 %v326
        %v2249 = vunpack.c.h.b16 %v326
        %v2250 = vunpack.c.l.b16 %v327
        %v2251 = vunpack.c.l.b16 %v328
        %v2252 = vunpack.c.h.b16 %v328
        %v2253 = vunpack.c.l.b16 %v329
        %v2254 = vunpack.c.h.b16 %v329
        %v2255 = vunpack.c.l.b16 %v330
        %v2256 = vunpack.c.h.b16 %v330
        %v2257 = vunpack.c.l.b16 %v331
        %v2258 = vunpack.c.h.b16 %v331
        %v2259 = vunpack.c.l.b16 %v332
        %v2260 = vunpack.c.h.b16 %v332
        %v2261 = vunpack.c.l.b16 %v333
        %v2262 = vunpack.c.h.b16 %v333
        %v2263 = vunpack.c.l.b16 %v334
        %v2264 = vunpack.c.h.b16 %v334
        %v2265 = vunpack.c.l.b16 %v335
        %v2266 = vunpack.c.h.b16 %v335
        %v2267 = vunpack.c.l.b16 %v336
        %v2268 = vunpack.c.h.b16 %v336
        %v2269 = vunpack.c.l.b16 %v337
        %v2270 = vunpack.c.h.b16 %v337
        %v2271 = vunpack.c.l.b16 %v338
        %v2272 = vunpack.c.h.b16 %v338
        %v2273 = vunpack.c.l.b16 %v339
        %v2274 = vunpack.c.h.b16 %v339
        %v2275 = vunpack.c.l.b16 %v340
        %v2276 = vunpack.c.h.b16 %v340
        %v2277 = vunpack.c.l.b16 %v341
        %v2278 = vunpack.c.l.b16 %v342
        %v2279 = vunpack.c.h.b16 %v342
        %v2280 = vunpack.c.l.b16 %v343
        %v2281 = vunpack.c.h.b16 %v343
        %v2282 = vunpack.c.l.b16 %v344
        %v2283 = vunpack.c.h.b16 %v344
        %v2284 = vunpack.c.l.b16 %v345
        %v2285 = vunpack.c.h.b16 %v345
        %v2286 = vunpack.c.l.b16 %v346
        %v2287 = vunpack.c.h.b16 %v346
        %v2288 = vunpack.c.l.b16 %v347
        %v2289 = vunpack.c.h.b16 %v347
        %v2290 = vunpack.c.l.b16 %v348
        %v2291 = vunpack.c.h.b16 %v348
        %v2292 = vunpack.c.l.b16 %v349
        %v2293 = vunpack.c.h.b16 %v349
        %v2294 = vunpack.c.l.b16 %v350
        %v2295 = vunpack.c.h.b16 %v350
        %v2296 = vunpack.c.l.b16 %v351
        %v2297 = vunpack.c.h.b16 %v351
        %v2298 = vunpack.c.l.b16 %v352
        %v2299 = vunpack.c.h.b16 %v352
        %v2300 = vunpack.c.l.b16 %v353
        %v2301 = vunpack.c.h.b16 %v353
        %v2302 = vunpack.c.l.b16 %v354
        %v2303 = vunpack.c.h.b16 %v354
        %v2304 = vunpack.c.l.b16 %v355
        %v2305 = vunpack.c.l.b16 %v356
        %v2306 = vunpack.c.h.b16 %v356
        %v2307 = vunpack.c.l.b16 %v357
        %v2308 = vunpack.c.h.b16 %v357
        %v2309 = vunpack.c.l.b16 %v358
        %v2310 = vunpack.c.h.b16 %v358
        %v2311 = vunpack.c.l.b16 %v359
        %v2312 = vunpack.c.h.b16 %v359
        %v2313 = vunpack.c.l.b16 %v360
        %v2314 = vunpack.c.h.b16 %v360
        %v2315 = vunpack.c.l.b16 %v361
        %v2316 = vunpack.c.h.b16 %v361
        %v2317 = vunpack.c.l.b16 %v362
        %v2318 = vunpack.c.h.b16 %v362
        %v2319 = vunpack.c.l.b16 %v363
        %v2320 = vunpack.c.h.b16 %v363
        %v2321 = vunpack.c.l.b16 %v364
        %v2322 = vunpack.c.h.b16 %v364
        %v2323 = vunpack.c.l.b16 %v365
        %v2324 = vunpack.c.h.b16 %v365
        %v2325 = vunpack.c.l.b16 %v366
        %v2326 = vunpack.c.h.b16 %v366
        %v2327 = vunpack.c.l.b16 %v367
        %v2328 = vunpack.c.h.b16 %v367
        %v2329 = vunpack.c.l.b16 %v368
        %v2330 = vunpack.c.h.b16 %v368
        %v2331 = vunpack.c.l.b16 %v369
        %v2332 = vunpack.c.l.b16 %v370
        %v2333 = vunpack.c.h.b16 %v370
        %v2334 = vunpack.c.l.b16 %v371
        %v2335 = vunpack.c.h.b16 %v371
        %v2336 = vunpack.c.l.b16 %v372
        %v2337 = vunpack.c.h.b16 %v372
        %v2338 = vunpack.c.l.b16 %v373
        %v2339 = vunpack.c.h.b16 %v373
        %v2340 = vunpack.c.l.b16 %v374
        %v2341 = vunpack.c.h.b16 %v374
        %v2342 = vunpack.c.l.b16 %v375
        %v2343 = vunpack.c.h.b16 %v375
        %v2344 = vunpack.c.l.b16 %v376
        %v2345 = vunpack.c.h.b16 %v376
        %v2346 = vunpack.c.l.b16 %v377
        %v2347 = vunpack.c.h.b16 %v377
        %v2348 = vunpack.c.l.b16 %v378
        %v2349 = vunpack.c.h.b16 %v378
        %v2350 = vunpack.c.l.b16 %v379
        %v2351 = vunpack.c.h.b16 %v379
        %v2352 = vunpack.c.l.b16 %v380
        %v2353 = vunpack.c.h.b16 %v380
        %v2354 = vunpack.c.l.b16 %v381
        %v2355 = vunpack.c.h.b16 %v381
        %v2356 = vunpack.c.l.b16 %v382
        %v2357 = vunpack.c.h.b16 %v382
        %v2358 = vunpack.c.l.b16 %v383
        %v2359 = vunpack.c.l.b16 %v384
        %v2360 = vunpack.c.h.b16 %v384
        %v2361 = vunpack.c.l.b16 %v385
        %v2362 = vunpack.c.h.b16 %v385
        %v2363 = vunpack.c.l.b16 %v386
        %v2364 = vunpack.c.h.b16 %v386
        %v2365 = vunpack.c.l.b16 %v387
        %v2366 = vunpack.c.h.b16 %v387
        %v2367 = vunpack.c.l.b16 %v388
        %v2368 = vunpack.c.h.b16 %v388
        %v2369 = vunpack.c.l.b16 %v389
        %v2370 = vunpack.c.h.b16 %v389
        %v2371 = vunpack.c.l.b16 %v390
        %v2372 = vunpack.c.h.b16 %v390
        %v2373 = vunpack.c.l.b16 %v391
        %v2374 = vunpack.c.h.b16 %v391
        %v2375 = vunpack.c.l.b16 %v392
        %v2376 = vunpack.c.h.b16 %v392
        %v2377 = vunpack.c.l.b16 %v393
        %v2378 = vunpack.c.h.b16 %v393
        %v2379 = vunpack.c.l.b16 %v394
        %v2380 = vunpack.c.h.b16 %v394
        %v2381 = vunpack.c.l.b16 %v395
        %v2382 = vunpack.c.h.b16 %v395
        %v2383 = vunpack.c.l.b16 %v396
        %v2384 = vunpack.c.h.b16 %v396
        %v2385 = vunpack.c.l.b16 %v397
        %v2386 = vunpack.c.l.b16 %v398
        %v2387 = vunpack.c.h.b16 %v398
        %v2388 = vunpack.c.l.b16 %v399
        %v2389 = vunpack.c.h.b16 %v399
        %v2390 = vunpack.c.l.b16 %v400
        %v2391 = vunpack.c.h.b16 %v400
        %v2392 = vunpack.c.l.b16 %v401
        %v2393 = vunpack.c.h.b16 %v401
        %v2394 = vunpack.c.l.b16 %v402
        %v2395 = vunpack.c.h.b16 %v402
        %v2396 = vunpack.c.l.b16 %v403
        %v2397 = vunpack.c.h.b16 %v403
        %v2398 = vunpack.c.l.b16 %v404
        %v2399 = vunpack.c.h.b16 %v404
        %v2400 = vunpack.c.l.b16 %v405
        %v2401 = vunpack.c.h.b16 %v405
        %v2402 = vunpack.c.l.b16 %v406
        %v2403 = vunpack.c.h.b16 %v406
        %v2404 = vunpack.c.l.b16 %v407
        %v2405 = vunpack.c.h.b16 %v407
        %v2406 = vunpack.c.l.b16 %v408
        %v2407 = vunpack.c.h.b16 %v408
        %v2408 = vunpack.c.l.b16 %v409
        %v2409 = vunpack.c.h.b16 %v409
        %v2410 = vunpack.c.l.b16 %v410
        %v2411 = vunpack.c.h.b16 %v410
        %v2412 = vunpack.c.l.b16 %v411
        %v2413 = vunpack.c.l.b16 %v412
        %v2414 = vunpack.c.h.b16 %v412
        %v2415 = vunpack.c.l.b16 %v413
        %v2416 = vunpack.c.h.b16 %v413
        %v2417 = vunpack.c.l.b16 %v414
        %v2418 = vunpack.c.h.b16 %v414
        %v2419 = vunpack.c.l.b16 %v415
        %v2420 = vunpack.c.h.b16 %v415
        %v2421 = vunpack.c.l.b16 %v416
        %v2422 = vunpack.c.h.b16 %v416
        %v2423 = vunpack.c.l.b16 %v417
        %v2424 = vunpack.c.h.b16 %v417
        %v2425 = vunpack.c.l.b16 %v418
        %v2426 = vunpack.c.h.b16 %v418
        %v2427 = vunpack.c.l.b16 %v419
        %v2428 = vunpack.c.h.b16 %v419
        %v2429 = vunpack.c.l.b16 %v420
        %v2430 = vunpack.c.h.b16 %v420
        %v2431 = vunpack.c.l.b16 %v421
        %v2432 = vunpack.c.h.b16 %v421
        %v2433 = vunpack.c.l.b16 %v422
        %v2434 = vunpack.c.h.b16 %v422
        %v2435 = vunpack.c.l.b16 %v423
        %v2436 = vunpack.c.h.b16 %v423
        %v2437 = vunpack.c.l.b16 %v424
        %v2438 = vunpack.c.h.b16 %v424
        %v2439 = vunpack.c.l.b16 %v425
        %v2440 = vunpack.c.l.b16 %v426
        %v2441 = vunpack.c.h.b16 %v426
        %v2442 = vunpack.c.l.b16 %v427
        %v2443 = vunpack.c.h.b16 %v427
        %v2444 = vunpack.c.l.b16 %v428
        %v2445 = vunpack.c.h.b16 %v428
        %v2446 = vunpack.c.l.b16 %v429
        %v2447 = vunpack.c.h.b16 %v429
        %v2448 = vunpack.c.l.b16 %v430
        %v2449 = vunpack.c.h.b16 %v430
        %v2450 = vunpack.c.l.b16 %v431
        %v2451 = vunpack.c.h.b16 %v431
        %v2452 = vunpack.c.l.b16 %v432
        %v2453 = vunpack.c.h.b16 %v432
        %v2454 = vunpack.c.l.b16 %v433
        %v2455 = vunpack.c.h.b16 %v433
        %v2456 = vunpack.c.l.b16 %v434
        %v2457 = vunpack.c.h.b16 %v434
        %v2458 = vunpack.c.l.b16 %v435
        %v2459 = vunpack.c.h.b16 %v435
        %v2460 = vunpack.c.l.b16 %v436
        %v2461 = vunpack.c.h.b16 %v436
        %v2462 = vunpack.c.l.b16 %v437
        %v2463 = vunpack.c.h.b16 %v437
        %v2464 = vunpack.c.l.b16 %v438
        %v2465 = vunpack.c.h.b16 %v438
        %v2466 = vunpack.c.l.b16 %v439
        %v2467 = vunpack.c.l.b16 %v440
        %v2468 = vunpack.c.h.b16 %v440
        %v2469 = vunpack.c.l.b16 %v441
        %v2470 = vunpack.c.h.b16 %v441
        %v2471 = vunpack.c.l.b16 %v442
        %v2472 = vunpack.c.h.b16 %v442
        %v2473 = vunpack.c.l.b16 %v443
        %v2474 = vunpack.c.h.b16 %v443
        %v2475 = vunpack.c.l.b16 %v444
        %v2476 = vunpack.c.h.b16 %v444
        %v2477 = vunpack.c.l.b16 %v445
        %v2478 = vunpack.c.h.b16 %v445
        %v2479 = vunpack.c.l.b16 %v446
        %v2480 = vunpack.c.h.b16 %v446
        %v2481 = vunpack.c.l.b16 %v447
        %v2482 = vunpack.c.h.b16 %v447
        %v2483 = vunpack.c.l.b16 %v448
        %v2484 = vunpack.c.h.b16 %v448
        %v2485 = vunpack.c.l.b16 %v449
        %v2486 = vunpack.c.h.b16 %v449
        %v2487 = vunpack.c.l.b16 %v450
        %v2488 = vunpack.c.h.b16 %v450
        %v2489 = vunpack.c.l.b16 %v451
        %v2490 = vunpack.c.h.b16 %v451
        %v2491 = vunpack.c.l.b16 %v452
        %v2492 = vunpack.c.h.b16 %v452
        %v2493 = vunpack.c.l.b16 %v453
        %v2494 = vunpack.c.l.b16 %v454
        %v2495 = vunpack.c.h.b16 %v454
        %v2496 = vunpack.c.l.b16 %v455
        %v2497 = vunpack.c.h.b16 %v455
        %v2498 = vunpack.c.l.b16 %v456
        %v2499 = vunpack.c.h.b16 %v456
        %v2500 = vunpack.c.l.b16 %v457
        %v2501 = vunpack.c.h.b16 %v457
        %v2502 = vunpack.c.l.b16 %v458
        %v2503 = vunpack.c.h.b16 %v458
        %v2504 = vunpack.c.l.b16 %v459
        %v2505 = vunpack.c.h.b16 %v459
        %v2506 = vunpack.c.l.b16 %v460
        %v2507 = vunpack.c.h.b16 %v460
        %v2508 = vunpack.c.l.b16 %v461
        %v2509 = vunpack.c.h.b16 %v461
        %v2510 = vunpack.c.l.b16 %v462
        %v2511 = vunpack.c.h.b16 %v462
        %v2512 = vunpack.c.l.b16 %v463
        %v2513 = vunpack.c.h.b16 %v463
        %v2514 = vunpack.c.l.b16 %v464
        %v2515 = vunpack.c.h.b16 %v464
        %v2516 = vunpack.c.l.b16 %v465
        %v2517 = vunpack.c.h.b16 %v465
        %v2518 = vunpack.c.l.b16 %v466
        %v2519 = vunpack.c.h.b16 %v466
        %v2520 = vunpack.c.l.b16 %v467
        %v2521 = vunpack.c.l.b16 %v468
        %v2522 = vunpack.c.h.b16 %v468
        %v2523 = vunpack.c.l.b16 %v469
        %v2524 = vunpack.c.h.b16 %v469
        %v2525 = vunpack.c.l.b16 %v470
        %v2526 = vunpack.c.h.b16 %v470
        %v2527 = vunpack.c.l.b16 %v471
        %v2528 = vunpack.c.h.b16 %v471
        %v2529 = vunpack.c.l.b16 %v472
        %v2530 = vunpack.c.h.b16 %v472
        %v2531 = vunpack.c.l.b16 %v473
        %v2532 = vunpack.c.h.b16 %v473
        %v2533 = vunpack.c.l.b16 %v474
        %v2534 = vunpack.c.h.b16 %v474
        %v2535 = vunpack.c.l.b16 %v475
        %v2536 = vunpack.c.h.b16 %v475
        %v2537 = vunpack.c.l.b16 %v476
        %v2538 = vunpack.c.h.b16 %v476
        %v2539 = vunpack.c.l.b16 %v477
        %v2540 = vunpack.c.h.b16 %v477
        %v2541 = vunpack.c.l.b16 %v478
        %v2542 = vunpack.c.h.b16 %v478
        %v2543 = vunpack.c.l.b16 %v479
        %v2544 = vunpack.c.h.b16 %v479
        %v2545 = vunpack.c.l.b16 %v480
        %v2546 = vunpack.c.h.b16 %v480
        %v2547 = vunpack.c.l.b16 %v481
        %v2548 = vunpack.c.l.b16 %v482
        %v2549 = vunpack.c.h.b16 %v482
        %v2550 = vunpack.c.l.b16 %v483
        %v2551 = vunpack.c.h.b16 %v483
        %v2552 = vunpack.c.l.b16 %v484
        %v2553 = vunpack.c.h.b16 %v484
        %v2554 = vunpack.c.l.b16 %v485
        %v2555 = vunpack.c.h.b16 %v485
        %v2556 = vunpack.c.l.b16 %v486
        %v2557 = vunpack.c.h.b16 %v486
        %v2558 = vunpack.c.l.b16 %v487
        %v2559 = vunpack.c.h.b16 %v487
        %v2560 = vunpack.c.l.b16 %v488
        %v2561 = vunpack.c.h.b16 %v488
        %v2562 = vunpack.c.l.b16 %v489
        %v2563 = vunpack.c.h.b16 %v489
        %v2564 = vunpack.c.l.b16 %v490
        %v2565 = vunpack.c.h.b16 %v490
        %v2566 = vunpack.c.l.b16 %v491
        %v2567 = vunpack.c.h.b16 %v491
        %v2568 = vunpack.c.l.b16 %v492
        %v2569 = vunpack.c.h.b16 %v492
        %v2570 = vunpack.c.l.b16 %v493
        %v2571 = vunpack.c.h.b16 %v493
        %v2572 = vunpack.c.l.b16 %v494
        %v2573 = vunpack.c.h.b16 %v494
        %v2574 = vunpack.c.l.b16 %v495
        %v2575 = vunpack.c.l.b16 %v496
        %v2576 = vunpack.c.h.b16 %v496
        %v2577 = vunpack.c.l.b16 %v497
        %v2578 = vunpack.c.h.b16 %v497
        %v2579 = vunpack.c.l.b16 %v498
        %v2580 = vunpack.c.h.b16 %v498
        %v2581 = vunpack.c.l.b16 %v499
        %v2582 = vunpack.c.h.b16 %v499
        %v2583 = vunpack.c.l.b16 %v500
        %v2584 = vunpack.c.h.b16 %v500
        %v2585 = vunpack.c.l.b16 %v501
        %v2586 = vunpack.c.h.b16 %v501
        %v2587 = vunpack.c.l.b16 %v502
        %v2588 = vunpack.c.h.b16 %v502
        %v2589 = vunpack.c.l.b16 %v503
        %v2590 = vunpack.c.h.b16 %v503
        %v2591 = vunpack.c.l.b16 %v504
        %v2592 = vunpack.c.h.b16 %v504
        %v2593 = vunpack.c.l.b16 %v505
        %v2594 = vunpack.c.h.b16 %v505
        %v2595 = vunpack.c.l.b16 %v506
        %v2596 = vunpack.c.h.b16 %v506
        %v2597 = vunpack.c.l.b16 %v507
        %v2598 = vunpack.c.h.b16 %v507
        %v2599 = vunpack.c.l.b16 %v508
        %v2600 = vunpack.c.h.b16 %v508
        %v2601 = vunpack.c.l.b16 %v509
        %v2602 = vunpack.c.l.b16 %v510
        %v2603 = vunpack.c.h.b16 %v510
        %v2604 = vunpack.c.l.b16 %v511
        %v2605 = vunpack.c.h.b16 %v511
        %v2606 = vunpack.c.l.b16 %v512
        %v2607 = vunpack.c.h.b16 %v512
        %v2608 = vunpack.c.l.b16 %v513
        %v2609 = vunpack.c.h.b16 %v513
        %v2610 = vunpack.c.l.b16 %v514
        %v2611 = vunpack.c.h.b16 %v514
        %v2612 = vunpack.c.l.b16 %v515
        %v2613 = vunpack.c.h.b16 %v515
        %v2614 = vunpack.c.l.b16 %v516
        %v2615 = vunpack.c.h.b16 %v516
        %v2616 = vunpack.c.l.b16 %v517
        %v2617 = vunpack.c.h.b16 %v517
        %v2618 = vunpack.c.l.b16 %v518
        %v2619 = vunpack.c.h.b16 %v518
        %v2620 = vunpack.c.l.b16 %v519
        %v2621 = vunpack.c.h.b16 %v519
        %v2622 = vunpack.c.l.b16 %v520
        %v2623 = vunpack.c.h.b16 %v520
        %v2624 = vunpack.c.l.b16 %v521
        %v2625 = vunpack.c.h.b16 %v521
        %v2626 = vunpack.c.l.b16 %v522
        %v2627 = vunpack.c.h.b16 %v522
        %v2628 = vunpack.c.l.b16 %v523
        %v2629 = vunpack.c.l.b16 %v524
        %v2630 = vunpack.c.h.b16 %v524
        %v2631 = vunpack.c.l.b16 %v525
        %v2632 = vunpack.c.h.b16 %v525
        %v2633 = vunpack.c.l.b16 %v526
        %v2634 = vunpack.c.h.b16 %v526
        %v2635 = vunpack.c.l.b16 %v527
        %v2636 = vunpack.c.h.b16 %v527
        %v2637 = vunpack.c.l.b16 %v528
        %v2638 = vunpack.c.h.b16 %v528
        %v2639 = vunpack.c.l.b16 %v529
        %v2640 = vunpack.c.h.b16 %v529
        %v2641 = vunpack.c.l.b16 %v530
        %v2642 = vunpack.c.h.b16 %v530
        %v2643 = vunpack.c.l.b16 %v531
        %v2644 = vunpack.c.h.b16 %v531
        %v2645 = vunpack.c.l.b16 %v532
        %v2646 = vunpack.c.h.b16 %v532
        %v2647 = vunpack.c.l.b16 %v533
        %v2648 = vunpack.c.h.b16 %v533
        %v2649 = vunpack.c.l.b16 %v534
        %v2650 = vunpack.c.h.b16 %v534
        %v2651 = vunpack.c.l.b16 %v535
        %v2652 = vunpack.c.h.b16 %v535
        %v2653 = vunpack.c.l.b16 %v536
        %v2654 = vunpack.c.h.b16 %v536
        %v2655 = vunpack.c.l.b16 %v537
        %v2656 = vunpack.c.l.b16 %v538
        %v2657 = vunpack.c.h.b16 %v538
        %v2658 = vunpack.c.l.b16 %v539
        %v2659 = vunpack.c.h.b16 %v539
        %v2660 = vunpack.c.l.b16 %v540
        %v2661 = vunpack.c.h.b16 %v540
        %v2662 = vunpack.c.l.b16 %v541
        %v2663 = vunpack.c.h.b16 %v541
        %v2664 = vunpack.c.l.b16 %v542
        %v2665 = vunpack.c.h.b16 %v542
        %v2666 = vunpack.c.l.b16 %v543
        %v2667 = vunpack.c.h.b16 %v543
        %v2668 = vunpack.c.l.b16 %v544
        %v2669 = vunpack.c.h.b16 %v544
        %v2670 = vunpack.c.l.b16 %v545
        %v2671 = vunpack.c.h.b16 %v545
        %v2672 = vunpack.c.l.b16 %v546
        %v2673 = vunpack.c.h.b16 %v546
        %v2674 = vunpack.c.l.b16 %v547
        %v2675 = vunpack.c.h.b16 %v547
        %v2676 = vunpack.c.l.b16 %v548
        %v2677 = vunpack.c.h.b16 %v548
        %v2678 = vunpack.c.l.b16 %v549
        %v2679 = vunpack.c.h.b16 %v549
        %v2680 = vunpack.c.l.b16 %v550
        %v2681 = vunpack.c.h.b16 %v550
        %v2682 = vunpack.c.l.b16 %v551
        %v2683 = vunpack.c.l.b16 %v552
        %v2684 = vunpack.c.h.b16 %v552
        %v2685 = vunpack.c.l.b16 %v553
        %v2686 = vunpack.c.h.b16 %v553
        %v2687 = vunpack.c.l.b16 %v554
        %v2688 = vunpack.c.h.b16 %v554
        %v2689 = vunpack.c.l.b16 %v555
        %v2690 = vunpack.c.h.b16 %v555
        %v2691 = vunpack.c.l.b16 %v556
        %v2692 = vunpack.c.h.b16 %v556
        %v2693 = vunpack.c.l.b16 %v557
        %v2694 = vunpack.c.h.b16 %v557
        %v2695 = vunpack.c.l.b16 %v558
        %v2696 = vunpack.c.h.b16 %v558
        %v2697 = vunpack.c.l.b16 %v559
        %v2698 = vunpack.c.h.b16 %v559
        %v2699 = vunpack.c.l.b16 %v560
        %v2700 = vunpack.c.h.b16 %v560
        %v2701 = vunpack.c.l.b16 %v561
        %v2702 = vunpack.c.h.b16 %v561
        %v2703 = vunpack.c.l.b16 %v562
        %v2704 = vunpack.c.h.b16 %v562
        %v2705 = vunpack.c.l.b16 %v563
        %v2706 = vunpack.c.h.b16 %v563
        %v2707 = vunpack.c.l.b16 %v564
        %v2708 = vunpack.c.h.b16 %v564
        %v2709 = vunpack.c.l.b16 %v565
        %v2710 = vunpack.c.l.b16 %v566
        %v2711 = vunpack.c.h.b16 %v566
        %v2712 = vunpack.c.l.b16 %v567
        %v2713 = vunpack.c.h.b16 %v567
        %v2714 = vunpack.c.l.b16 %v568
        %v2715 = vunpack.c.h.b16 %v568
        %v2716 = vunpack.c.l.b16 %v569
        %v2717 = vunpack.c.h.b16 %v569
        %v2718 = vunpack.c.l.b16 %v570
        %v2719 = vunpack.c.h.b16 %v570
        %v2720 = vunpack.c.l.b16 %v571
        %v2721 = vunpack.c.h.b16 %v571
        %v2722 = vunpack.c.l.b16 %v572
        %v2723 = vunpack.c.h.b16 %v572
        %v2724 = vunpack.c.l.b16 %v573
        %v2725 = vunpack.c.h.b16 %v573
        %v2726 = vunpack.c.l.b16 %v574
        %v2727 = vunpack.c.h.b16 %v574
        %v2728 = vunpack.c.l.b16 %v575
        %v2729 = vunpack.c.h.b16 %v575
        %v2730 = vunpack.c.l.b16 %v576
        %v2731 = vunpack.c.h.b16 %v576
        %v2732 = vunpack.c.l.b16 %v577
        %v2733 = vunpack.c.h.b16 %v577
        %v2734 = vunpack.c.l.b16 %v578
        %v2735 = vunpack.c.h.b16 %v578
        %v2736 = vunpack.c.l.b16 %v579
        %v2737 = vunpack.c.l.b16 %v580
        %v2738 = vunpack.c.h.b16 %v580
        %v2739 = vunpack.c.l.b16 %v581
        %v2740 = vunpack.c.h.b16 %v581
        %v2741 = vunpack.c.l.b16 %v582
        %v2742 = vunpack.c.h.b16 %v582
        %v2743 = vunpack.c.l.b16 %v583
        %v2744 = vunpack.c.h.b16 %v583
        %v2745 = vunpack.c.l.b16 %v584
        %v2746 = vunpack.c.h.b16 %v584
        %v2747 = vunpack.c.l.b16 %v585
        %v2748 = vunpack.c.h.b16 %v585
        %v2749 = vunpack.c.l.b16 %v586
        %v2750 = vunpack.c.h.b16 %v586
        %v2751 = vunpack.c.l.b16 %v587
        %v2752 = vunpack.c.h.b16 %v587
        %v2753 = vunpack.c.l.b16 %v588
        %v2754 = vunpack.c.h.b16 %v588
        %v2755 = vunpack.c.l.b16 %v589
        %v2756 = vunpack.c.h.b16 %v589
        %v2757 = vunpack.c.l.b16 %v590
        %v2758 = vunpack.c.h.b16 %v590
        %v2759 = vunpack.c.l.b16 %v591
        %v2760 = vunpack.c.h.b16 %v591
        %v2761 = vunpack.c.l.b16 %v592
        %v2762 = vunpack.c.h.b16 %v592
        %v2763 = vunpack.c.l.b16 %v593
        %v2764 = vunpack.c.l.b16 %v594
        %v2765 = vunpack.c.h.b16 %v594
        %v2766 = vunpack.c.l.b16 %v595
        %v2767 = vunpack.c.h.b16 %v595
        %v2768 = vunpack.c.l.b16 %v596
        %v2769 = vunpack.c.h.b16 %v596
        %v2770 = vunpack.c.l.b16 %v597
        %v2771 = vunpack.c.h.b16 %v597
        %v2772 = vunpack.c.l.b16 %v598
        %v2773 = vunpack.c.h.b16 %v598
        %v2774 = vunpack.c.l.b16 %v599
        %v2775 = vunpack.c.h.b16 %v599
        %v2776 = vunpack.c.l.b16 %v600
        %v2777 = vunpack.c.h.b16 %v600
        %v2778 = vunpack.c.l.b16 %v601
        %v2779 = vunpack.c.h.b16 %v601
        %v2780 = vunpack.c.l.b16 %v602
        %v2781 = vunpack.c.h.b16 %v602
        %v2782 = vunpack.c.l.b16 %v603
        %v2783 = vunpack.c.h.b16 %v603
        %v2784 = vunpack.c.l.b16 %v604
        %v2785 = vunpack.c.h.b16 %v604
        %v2786 = vunpack.c.l.b16 %v605
        %v2787 = vunpack.c.h.b16 %v605
        %v2788 = vunpack.c.l.b16 %v606
        %v2789 = vunpack.c.h.b16 %v606
        %v2790 = vunpack.c.l.b16 %v607
        %v2791 = vunpack.c.l.b16 %v608
        %v2792 = vunpack.c.h.b16 %v608
        %v2793 = vunpack.c.l.b16 %v609
        %v2794 = vunpack.c.h.b16 %v609
        %v2795 = vunpack.c.l.b16 %v610
        %v2796 = vunpack.c.h.b16 %v610
        %v2797 = vunpack.c.l.b16 %v611
        %v2798 = vunpack.c.h.b16 %v611
        %v2799 = vunpack.c.l.b16 %v612
        %v2800 = vunpack.c.h.b16 %v612
        %v2801 = vunpack.c.l.b16 %v613
        %v2802 = vunpack.c.h.b16 %v613
        %v2803 = vunpack.c.l.b16 %v614
        %v2804 = vunpack.c.h.b16 %v614
        %v2805 = vunpack.c.l.b16 %v615
        %v2806 = vunpack.c.h.b16 %v615
        %v2807 = vunpack.c.l.b16 %v616
        %v2808 = vunpack.c.h.b16 %v616
        %v2809 = vunpack.c.l.b16 %v617
        %v2810 = vunpack.c.h.b16 %v617
        %v2811 = vunpack.c.l.b16 %v618
        %v2812 = vunpack.c.h.b16 %v618
        %v2813 = vunpack.c.l.b16 %v619
        %v2814 = vunpack.c.h.b16 %v619
        %v2815 = vunpack.c.l.b16 %v620
        %v2816 = vunpack.c.h.b16 %v620
        %v2817 = vunpack.c.l.b16 %v621
        %v2818 = vunpack.c.l.b16 %v622
        %v2819 = vunpack.c.h.b16 %v622
        %v2820 = vunpack.c.l.b16 %v623
        %v2821 = vunpack.c.h.b16 %v623
        %v2822 = vunpack.c.l.b16 %v624
        %v2823 = vunpack.c.h.b16 %v624
        %v2824 = vunpack.c.l.b16 %v625
        %v2825 = vunpack.c.h.b16 %v625
        %v2826 = vunpack.c.l.b16 %v626
        %v2827 = vunpack.c.h.b16 %v626
        %v2828 = vunpack.c.l.b16 %v627
        %v2829 = vunpack.c.h.b16 %v627
        %v2830 = vunpack.c.l.b16 %v628
        %v2831 = vunpack.c.h.b16 %v628
        %v2832 = vunpack.c.l.b16 %v629
        %v2833 = vunpack.c.h.b16 %v629
        %v2834 = vunpack.c.l.b16 %v630
        %v2835 = vunpack.c.h.b16 %v630
        %v2836 = vunpack.c.l.b16 %v631
        %v2837 = vunpack.c.h.b16 %v631
        %v2838 = vunpack.c.l.b16 %v632
        %v2839 = vunpack.c.h.b16 %v632
        %v2840 = vunpack.c.l.b16 %v633
        %v2841 = vunpack.c.h.b16 %v633
        %v2842 = vunpack.c.l.b16 %v634
        %v2843 = vunpack.c.h.b16 %v634
        %v2844 = vunpack.c.l.b16 %v635
        %v2845 = vunpack.c.l.b16 %v636
        %v2846 = vunpack.c.h.b16 %v636
        %v2847 = vunpack.c.l.b16 %v637
        %v2848 = vunpack.c.h.b16 %v637
        %v2849 = vunpack.c.l.b16 %v638
        %v2850 = vunpack.c.h.b16 %v638
        %v2851 = vunpack.c.l.b16 %v639
        %v2852 = vunpack.c.h.b16 %v639
        %v2853 = vunpack.c.l.b16 %v640
        %v2854 = vunpack.c.h.b16 %v640
        %v2855 = vunpack.c.l.b16 %v641
        %v2856 = vunpack.c.h.b16 %v641
        %v2857 = vunpack.c.l.b16 %v642
        %v2858 = vunpack.c.h.b16 %v642
        %v2859 = vunpack.c.l.b16 %v643
        %v2860 = vunpack.c.h.b16 %v643
        %v2861 = vunpack.c.l.b16 %v644
        %v2862 = vunpack.c.h.b16 %v644
        %v2863 = vunpack.c.l.b16 %v645
        %v2864 = vunpack.c.h.b16 %v645
        %v2865 = vunpack.c.l.b16 %v646
        %v2866 = vunpack.c.h.b16 %v646
        %v2867 = vunpack.c.l.b16 %v647
        %v2868 = vunpack.c.h.b16 %v647
        %v2869 = vunpack.c.l.b16 %v648
        %v2870 = vunpack.c.h.b16 %v648
        %v2871 = vunpack.c.l.b16 %v649
        %v2872 = vunpack.c.l.b16 %v650
        %v2873 = vunpack.c.h.b16 %v650
        %v2874 = vunpack.c.l.b16 %v651
        %v2875 = vunpack.c.h.b16 %v651
        %v2876 = vunpack.c.l.b16 %v652
        %v2877 = vunpack.c.h.b16 %v652
        %v2878 = vunpack.c.l.b16 %v653
        %v2879 = vunpack.c.h.b16 %v653
        %v2880 = vunpack.c.l.b16 %v654
        %v2881 = vunpack.c.h.b16 %v654
        %v2882 = vunpack.c.l.b16 %v655
        %v2883 = vunpack.c.h.b16 %v655
        %v2884 = vunpack.c.l.b16 %v656
        %v2885 = vunpack.c.h.b16 %v656
        %v2886 = vunpack.c.l.b16 %v657
        %v2887 = vunpack.c.h.b16 %v657
        %v2888 = vunpack.c.l.b16 %v658
        %v2889 = vunpack.c.h.b16 %v658
        %v2890 = vunpack.c.l.b16 %v659
        %v2891 = vunpack.c.h.b16 %v659
        %v2892 = vunpack.c.l.b16 %v660
        %v2893 = vunpack.c.h.b16 %v660
        %v2894 = vunpack.c.l.b16 %v661
        %v2895 = vunpack.c.h.b16 %v661
        %v2896 = vunpack.c.l.b16 %v662
        %v2897 = vunpack.c.h.b16 %v662
        %v2898 = vunpack.c.l.b16 %v663
        %v2899 = vunpack.c.l.b16 %v664
        %v2900 = vunpack.c.h.b16 %v664
        %v2901 = vunpack.c.l.b16 %v665
        %v2902 = vunpack.c.h.b16 %v665
        %v2903 = vunpack.c.l.b16 %v666
        %v2904 = vunpack.c.h.b16 %v666
        %v2905 = vunpack.c.l.b16 %v667
        %v2906 = vunpack.c.h.b16 %v667
        %v2907 = vunpack.c.l.b16 %v668
        %v2908 = vunpack.c.h.b16 %v668
        %v2909 = vunpack.c.l.b16 %v669
        %v2910 = vunpack.c.h.b16 %v669
        %v2911 = vunpack.c.l.b16 %v670
        %v2912 = vunpack.c.h.b16 %v670
        %v2913 = vunpack.c.l.b16 %v671
        %v2914 = vunpack.c.h.b16 %v671
        %v2915 = vunpack.c.l.b16 %v672
        %v2916 = vunpack.c.h.b16 %v672
        %v2917 = vunpack.c.l.b16 %v673
        %v2918 = vunpack.c.h.b16 %v673
        %v2919 = vunpack.c.l.b16 %v674
        %v2920 = vunpack.c.h.b16 %v674
        %v2921 = vunpack.c.l.b16 %v675
        %v2922 = vunpack.c.h.b16 %v675
        %v2923 = vunpack.c.l.b16 %v676
        %v2924 = vunpack.c.h.b16 %v676
        %v2925 = vunpack.c.l.b16 %v677
        %v2926 = vunpack.c.l.b16 %v678
        %v2927 = vunpack.c.h.b16 %v678
        %v2928 = vunpack.c.l.b16 %v679
        %v2929 = vunpack.c.h.b16 %v679
        %v2930 = vunpack.c.l.b16 %v680
        %v2931 = vunpack.c.h.b16 %v680
        %v2932 = vunpack.c.l.b16 %v681
        %v2933 = vunpack.c.h.b16 %v681
        %v2934 = vunpack.c.l.b16 %v682
        %v2935 = vunpack.c.h.b16 %v682
        %v2936 = vunpack.c.l.b16 %v683
        %v2937 = vunpack.c.h.b16 %v683
        %v2938 = vunpack.c.l.b16 %v684
        %v2939 = vunpack.c.h.b16 %v684
        %v2940 = vunpack.c.l.b16 %v685
        %v2941 = vunpack.c.h.b16 %v685
        %v2942 = vunpack.c.l.b16 %v686
        %v2943 = vunpack.c.h.b16 %v686
        %v2944 = vunpack.c.l.b16 %v687
        %v2945 = vunpack.c.h.b16 %v687
        %v2946 = vunpack.c.l.b16 %v688
        %v2947 = vunpack.c.h.b16 %v688
        %v2948 = vunpack.c.l.b16 %v689
        %v2949 = vunpack.c.h.b16 %v689
        %v2950 = vunpack.c.l.b16 %v690
        %v2951 = vunpack.c.h.b16 %v690
        %v2952 = vunpack.c.l.b16 %v691
        %v2953 = vunpack.c.l.b16 %v692
        %v2954 = vunpack.c.h.b16 %v692
        %v2955 = vunpack.c.l.b16 %v693
        %v2956 = vunpack.c.h.b16 %v693
        %v2957 = vunpack.c.l.b16 %v694
        %v2958 = vunpack.c.h.b16 %v694
        %v2959 = vunpack.c.l.b16 %v695
        %v2960 = vunpack.c.h.b16 %v695
        %v2961 = vunpack.c.l.b16 %v696
        %v2962 = vunpack.c.h.b16 %v696
        %v2963 = vunpack.c.l.b16 %v697
        %v2964 = vunpack.c.h.b16 %v697
        %v2965 = vunpack.c.l.b16 %v698
        %v2966 = vunpack.c.h.b16 %v698
        %v2967 = vunpack.c.l.b16 %v699
        %v2968 = vunpack.c.h.b16 %v699
        %v2969 = vunpack.c.l.b16 %v700
        %v2970 = vunpack.c.h.b16 %v700
        %v2971 = vunpack.c.l.b16 %v701
        %v2972 = vunpack.c.h.b16 %v701
        %v2973 = vunpack.c.l.b16 %v702
        %v2974 = vunpack.c.h.b16 %v702
        %v2975 = vunpack.c.l.b16 %v703
        %v2976 = vunpack.c.h.b16 %v703
        %v2977 = vunpack.c.l.b16 %v704
        %v2978 = vunpack.c.h.b16 %v704
        %v2979 = vunpack.c.l.b16 %v705
        %v2980 = vunpack.c.l.b16 %v706
        %v2981 = vunpack.c.h.b16 %v706
        %v2982 = vunpack.c.l.b16 %v707
        %v2983 = vunpack.c.h.b16 %v707
        %v2984 = vunpack.c.l.b16 %v708
        %v2985 = vunpack.c.h.b16 %v708
        %v2986 = vunpack.c.l.b16 %v709
        %v2987 = vunpack.c.h.b16 %v709
        %v2988 = vunpack.c.l.b16 %v710
        %v2989 = vunpack.c.h.b16 %v710
        %v2990 = vunpack.c.l.b16 %v711
        %v2991 = vunpack.c.h.b16 %v711
        %v2992 = vunpack.c.l.b16 %v712
        %v2993 = vunpack.c.h.b16 %v712
        %v2994 = vunpack.c.l.b16 %v713
        %v2995 = vunpack.c.h.b16 %v713
        %v2996 = vunpack.c.l.b16 %v714
        %v2997 = vunpack.c.h.b16 %v714
        %v2998 = vunpack.c.l.b16 %v715
        %v2999 = vunpack.c.h.b16 %v715
        %v3000 = vunpack.c.l.b16 %v716
        %v3001 = vunpack.c.h.b16 %v716
        %v3002 = vunpack.c.l.b16 %v717
        %v3003 = vunpack.c.h.b16 %v717
        %v3004 = vunpack.c.l.b16 %v718
        %v3005 = vunpack.c.h.b16 %v718
        %v3006 = vunpack.c.l.b16 %v719
        %v3007 = vunpack.c.l.b16 %v720
        %v3008 = vunpack.c.h.b16 %v720
        %v3009 = vunpack.c.l.b16 %v721
        %v3010 = vunpack.c.h.b16 %v721
        %v3011 = vunpack.c.l.b16 %v722
        %v3012 = vunpack.c.h.b16 %v722
        %v3013 = vunpack.c.l.b16 %v723
        %v3014 = vunpack.c.h.b16 %v723
        %v3015 = vunpack.c.l.b16 %v724
        %v3016 = vunpack.c.h.b16 %v724
        %v3017 = vunpack.c.l.b16 %v725
        %v3018 = vunpack.c.h.b16 %v725
        %v3019 = vunpack.c.l.b16 %v726
        %v3020 = vunpack.c.h.b16 %v726
        %v3021 = vunpack.c.l.b16 %v727
        %v3022 = vunpack.c.h.b16 %v727
        %v3023 = vunpack.c.l.b16 %v728
        %v3024 = vunpack.c.h.b16 %v728
        %v3025 = vunpack.c.l.b16 %v729
        %v3026 = vunpack.c.h.b16 %v729
        %v3027 = vunpack.c.l.b16 %v730
        %v3028 = vunpack.c.h.b16 %v730
        %v3029 = vunpack.c.l.b16 %v731
        %v3030 = vunpack.c.h.b16 %v731
        %v3031 = vunpack.c.l.b16 %v732
        %v3032 = vunpack.c.h.b16 %v732
        %v3033 = vunpack.c.l.b16 %v733
        %v3034 = vunpack.c.l.b16 %v734
        %v3035 = vunpack.c.h.b16 %v734
        %v3036 = vunpack.c.l.b16 %v735
        %v3037 = vunpack.c.h.b16 %v735
        %v3038 = vunpack.c.l.b16 %v736
        %v3039 = vunpack.c.h.b16 %v736
        %v3040 = vunpack.c.l.b16 %v737
        %v3041 = vunpack.c.h.b16 %v737
        %v3042 = vunpack.c.l.b16 %v738
        %v3043 = vunpack.c.h.b16 %v738
        %v3044 = vunpack.c.l.b16 %v739
        %v3045 = vunpack.c.h.b16 %v739
        %v3046 = vunpack.c.l.b16 %v740
        %v3047 = vunpack.c.h.b16 %v740
        %v3048 = vunpack.c.l.b16 %v741
        %v3049 = vunpack.c.h.b16 %v741
        %v3050 = vunpack.c.l.b16 %v742
        %v3051 = vunpack.c.h.b16 %v742
        %v3052 = vunpack.c.l.b16 %v743
        %v3053 = vunpack.c.h.b16 %v743
        %v3054 = vunpack.c.l.b16 %v744
        %v3055 = vunpack.c.h.b16 %v744
        %v3056 = vunpack.c.l.b16 %v745
        %v3057 = vunpack.c.h.b16 %v745
        %v3058 = vunpack.c.l.b16 %v746
        %v3059 = vunpack.c.h.b16 %v746
        %v3060 = vunpack.c.l.b16 %v747
        %v3061 = vunpack.c.l.b16 %v748
        %v3062 = vunpack.c.h.b16 %v748
        %v3063 = vunpack.c.l.b16 %v749
        %v3064 = vunpack.c.h.b16 %v749
        %v3065 = vunpack.c.l.b16 %v750
        %v3066 = vunpack.c.h.b16 %v750
        %v3067 = vunpack.c.l.b16 %v751
        %v3068 = vunpack.c.h.b16 %v751
        %v3069 = vunpack.c.l.b16 %v752
        %v3070 = vunpack.c.h.b16 %v752
        %v3071 = vunpack.c.l.b16 %v753
        %v3072 = vunpack.c.h.b16 %v753
        %v3073 = vunpack.c.l.b16 %v754
        %v3074 = vunpack.c.h.b16 %v754
        %v3075 = vunpack.c.l.b16 %v755
        %v3076 = vunpack.c.h.b16 %v755
        %v3077 = vunpack.c.l.b16 %v756
        %v3078 = vunpack.c.h.b16 %v756
        %v3079 = vunpack.c.l.b16 %v757
        %v3080 = vunpack.c.h.b16 %v757
        %v3081 = vunpack.c.l.b16 %v758
        %v3082 = vunpack.c.h.b16 %v758
        %v3083 = vunpack.c.l.b16 %v759
        %v3084 = vunpack.c.h.b16 %v759
        %v3085 = vunpack.c.l.b16 %v760
        %v3086 = vunpack.c.h.b16 %v760
        %v3087 = vunpack.c.l.b16 %v761
        %v3088 = vunpack.c.l.b16 %v762
        %v3089 = vunpack.c.h.b16 %v762
        %v3090 = vunpack.c.l.b16 %v763
        %v3091 = vunpack.c.h.b16 %v763
        %v3092 = vunpack.c.l.b16 %v764
        %v3093 = vunpack.c.h.b16 %v764
        %v3094 = vunpack.c.l.b16 %v765
        %v3095 = vunpack.c.h.b16 %v765
        %v3096 = vunpack.c.l.b16 %v766
        %v3097 = vunpack.c.h.b16 %v766
        %v3098 = vunpack.c.l.b16 %v767
        %v3099 = vunpack.c.h.b16 %v767
        %v3100 = vunpack.c.l.b16 %v768
        %v3101 = vunpack.c.h.b16 %v768
        %v3102 = vunpack.c.l.b16 %v769
        %v3103 = vunpack.c.h.b16 %v769
        %v3104 = vunpack.c.l.b16 %v770
        %v3105 = vunpack.c.h.b16 %v770
        %v3106 = vunpack.c.l.b16 %v771
        %v3107 = vunpack.c.h.b16 %v771
        %v3108 = vunpack.c.l.b16 %v772
        %v3109 = vunpack.c.h.b16 %v772
        %v3110 = vunpack.c.l.b16 %v773
        %v3111 = vunpack.c.h.b16 %v773
        %v3112 = vunpack.c.l.b16 %v774
        %v3113 = vunpack.c.h.b16 %v774
        %v3114 = vunpack.c.l.b16 %v775
        %v3115 = vunpack.c.l.b16 %v776
        %v3116 = vunpack.c.h.b16 %v776
        %v3117 = vunpack.c.l.b16 %v777
        %v3118 = vunpack.c.h.b16 %v777
        %v3119 = vunpack.c.l.b16 %v778
        %v3120 = vunpack.c.h.b16 %v778
        %v3121 = vunpack.c.l.b16 %v779
        %v3122 = vunpack.c.h.b16 %v779
        %v3123 = vunpack.c.l.b16 %v780
        %v3124 = vunpack.c.h.b16 %v780
        %v3125 = vunpack.c.l.b16 %v781
        %v3126 = vunpack.c.h.b16 %v781
        %v3127 = vunpack.c.l.b16 %v782
        %v3128 = vunpack.c.h.b16 %v782
        %v3129 = vunpack.c.l.b16 %v783
        %v3130 = vunpack.c.h.b16 %v783
        %v3131 = vunpack.c.l.b16 %v784
        %v3132 = vunpack.c.h.b16 %v784
        %v3133 = vunpack.c.l.b16 %v785
        %v3134 = vunpack.c.h.b16 %v785
        %v3135 = vunpack.c.l.b16 %v786
        %v3136 = vunpack.c.h.b16 %v786
        %v3137 = vunpack.c.l.b16 %v787
        %v3138 = vunpack.c.h.b16 %v787
        %v3139 = vunpack.c.l.b16 %v788
        %v3140 = vunpack.c.h.b16 %v788
        %v3141 = vunpack.c.l.b16 %v789
        %v3142 = vunpack.c.l.b16 %v790
        %v3143 = vunpack.c.h.b16 %v790
        %v3144 = vunpack.c.l.b16 %v791
        %v3145 = vunpack.c.h.b16 %v791
        %v3146 = vunpack.c.l.b16 %v792
        %v3147 = vunpack.c.h.b16 %v792
        %v3148 = vunpack.c.l.b16 %v793
        %v3149 = vunpack.c.h.b16 %v793
        %v3150 = vunpack.c.l.b16 %v794
        %v3151 = vunpack.c.h.b16 %v794
        %v3152 = vunpack.c.l.b16 %v795
        %v3153 = vunpack.c.h.b16 %v795
        %v3154 = vunpack.c.l.b16 %v796
        %v3155 = vunpack.c.h.b16 %v796
        %v3156 = vunpack.c.l.b16 %v797
        %v3157 = vunpack.c.h.b16 %v797
        %v3158 = vunpack.c.l.b16 %v798
        %v3159 = vunpack.c.h.b16 %v798
        %v3160 = vunpack.c.l.b16 %v799
        %v3161 = vunpack.c.h.b16 %v799
        %v3162 = vunpack.c.l.b16 %v800
        %v3163 = vunpack.c.h.b16 %v800
        %v3164 = vunpack.c.l.b16 %v801
        %v3165 = vunpack.c.h.b16 %v801
        %v3166 = vunpack.c.l.b16 %v802
        %v3167 = vunpack.c.h.b16 %v802
        %v3168 = vunpack.c.l.b16 %v803
        %v3169 = vunpack.c.l.b16 %v804
        %v3170 = vunpack.c.h.b16 %v804
        %v3171 = vunpack.c.l.b16 %v805
        %v3172 = vunpack.c.h.b16 %v805
        %v3173 = vunpack.c.l.b16 %v806
        %v3174 = vunpack.c.h.b16 %v806
        %v3175 = vunpack.c.l.b16 %v807
        %v3176 = vunpack.c.h.b16 %v807
        %v3177 = vunpack.c.l.b16 %v808
        %v3178 = vunpack.c.h.b16 %v808
        %v3179 = vunpack.c.l.b16 %v809
        %v3180 = vunpack.c.h.b16 %v809
        %v3181 = vunpack.c.l.b16 %v810
        %v3182 = vunpack.c.h.b16 %v810
        %v3183 = vunpack.c.l.b16 %v811
        %v3184 = vunpack.c.h.b16 %v811
        %v3185 = vunpack.c.l.b16 %v812
        %v3186 = vunpack.c.h.b16 %v812
        %v3187 = vunpack.c.l.b16 %v813
        %v3188 = vunpack.c.h.b16 %v813
        %v3189 = vunpack.c.l.b16 %v814
        %v3190 = vunpack.c.h.b16 %v814
        %v3191 = vunpack.c.l.b16 %v815
        %v3192 = vunpack.c.h.b16 %v815
        %v3193 = vunpack.c.l.b16 %v816
        %v3194 = vunpack.c.h.b16 %v816
        %v3195 = vunpack.c.l.b16 %v817
        %v3196 = vunpack.c.l.b16 %v818
        %v3197 = vunpack.c.h.b16 %v818
        %v3198 = vunpack.c.l.b16 %v819
        %v3199 = vunpack.c.h.b16 %v819
        %v3200 = vunpack.c.l.b16 %v820
        %v3201 = vunpack.c.h.b16 %v820
        %v3202 = vunpack.c.l.b16 %v821
        %v3203 = vunpack.c.h.b16 %v821
        %v3204 = vunpack.c.l.b16 %v822
        %v3205 = vunpack.c.h.b16 %v822
        %v3206 = vunpack.c.l.b16 %v823
        %v3207 = vunpack.c.h.b16 %v823
        %v3208 = vunpack.c.l.b16 %v824
        %v3209 = vunpack.c.h.b16 %v824
        %v3210 = vunpack.c.l.b16 %v825
        %v3211 = vunpack.c.h.b16 %v825
        %v3212 = vunpack.c.l.b16 %v826
        %v3213 = vunpack.c.h.b16 %v826
        %v3214 = vunpack.c.l.b16 %v827
        %v3215 = vunpack.c.h.b16 %v827
        %v3216 = vunpack.c.l.b16 %v828
        %v3217 = vunpack.c.h.b16 %v828
        %v3218 = vunpack.c.l.b16 %v829
        %v3219 = vunpack.c.h.b16 %v829
        %v3220 = vunpack.c.l.b16 %v830
        %v3221 = vunpack.c.h.b16 %v830
        %v3222 = vunpack.c.l.b16 %v831
        %v3223 = vunpack.c.l.b16 %v832
        %v3224 = vunpack.c.h.b16 %v832
        %v3225 = vunpack.c.l.b16 %v833
        %v3226 = vunpack.c.h.b16 %v833
        %v3227 = vunpack.c.l.b16 %v834
        %v3228 = vunpack.c.h.b16 %v834
        %v3229 = vunpack.c.l.b16 %v835
        %v3230 = vunpack.c.h.b16 %v835
        %v3231 = vunpack.c.l.b16 %v836
        %v3232 = vunpack.c.h.b16 %v836
        %v3233 = vunpack.c.l.b16 %v837
        %v3234 = vunpack.c.h.b16 %v837
        %v3235 = vunpack.c.l.b16 %v838
        %v3236 = vunpack.c.h.b16 %v838
        %v3237 = vunpack.c.l.b16 %v839
        %v3238 = vunpack.c.h.b16 %v839
        %v3239 = vunpack.c.l.b16 %v840
        %v3240 = vunpack.c.h.b16 %v840
        %v3241 = vunpack.c.l.b16 %v841
        %v3242 = vunpack.c.h.b16 %v841
        %v3243 = vunpack.c.l.b16 %v842
        %v3244 = vunpack.c.h.b16 %v842
        %v3245 = vunpack.c.l.b16 %v843
        %v3246 = vunpack.c.h.b16 %v843
        %v3247 = vunpack.c.l.b16 %v844
        %v3248 = vunpack.c.h.b16 %v844
        %v3249 = vunpack.c.l.b16 %v845
        %v3250 = vunpack.c.l.b16 %v846
        %v3251 = vunpack.c.h.b16 %v846
        %v3252 = vunpack.c.l.b16 %v847
        %v3253 = vunpack.c.h.b16 %v847
        %v3254 = vunpack.c.l.b16 %v848
        %v3255 = vunpack.c.h.b16 %v848
        %v3256 = vunpack.c.l.b16 %v849
        %v3257 = vunpack.c.h.b16 %v849
        %v3258 = vunpack.c.l.b16 %v850
        %v3259 = vunpack.c.h.b16 %v850
        %v3260 = vunpack.c.l.b16 %v851
        %v3261 = vunpack.c.h.b16 %v851
        %v3262 = vunpack.c.l.b16 %v852
        %v3263 = vunpack.c.h.b16 %v852
        %v3264 = vunpack.c.l.b16 %v853
        %v3265 = vunpack.c.h.b16 %v853
        %v3266 = vunpack.c.l.b16 %v854
        %v3267 = vunpack.c.h.b16 %v854
        %v3268 = vunpack.c.l.b16 %v855
        %v3269 = vunpack.c.h.b16 %v855
        %v3270 = vunpack.c.l.b16 %v856
        %v3271 = vunpack.c.h.b16 %v856
        %v3272 = vunpack.c.l.b16 %v857
        %v3273 = vunpack.c.h.b16 %v857
        %v3274 = vunpack.c.l.b16 %v858
        %v3275 = vunpack.c.h.b16 %v858
        %v3276 = vunpack.c.l.b16 %v859
        %v3277 = vunpack.c.l.b16 %v860
        %v3278 = vunpack.c.h.b16 %v860
        %v3279 = vunpack.c.l.b16 %v861
        %v3280 = vunpack.c.h.b16 %v861
        %v3281 = vunpack.c.l.b16 %v862
        %v3282 = vunpack.c.h.b16 %v862
        %v3283 = vunpack.c.l.b16 %v863
        %v3284 = vunpack.c.h.b16 %v863
        %v3285 = vunpack.c.l.b16 %v864
        %v3286 = vunpack.c.h.b16 %v864
        %v3287 = vunpack.c.l.b16 %v865
        %v3288 = vunpack.c.h.b16 %v865
        %v3289 = vunpack.c.l.b16 %v866
        %v3290 = vunpack.c.h.b16 %v866
        %v3291 = vunpack.c.l.b16 %v867
        %v3292 = vunpack.c.h.b16 %v867
        %v3293 = vunpack.c.l.b16 %v868
        %v3294 = vunpack.c.h.b16 %v868
        %v3295 = vunpack.c.l.b16 %v869
        %v3296 = vunpack.c.h.b16 %v869
        %v3297 = vunpack.c.l.b16 %v870
        %v3298 = vunpack.c.h.b16 %v870
        %v3299 = vunpack.c.l.b16 %v871
        %v3300 = vunpack.c.h.b16 %v871
        %v3301 = vunpack.c.l.b16 %v872
        %v3302 = vunpack.c.h.b16 %v872
        %v3303 = vunpack.c.l.b16 %v873
        %v3304 = vunpack.c.l.b16 %v874
        %v3305 = vunpack.c.h.b16 %v874
        %v3306 = vunpack.c.l.b16 %v875
        %v3307 = vunpack.c.h.b16 %v875
        %v3308 = vunpack.c.l.b16 %v876
        %v3309 = vunpack.c.h.b16 %v876
        %v3310 = vunpack.c.l.b16 %v877
        %v3311 = vunpack.c.h.b16 %v877
        %v3312 = vunpack.c.l.b16 %v878
        %v3313 = vunpack.c.h.b16 %v878
        %v3314 = vunpack.c.l.b16 %v879
        %v3315 = vunpack.c.h.b16 %v879
        %v3316 = vunpack.c.l.b16 %v880
        %v3317 = vunpack.c.h.b16 %v880
        %v3318 = vunpack.c.l.b16 %v881
        %v3319 = vunpack.c.h.b16 %v881
        %v3320 = vunpack.c.l.b16 %v882
        %v3321 = vunpack.c.h.b16 %v882
        %v3322 = vunpack.c.l.b16 %v883
        %v3323 = vunpack.c.h.b16 %v883
        %v3324 = vunpack.c.l.b16 %v884
        %v3325 = vunpack.c.h.b16 %v884
        %v3326 = vunpack.c.l.b16 %v885
        %v3327 = vunpack.c.h.b16 %v885
        %v3328 = vunpack.c.l.b16 %v886
        %v3329 = vunpack.c.h.b16 %v886
        %v3330 = vunpack.c.l.b16 %v887
        %v3331 = vunpack.c.l.b16 %v888
        %v3332 = vunpack.c.h.b16 %v888
        %v3333 = vunpack.c.l.b16 %v889
        %v3334 = vunpack.c.h.b16 %v889
        %v3335 = vunpack.c.l.b16 %v890
        %v3336 = vunpack.c.h.b16 %v890
        %v3337 = vunpack.c.l.b16 %v891
        %v3338 = vunpack.c.h.b16 %v891
        %v3339 = vunpack.c.l.b16 %v892
        %v3340 = vunpack.c.h.b16 %v892
        %v3341 = vunpack.c.l.b16 %v893
        %v3342 = vunpack.c.h.b16 %v893
        %v3343 = vunpack.c.l.b16 %v894
        %v3344 = vunpack.c.h.b16 %v894
        %v3345 = vunpack.c.l.b16 %v895
        %v3346 = vunpack.c.h.b16 %v895
        %v3347 = vunpack.c.l.b16 %v896
        %v3348 = vunpack.c.h.b16 %v896
        %v3349 = vunpack.c.l.b16 %v897
        %v3350 = vunpack.c.h.b16 %v897
        %v3351 = vunpack.c.l.b16 %v898
        %v3352 = vunpack.c.h.b16 %v898
        %v3353 = vunpack.c.l.b16 %v899
        %v3354 = vunpack.c.h.b16 %v899
        %v3355 = vunpack.c.l.b16 %v900
        %v3356 = vunpack.c.h.b16 %v900
        %v3357 = vunpack.c.l.b16 %v901
        %v3358 = vunpack.c.l.b16 %v902
        %v3359 = vunpack.c.h.b16 %v902
        %v3360 = vunpack.c.l.b16 %v903
        %v3361 = vunpack.c.h.b16 %v903
        %v3362 = vunpack.c.l.b16 %v904
        %v3363 = vunpack.c.h.b16 %v904
        %v3364 = vunpack.c.l.b16 %v905
        %v3365 = vunpack.c.h.b16 %v905
        %v3366 = vunpack.c.l.b16 %v906
        %v3367 = vunpack.c.h.b16 %v906
        %v3368 = vunpack.c.l.b16 %v907
        %v3369 = vunpack.c.h.b16 %v907
        %v3370 = vunpack.c.l.b16 %v908
        %v3371 = vunpack.c.h.b16 %v908
        %v3372 = vunpack.c.l.b16 %v909
        %v3373 = vunpack.c.h.b16 %v909
        %v3374 = vunpack.c.l.b16 %v910
        %v3375 = vunpack.c.h.b16 %v910
        %v3376 = vunpack.c.l.b16 %v911
        %v3377 = vunpack.c.h.b16 %v911
        %v3378 = vunpack.c.l.b16 %v912
        %v3379 = vunpack.c.h.b16 %v912
        %v3380 = vunpack.c.l.b16 %v913
        %v3381 = vunpack.c.h.b16 %v913
        %v3382 = vunpack.c.l.b16 %v914
        %v3383 = vunpack.c.h.b16 %v914
        %v3384 = vunpack.c.l.b16 %v915
        %v3385 = vunpack.c.l.b16 %v916
        %v3386 = vunpack.c.h.b16 %v916
        %v3387 = vunpack.c.l.b16 %v917
        %v3388 = vunpack.c.h.b16 %v917
        %v3389 = vunpack.c.l.b16 %v918
        %v3390 = vunpack.c.h.b16 %v918
        %v3391 = vunpack.c.l.b16 %v919
        %v3392 = vunpack.c.h.b16 %v919
        %v3393 = vunpack.c.l.b16 %v920
        %v3394 = vunpack.c.h.b16 %v920
        %v3395 = vunpack.c.l.b16 %v921
        %v3396 = vunpack.c.h.b16 %v921
        %v3397 = vunpack.c.l.b16 %v922
        %v3398 = vunpack.c.h.b16 %v922
        %v3399 = vunpack.c.l.b16 %v923
        %v3400 = vunpack.c.h.b16 %v923
        %v3401 = vunpack.c.l.b16 %v924
        %v3402 = vunpack.c.h.b16 %v924
        %v3403 = vunpack.c.l.b16 %v925
        %v3404 = vunpack.c.h.b16 %v925
        %v3405 = vunpack.c.l.b16 %v926
        %v3406 = vunpack.c.h.b16 %v926
        %v3407 = vunpack.c.l.b16 %v927
        %v3408 = vunpack.c.h.b16 %v927
        %v3409 = vunpack.c.l.b16 %v928
        %v3410 = vunpack.c.h.b16 %v928
        %v3411 = vunpack.c.l.b16 %v929
        %v3412 = vunpack.c.l.b16 %v930
        %v3413 = vunpack.c.h.b16 %v930
        %v3414 = vunpack.c.l.b16 %v931
        %v3415 = vunpack.c.h.b16 %v931
        %v3416 = vunpack.c.l.b16 %v932
        %v3417 = vunpack.c.h.b16 %v932
        %v3418 = vunpack.c.l.b16 %v933
        %v3419 = vunpack.c.h.b16 %v933
        %v3420 = vunpack.c.l.b16 %v934
        %v3421 = vunpack.c.h.b16 %v934
        %v3422 = vunpack.c.l.b16 %v935
        %v3423 = vunpack.c.h.b16 %v935
        %v3424 = vunpack.c.l.b16 %v936
        %v3425 = vunpack.c.h.b16 %v936
        %v3426 = vunpack.c.l.b16 %v937
        %v3427 = vunpack.c.h.b16 %v937
        %v3428 = vunpack.c.l.b16 %v938
        %v3429 = vunpack.c.h.b16 %v938
        %v3430 = vunpack.c.l.b16 %v939
        %v3431 = vunpack.c.h.b16 %v939
        %v3432 = vunpack.c.l.b16 %v940
        %v3433 = vunpack.c.h.b16 %v940
        %v3434 = vunpack.c.l.b16 %v941
        %v3435 = vunpack.c.h.b16 %v941
        %v3436 = vunpack.c.l.b16 %v942
        %v3437 = vunpack.c.h.b16 %v942
        %v3438 = vunpack.c.l.b16 %v943
        %v3439 = vunpack.c.l.b16 %v944
        %v3440 = vunpack.c.h.b16 %v944
        %v3441 = vunpack.c.l.b16 %v945
        %v3442 = vunpack.c.h.b16 %v945
        %v3443 = vunpack.c.l.b16 %v946
        %v3444 = vunpack.c.h.b16 %v946
        %v3445 = vunpack.c.l.b16 %v947
        %v3446 = vunpack.c.h.b16 %v947
        %v3447 = vunpack.c.l.b16 %v948
        %v3448 = vunpack.c.h.b16 %v948
        %v3449 = vunpack.c.l.b16 %v949
        %v3450 = vunpack.c.h.b16 %v949
        %v3451 = vunpack.c.l.b16 %v950
        %v3452 = vunpack.c.h.b16 %v950
        %v3453 = vunpack.c.l.b16 %v951
        %v3454 = vunpack.c.h.b16 %v951
        %v3455 = vunpack.c.l.b16 %v952
        %v3456 = vunpack.c.h.b16 %v952
        %v3457 = vunpack.c.l.b16 %v953
        %v3458 = vunpack.c.h.b16 %v953
        %v3459 = vunpack.c.l.b16 %v954
        %v3460 = vunpack.c.h.b16 %v954
        %v3461 = vunpack.c.l.b16 %v955
        %v3462 = vunpack.c.h.b16 %v955
        %v3463 = vunpack.c.l.b16 %v956
        %v3464 = vunpack.c.h.b16 %v956
        %v3465 = vunpack.c.l.b16 %v957
        %v3466 = vunpack.c.l.b16 %v958
        %v3467 = vunpack.c.h.b16 %v958
        %v3468 = vunpack.c.l.b16 %v959
        %v3469 = vunpack.c.h.b16 %v959
        %v3470 = vunpack.c.l.b16 %v960
        %v3471 = vunpack.c.h.b16 %v960
        %v3472 = vunpack.c.l.b16 %v961
        %v3473 = vunpack.c.h.b16 %v961
        %v3474 = vunpack.c.l.b16 %v962
        %v3475 = vunpack.c.h.b16 %v962
        %v3476 = vunpack.c.l.b16 %v963
        %v3477 = vunpack.c.h.b16 %v963
        %v3478 = vunpack.c.l.b16 %v964
        %v3479 = vunpack.c.h.b16 %v964
        %v3480 = vunpack.c.l.b16 %v965
        %v3481 = vunpack.c.h.b16 %v965
        %v3482 = vunpack.c.l.b16 %v966
        %v3483 = vunpack.c.h.b16 %v966
        %v3484 = vunpack.c.l.b16 %v967
        %v3485 = vunpack.c.h.b16 %v967
        %v3486 = vunpack.c.l.b16 %v968
        %v3487 = vunpack.c.h.b16 %v968
        %v3488 = vunpack.c.l.b16 %v969
        %v3489 = vunpack.c.h.b16 %v969
        %v3490 = vunpack.c.l.b16 %v970
        %v3491 = vunpack.c.h.b16 %v970
        %v3492 = vunpack.c.l.b16 %v971
        %v3493 = vunpack.c.l.b16 %v972
        %v3494 = vunpack.c.h.b16 %v972
        %v3495 = vunpack.c.l.b16 %v973
        %v3496 = vunpack.c.h.b16 %v973
        %v3497 = vunpack.c.l.b16 %v974
        %v3498 = vunpack.c.h.b16 %v974
        %v3499 = vunpack.c.l.b16 %v975
        %v3500 = vunpack.c.h.b16 %v975
        %v3501 = vunpack.c.l.b16 %v976
        %v3502 = vunpack.c.h.b16 %v976
        %v3503 = vunpack.c.l.b16 %v977
        %v3504 = vunpack.c.h.b16 %v977
        %v3505 = vunpack.c.l.b16 %v978
        %v3506 = vunpack.c.h.b16 %v978
        %v3507 = vunpack.c.l.b16 %v979
        %v3508 = vunpack.c.h.b16 %v979
        %v3509 = vunpack.c.l.b16 %v980
        %v3510 = vunpack.c.h.b16 %v980
        %v3511 = vunpack.c.l.b16 %v981
        %v3512 = vunpack.c.h.b16 %v981
        %v3513 = vunpack.c.l.b16 %v982
        %v3514 = vunpack.c.h.b16 %v982
        %v3515 = vunpack.c.l.b16 %v983
        %v3516 = vunpack.c.h.b16 %v983
        %v3517 = vunpack.c.l.b16 %v984
        %v3518 = vunpack.c.h.b16 %v984
        %v3519 = vunpack.c.l.b16 %v985
        %v3520 = vunpack.c.l.b16 %v986
        %v3521 = vunpack.c.h.b16 %v986
        %v3522 = vunpack.c.l.b16 %v987
        %v3523 = vunpack.c.h.b16 %v987
        %v3524 = vunpack.c.l.b16 %v988
        %v3525 = vunpack.c.h.b16 %v988
        %v3526 = vunpack.c.l.b16 %v989
        %v3527 = vunpack.c.h.b16 %v989
        %v3528 = vunpack.c.l.b16 %v990
        %v3529 = vunpack.c.h.b16 %v990
        %v3530 = vunpack.c.l.b16 %v991
        %v3531 = vunpack.c.h.b16 %v991
        %v3532 = vunpack.c.l.b16 %v992
        %v3533 = vunpack.c.h.b16 %v992
        %v3534 = vunpack.c.l.b16 %v993
        %v3535 = vunpack.c.h.b16 %v993
        %v3536 = vunpack.c.l.b16 %v994
        %v3537 = vunpack.c.h.b16 %v994
        %v3538 = vunpack.c.l.b16 %v995
        %v3539 = vunpack.c.h.b16 %v995
        %v3540 = vunpack.c.l.b16 %v996
        %v3541 = vunpack.c.h.b16 %v996
        %v3542 = vunpack.c.l.b16 %v997
        %v3543 = vunpack.c.h.b16 %v997
        %v3544 = vunpack.c.l.b16 %v998
        %v3545 = vunpack.c.h.b16 %v998
        %v3546 = vunpack.c.l.b16 %v999
        %v3547 = vunpack.c.l.b16 %v1000
        %v3548 = vunpack.c.h.b16 %v1000
        %v3549 = vunpack.c.l.b16 %v1001
        %v3550 = vunpack.c.h.b16 %v1001
        %v3551 = vunpack.c.l.b16 %v1002
        %v3552 = vunpack.c.h.b16 %v1002
        %v3553 = vunpack.c.l.b16 %v1003
        %v3554 = vunpack.c.h.b16 %v1003
        %v3555 = vunpack.c.l.b16 %v1004
        %v3556 = vunpack.c.h.b16 %v1004
        %v3557 = vunpack.c.l.b16 %v1005
        %v3558 = vunpack.c.h.b16 %v1005
        %v3559 = vunpack.c.l.b16 %v1006
        %v3560 = vunpack.c.h.b16 %v1006
        %v3561 = vunpack.c.l.b16 %v1007
        %v3562 = vunpack.c.h.b16 %v1007
        %v3563 = vunpack.c.l.b16 %v1008
        %v3564 = vunpack.c.h.b16 %v1008
        %v3565 = vunpack.c.l.b16 %v1009
        %v3566 = vunpack.c.h.b16 %v1009
        %v3567 = vunpack.c.l.b16 %v1010
        %v3568 = vunpack.c.h.b16 %v1010
        %v3569 = vunpack.c.l.b16 %v1011
        %v3570 = vunpack.c.h.b16 %v1011
        %v3571 = vunpack.c.l.b16 %v1012
        %v3572 = vunpack.c.h.b16 %v1012
        %v3573 = vunpack.c.l.b16 %v1013
        %v3574 = vunpack.c.l.b16 %v1014
        %v3575 = vunpack.c.h.b16 %v1014
        %v3576 = vunpack.c.l.b16 %v1015
        %v3577 = vunpack.c.h.b16 %v1015
        %v3578 = vunpack.c.l.b16 %v1016
        %v3579 = vunpack.c.h.b16 %v1016
        %v3580 = vunpack.c.l.b16 %v1017
        %v3581 = vunpack.c.h.b16 %v1017
        %v3582 = vunpack.c.l.b16 %v1018
        %v3583 = vunpack.c.h.b16 %v1018
        %v3584 = vunpack.c.l.b16 %v1019
        %v3585 = vunpack.c.h.b16 %v1019
        %v3586 = vunpack.c.l.b16 %v1020
        %v3587 = vunpack.c.h.b16 %v1020
        %v3588 = vunpack.c.l.b16 %v1021
        %v3589 = vunpack.c.h.b16 %v1021
        %v3590 = vunpack.c.l.b16 %v1022
        %v3591 = vunpack.c.h.b16 %v1022
        %v3592 = vunpack.c.l.b16 %v1023
        %v3593 = vunpack.c.h.b16 %v1023
        %v3594 = vunpack.c.l.b16 %v1024
        %v3595 = vunpack.c.h.b16 %v1024
        %v3596 = vunpack.c.l.b16 %v1025
        %v3597 = vunpack.c.h.b16 %v1025
        %v3598 = vunpack.c.l.b16 %v1026
        %v3599 = vunpack.c.h.b16 %v1026
        %v3600 = vunpack.c.l.b16 %v1027
        %v3601 = vunpack.c.l.b16 %v1028
        %v3602 = vunpack.c.h.b16 %v1028
        %v3603 = vunpack.c.l.b16 %v1029
        %v3604 = vunpack.c.h.b16 %v1029
        %v3605 = vunpack.c.l.b16 %v1030
        %v3606 = vunpack.c.h.b16 %v1030
        %v3607 = vunpack.c.l.b16 %v1031
        %v3608 = vunpack.c.h.b16 %v1031
        %v3609 = vunpack.c.l.b16 %v1032
        %v3610 = vunpack.c.h.b16 %v1032
        %v3611 = vunpack.c.l.b16 %v1033
        %v3612 = vunpack.c.h.b16 %v1033
        %v3613 = vunpack.c.l.b16 %v1034
        %v3614 = vunpack.c.h.b16 %v1034
        %v3615 = vunpack.c.l.b16 %v1035
        %v3616 = vunpack.c.h.b16 %v1035
        %v3617 = vunpack.c.l.b16 %v1036
        %v3618 = vunpack.c.h.b16 %v1036
        %v3619 = vunpack.c.l.b16 %v1037
        %v3620 = vunpack.c.h.b16 %v1037
        %v3621 = vunpack.c.l.b16 %v1038
        %v3622 = vunpack.c.h.b16 %v1038
        %v3623 = vunpack.c.l.b16 %v1039
        %v3624 = vunpack.c.h.b16 %v1039
        %v3625 = vunpack.c.l.b16 %v1040
        %v3626 = vunpack.c.h.b16 %v1040
        %v3627 = vunpack.c.l.b16 %v1041
        %v3628 = vunpack.c.l.b16 %v1042
        %v3629 = vunpack.c.h.b16 %v1042
        %v3630 = vunpack.c.l.b16 %v1043
        %v3631 = vunpack.c.h.b16 %v1043
        %v3632 = vunpack.c.l.b16 %v1044
        %v3633 = vunpack.c.h.b16 %v1044
        %v3634 = vunpack.c.l.b16 %v1045
        %v3635 = vunpack.c.h.b16 %v1045
        %v3636 = vunpack.c.l.b16 %v1046
        %v3637 = vunpack.c.h.b16 %v1046
        %v3638 = vunpack.c.l.b16 %v1047
        %v3639 = vunpack.c.h.b16 %v1047
        %v3640 = vunpack.c.l.b16 %v1048
        %v3641 = vunpack.c.h.b16 %v1048
        %v3642 = vunpack.c.l.b16 %v1049
        %v3643 = vunpack.c.h.b16 %v1049
        %v3644 = vunpack.c.l.b16 %v1050
        %v3645 = vunpack.c.h.b16 %v1050
        %v3646 = vunpack.c.l.b16 %v1051
        %v3647 = vunpack.c.h.b16 %v1051
        %v3648 = vunpack.c.l.b16 %v1052
        %v3649 = vunpack.c.h.b16 %v1052
        %v3650 = vunpack.c.l.b16 %v1053
        %v3651 = vunpack.c.h.b16 %v1053
        %v3652 = vunpack.c.l.b16 %v1054
        %v3653 = vunpack.c.h.b16 %v1054
        %v3654 = vunpack.c.l.b16 %v1055
        %v3655 = vunpack.c.l.b16 %v1056
        %v3656 = vunpack.c.h.b16 %v1056
        %v3657 = vunpack.c.l.b16 %v1057
        %v3658 = vunpack.c.h.b16 %v1057
        %v3659 = vunpack.c.l.b16 %v1058
        %v3660 = vunpack.c.h.b16 %v1058
        %v3661 = vunpack.c.l.b16 %v1059
        %v3662 = vunpack.c.h.b16 %v1059
        %v3663 = vunpack.c.l.b16 %v1060
        %v3664 = vunpack.c.h.b16 %v1060
        %v3665 = vunpack.c.l.b16 %v1061
        %v3666 = vunpack.c.h.b16 %v1061
        %v3667 = vunpack.c.l.b16 %v1062
        %v3668 = vunpack.c.h.b16 %v1062
        %v3669 = vunpack.c.l.b16 %v1063
        %v3670 = vunpack.c.h.b16 %v1063
        %v3671 = vunpack.c.l.b16 %v1064
        %v3672 = vunpack.c.h.b16 %v1064
        %v3673 = vunpack.c.l.b16 %v1065
        %v3674 = vunpack.c.h.b16 %v1065
        %v3675 = vunpack.c.l.b16 %v1066
        %v3676 = vunpack.c.h.b16 %v1066
        %v3677 = vunpack.c.l.b16 %v1067
        %v3678 = vunpack.c.h.b16 %v1067
        %v3679 = vunpack.c.l.b16 %v1068
        %v3680 = vunpack.c.h.b16 %v1068
        %v3681 = vunpack.c.l.b16 %v1069
        %v3682 = vunpack.c.l.b16 %v1070
        %v3683 = vunpack.c.h.b16 %v1070
        %v3684 = vunpack.c.l.b16 %v1071
        %v3685 = vunpack.c.h.b16 %v1071
        %v3686 = vunpack.c.l.b16 %v1072
        %v3687 = vunpack.c.h.b16 %v1072
        %v3688 = vunpack.c.l.b16 %v1073
        %v3689 = vunpack.c.h.b16 %v1073
        %v3690 = vunpack.c.l.b16 %v1074
        %v3691 = vunpack.c.h.b16 %v1074
        %v3692 = vunpack.c.l.b16 %v1075
        %v3693 = vunpack.c.h.b16 %v1075
        %v3694 = vunpack.c.l.b16 %v1076
        %v3695 = vunpack.c.h.b16 %v1076
        %v3696 = vunpack.c.l.b16 %v1077
        %v3697 = vunpack.c.h.b16 %v1077
        %v3698 = vunpack.c.l.b16 %v1078
        %v3699 = vunpack.c.h.b16 %v1078
        %v3700 = vunpack.c.l.b16 %v1079
        %v3701 = vunpack.c.h.b16 %v1079
        %v3702 = vunpack.c.l.b16 %v1080
        %v3703 = vunpack.c.h.b16 %v1080
        %v3704 = vunpack.c.l.b16 %v1081
        %v3705 = vunpack.c.h.b16 %v1081
        %v3706 = vunpack.c.l.b16 %v1082
        %v3707 = vunpack.c.h.b16 %v1082
        %v3708 = vunpack.c.l.b16 %v1083
        %v3709 = vunpack.c.l.b16 %v1084
        %v3710 = vunpack.c.h.b16 %v1084
        %v3711 = vunpack.c.l.b16 %v1085
        %v3712 = vunpack.c.h.b16 %v1085
        %v3713 = vunpack.c.l.b16 %v1086
        %v3714 = vunpack.c.h.b16 %v1086
        %v3715 = vunpack.c.l.b16 %v1087
        %v3716 = vunpack.c.h.b16 %v1087
        %v3717 = vunpack.c.l.b16 %v1088
        %v3718 = vunpack.c.h.b16 %v1088
        %v3719 = vunpack.c.l.b16 %v1089
        %v3720 = vunpack.c.h.b16 %v1089
        %v3721 = vunpack.c.l.b16 %v1090
        %v3722 = vunpack.c.h.b16 %v1090
        %v3723 = vunpack.c.l.b16 %v1091
        %v3724 = vunpack.c.h.b16 %v1091
        %v3725 = vunpack.c.l.b16 %v1092
        %v3726 = vunpack.c.h.b16 %v1092
        %v3727 = vunpack.c.l.b16 %v1093
        %v3728 = vunpack.c.h.b16 %v1093
        %v3729 = vunpack.c.l.b16 %v1094
        %v3730 = vunpack.c.h.b16 %v1094
        %v3731 = vunpack.c.l.b16 %v1095
        %v3732 = vunpack.c.h.b16 %v1095
        %v3733 = vunpack.c.l.b16 %v1096
        %v3734 = vunpack.c.h.b16 %v1096
        %v3735 = vunpack.c.l.b16 %v1097
        %v3736 = vunpack.c.l.b16 %v1098
        %v3737 = vunpack.c.h.b16 %v1098
        %v3738 = vunpack.c.l.b16 %v1099
        %v3739 = vunpack.c.h.b16 %v1099
        %v3740 = vunpack.c.l.b16 %v1100
        %v3741 = vunpack.c.h.b16 %v1100
        %v3742 = vunpack.c.l.b16 %v1101
        %v3743 = vunpack.c.h.b16 %v1101
        %v3744 = vunpack.c.l.b16 %v1102
        %v3745 = vunpack.c.h.b16 %v1102
        %v3746 = vunpack.c.l.b16 %v1103
        %v3747 = vunpack.c.h.b16 %v1103
        %v3748 = vunpack.c.l.b16 %v1104
        %v3749 = vunpack.c.h.b16 %v1104
        %v3750 = vunpack.c.l.b16 %v1105
        %v3751 = vunpack.c.h.b16 %v1105
        %v3752 = vunpack.c.l.b16 %v1106
        %v3753 = vunpack.c.h.b16 %v1106
        %v3754 = vunpack.c.l.b16 %v1107
        %v3755 = vunpack.c.h.b16 %v1107
        %v3756 = vunpack.c.l.b16 %v1108
        %v3757 = vunpack.c.h.b16 %v1108
        %v3758 = vunpack.c.l.b16 %v1109
        %v3759 = vunpack.c.h.b16 %v1109
        %v3760 = vunpack.c.l.b16 %v1110
        %v3761 = vunpack.c.h.b16 %v1110
        %v3762 = vunpack.c.l.b16 %v1111
        %v3763 = vunpack.c.l.b16 %v1112
        %v3764 = vunpack.c.h.b16 %v1112
        %v3765 = vunpack.c.l.b16 %v1113
        %v3766 = vunpack.c.h.b16 %v1113
        %v3767 = vunpack.c.l.b16 %v1114
        %v3768 = vunpack.c.h.b16 %v1114
        %v3769 = vunpack.c.l.b16 %v1115
        %v3770 = vunpack.c.h.b16 %v1115
        %v3771 = vunpack.c.l.b16 %v1116
        %v3772 = vunpack.c.h.b16 %v1116
        %v3773 = vunpack.c.l.b16 %v1117
        %v3774 = vunpack.c.h.b16 %v1117
        %v3775 = vunpack.c.l.b16 %v1118
        %v3776 = vunpack.c.h.b16 %v1118
        %v3777 = vunpack.c.l.b16 %v1119
        %v3778 = vunpack.c.h.b16 %v1119
        %v3779 = vunpack.c.l.b16 %v1120
        %v3780 = vunpack.c.h.b16 %v1120
        %v3781 = vunpack.c.l.b16 %v1121
        %v3782 = vunpack.c.h.b16 %v1121
        %v3783 = vunpack.c.l.b16 %v1122
        %v3784 = vunpack.c.h.b16 %v1122
        %v3785 = vunpack.c.l.b16 %v1123
        %v3786 = vunpack.c.h.b16 %v1123
        %v3787 = vunpack.c.l.b16 %v1124
        %v3788 = vunpack.c.h.b16 %v1124
        %v3789 = vunpack.c.l.b16 %v1125
        %v3790 = vunpack.c.l.b16 %v1126
        %v3791 = vunpack.c.h.b16 %v1126
        %v3792 = vunpack.c.l.b16 %v1127
        %v3793 = vunpack.c.h.b16 %v1127
        %v3794 = vunpack.c.l.b16 %v1128
        %v3795 = vunpack.c.h.b16 %v1128
        %v3796 = vunpack.c.l.b16 %v1129
        %v3797 = vunpack.c.h.b16 %v1129
        %v3798 = vunpack.c.l.b16 %v1130
        %v3799 = vunpack.c.h.b16 %v1130
        %v3800 = vunpack.c.l.b16 %v1131
        %v3801 = vunpack.c.h.b16 %v1131
        %v3802 = vunpack.c.l.b16 %v1132
        %v3803 = vunpack.c.h.b16 %v1132
        %v3804 = vunpack.c.l.b16 %v1133
        %v3805 = vunpack.c.h.b16 %v1133
        %v3806 = vunpack.c.l.b16 %v1134
        %v3807 = vunpack.c.h.b16 %v1134
        %v3808 = vunpack.c.l.b16 %v1135
        %v3809 = vunpack.c.h.b16 %v1135
        %v3810 = vunpack.c.l.b16 %v1136
        %v3811 = vunpack.c.h.b16 %v1136
        %v3812 = vunpack.c.l.b16 %v1137
        %v3813 = vunpack.c.h.b16 %v1137
        %v3814 = vunpack.c.l.b16 %v1138
        %v3815 = vunpack.c.h.b16 %v1138
        %v3816 = vunpack.c.l.b16 %v1139
        %v3817 = vunpack.c.l.b16 %v1140
        %v3818 = vunpack.c.h.b16 %v1140
        %v3819 = vunpack.c.l.b16 %v1141
        %v3820 = vunpack.c.h.b16 %v1141
        %v3821 = vunpack.c.l.b16 %v1142
        %v3822 = vunpack.c.h.b16 %v1142
        %v3823 = vunpack.c.l.b16 %v1143
        %v3824 = vunpack.c.h.b16 %v1143
        %v3825 = vunpack.c.l.b16 %v1144
        %v3826 = vunpack.c.h.b16 %v1144
        %v3827 = vunpack.c.l.b16 %v1145
        %v3828 = vunpack.c.h.b16 %v1145
        %v3829 = vunpack.c.l.b16 %v1146
        %v3830 = vunpack.c.h.b16 %v1146
        %v3831 = vunpack.c.l.b16 %v1147
        %v3832 = vunpack.c.h.b16 %v1147
        %v3833 = vunpack.c.l.b16 %v1148
        %v3834 = vunpack.c.h.b16 %v1148
        %v3835 = vunpack.c.l.b16 %v1149
        %v3836 = vunpack.c.h.b16 %v1149
        %v3837 = vunpack.c.l.b16 %v1150
        %v3838 = vunpack.c.h.b16 %v1150
        %v3839 = vunpack.c.l.b16 %v1151
        %v3840 = vunpack.c.h.b16 %v1151
        %v3841 = vunpack.c.l.b16 %v1152
        %v3842 = vunpack.c.h.b16 %v1152
        %v3843 = vunpack.c.l.b16 %v1153
        %v3844 = vunpack.c.l.b16 %v1154
        %v3845 = vunpack.c.h.b16 %v1154
        %v3846 = vunpack.c.l.b16 %v1155
        %v3847 = vunpack.c.h.b16 %v1155
        %v3848 = vunpack.c.l.b16 %v1156
        %v3849 = vunpack.c.h.b16 %v1156
        %v3850 = vunpack.c.l.b16 %v1157
        %v3851 = vunpack.c.h.b16 %v1157
        %v3852 = vunpack.c.l.b16 %v1158
        %v3853 = vunpack.c.h.b16 %v1158
        %v3854 = vunpack.c.l.b16 %v1159
        %v3855 = vunpack.c.h.b16 %v1159
        %v3856 = vunpack.c.l.b16 %v1160
        %v3857 = vunpack.c.h.b16 %v1160
        %v3858 = vunpack.c.l.b16 %v1161
        %v3859 = vunpack.c.h.b16 %v1161
        %v3860 = vunpack.c.l.b16 %v1162
        %v3861 = vunpack.c.h.b16 %v1162
        %v3862 = vunpack.c.l.b16 %v1163
        %v3863 = vunpack.c.h.b16 %v1163
        %v3864 = vunpack.c.l.b16 %v1164
        %v3865 = vunpack.c.h.b16 %v1164
        %v3866 = vunpack.c.l.b16 %v1165
        %v3867 = vunpack.c.h.b16 %v1165
        %v3868 = vunpack.c.l.b16 %v1166
        %v3869 = vunpack.c.h.b16 %v1166
        %v3870 = vunpack.c.l.b16 %v1167
        %v3871 = vunpack.c.l.b16 %v1168
        %v3872 = vunpack.c.h.b16 %v1168
        %v3873 = vunpack.c.l.b16 %v1169
        %v3874 = vunpack.c.h.b16 %v1169
        %v3875 = vunpack.c.l.b16 %v1170
        %v3876 = vunpack.c.h.b16 %v1170
        %v3877 = vunpack.c.l.b16 %v1171
        %v3878 = vunpack.c.h.b16 %v1171
        %v3879 = vunpack.c.l.b16 %v1172
        %v3880 = vunpack.c.h.b16 %v1172
        %v3881 = vunpack.c.l.b16 %v1173
        %v3882 = vunpack.c.h.b16 %v1173
        %v3883 = vunpack.c.l.b16 %v1174
        %v3884 = vunpack.c.h.b16 %v1174
        %v3885 = vunpack.c.l.b16 %v1175
        %v3886 = vunpack.c.h.b16 %v1175
        %v3887 = vunpack.c.l.b16 %v1176
        %v3888 = vunpack.c.h.b16 %v1176
        %v3889 = vunpack.c.l.b16 %v1177
        %v3890 = vunpack.c.h.b16 %v1177
        %v3891 = vunpack.c.l.b16 %v1178
        %v3892 = vunpack.c.h.b16 %v1178
        %v3893 = vunpack.c.l.b16 %v1179
        %v3894 = vunpack.c.h.b16 %v1179
        %v3895 = vunpack.c.l.b16 %v1180
        %v3896 = vunpack.c.h.b16 %v1180
        %v3897 = vunpack.c.l.b16 %v1181
        %v3898 = vunpack.c.l.b16 %v1182
        %v3899 = vunpack.c.h.b16 %v1182
        %v3900 = vunpack.c.l.b16 %v1183
        %v3901 = vunpack.c.h.b16 %v1183
        %v3902 = vunpack.c.l.b16 %v1184
        %v3903 = vunpack.c.h.b16 %v1184
        %v3904 = vunpack.c.l.b16 %v1185
        %v3905 = vunpack.c.h.b16 %v1185
        %v3906 = vunpack.c.l.b16 %v1186
        %v3907 = vunpack.c.h.b16 %v1186
        %v3908 = vunpack.c.l.b16 %v1187
        %v3909 = vunpack.c.h.b16 %v1187
        %v3910 = vunpack.c.l.b16 %v1188
        %v3911 = vunpack.c.h.b16 %v1188
        %v3912 = vunpack.c.l.b16 %v1189
        %v3913 = vunpack.c.h.b16 %v1189
        %v3914 = vunpack.c.l.b16 %v1190
        %v3915 = vunpack.c.h.b16 %v1190
        %v3916 = vunpack.c.l.b16 %v1191
        %v3917 = vunpack.c.h.b16 %v1191
        %v3918 = vunpack.c.l.b16 %v1192
        %v3919 = vunpack.c.h.b16 %v1192
        %v3920 = vunpack.c.l.b16 %v1193
        %v3921 = vunpack.c.h.b16 %v1193
        %v3922 = vunpack.c.l.b16 %v1194
        %v3923 = vunpack.c.h.b16 %v1194
        %v3924 = vunpack.c.l.b16 %v1195
        %v3925 = vunpack.c.l.b16 %v1196
        %v3926 = vunpack.c.h.b16 %v1196
        %v3927 = vunpack.c.l.b16 %v1197
        %v3928 = vunpack.c.h.b16 %v1197
        %v3929 = vunpack.c.l.b16 %v1198
        %v3930 = vunpack.c.h.b16 %v1198
        %v3931 = vunpack.c.l.b16 %v1199
        %v3932 = vunpack.c.h.b16 %v1199
        %v3933 = vunpack.c.l.b16 %v1200
        %v3934 = vunpack.c.h.b16 %v1200
        %v3935 = vunpack.c.l.b16 %v1201
        %v3936 = vunpack.c.h.b16 %v1201
        %v3937 = vunpack.c.l.b16 %v1202
        %v3938 = vunpack.c.h.b16 %v1202
        %v3939 = vunpack.c.l.b16 %v1203
        %v3940 = vunpack.c.h.b16 %v1203
        %v3941 = vunpack.c.l.b16 %v1204
        %v3942 = vunpack.c.h.b16 %v1204
        %v3943 = vunpack.c.l.b16 %v1205
        %v3944 = vunpack.c.h.b16 %v1205
        %v3945 = vunpack.c.l.b16 %v1206
        %v3946 = vunpack.c.h.b16 %v1206
        %v3947 = vunpack.c.l.b16 %v1207
        %v3948 = vunpack.c.h.b16 %v1207
        %v3949 = vunpack.c.l.b16 %v1208
        %v3950 = vunpack.c.h.b16 %v1208
        %v3951 = vunpack.c.l.b16 %v1209
        %v3952 = vunpack.c.l.b16 %v1210
        %v3953 = vunpack.c.h.b16 %v1210
        %v3954 = vunpack.c.l.b16 %v1211
        %v3955 = vunpack.c.h.b16 %v1211
        %v3956 = vunpack.c.l.b16 %v1212
        %v3957 = vunpack.c.h.b16 %v1212
        %v3958 = vunpack.c.l.b16 %v1213
        %v3959 = vunpack.c.h.b16 %v1213
        %v3960 = vunpack.c.l.b16 %v1214
        %v3961 = vunpack.c.h.b16 %v1214
        %v3962 = vunpack.c.l.b16 %v1215
        %v3963 = vunpack.c.h.b16 %v1215
        %v3964 = vunpack.c.l.b16 %v1216
        %v3965 = vunpack.c.h.b16 %v1216
        %v3966 = vunpack.c.l.b16 %v1217
        %v3967 = vunpack.c.h.b16 %v1217
        %v3968 = vunpack.c.l.b16 %v1218
        %v3969 = vunpack.c.h.b16 %v1218
        %v3970 = vunpack.c.l.b16 %v1219
        %v3971 = vunpack.c.h.b16 %v1219
        %v3972 = vunpack.c.l.b16 %v1220
        %v3973 = vunpack.c.h.b16 %v1220
        %v3974 = vunpack.c.l.b16 %v1221
        %v3975 = vunpack.c.h.b16 %v1221
        %v3976 = vunpack.c.l.b16 %v1222
        %v3977 = vunpack.c.h.b16 %v1222
        %v3978 = vunpack.c.l.b16 %v1223
        %v3979 = vunpack.c.l.b16 %v1224
        %v3980 = vunpack.c.h.b16 %v1224
        %v3981 = vunpack.c.l.b16 %v1225
        %v3982 = vunpack.c.h.b16 %v1225
        %v3983 = vunpack.c.l.b16 %v1226
        %v3984 = vunpack.c.h.b16 %v1226
        %v3985 = vunpack.c.l.b16 %v1227
        %v3986 = vunpack.c.h.b16 %v1227
        %v3987 = vunpack.c.l.b16 %v1228
        %v3988 = vunpack.c.h.b16 %v1228
        %v3989 = vunpack.c.l.b16 %v1229
        %v3990 = vunpack.c.h.b16 %v1229
        %v3991 = vunpack.c.l.b16 %v1230
        %v3992 = vunpack.c.h.b16 %v1230
        %v3993 = vunpack.c.l.b16 %v1231
        %v3994 = vunpack.c.h.b16 %v1231
        %v3995 = vunpack.c.l.b16 %v1232
        %v3996 = vunpack.c.h.b16 %v1232
        %v3997 = vunpack.c.l.b16 %v1233
        %v3998 = vunpack.c.h.b16 %v1233
        %v3999 = vunpack.c.l.b16 %v1234
        %v4000 = vunpack.c.h.b16 %v1234
        %v4001 = vunpack.c.l.b16 %v1235
        %v4002 = vunpack.c.h.b16 %v1235
        %v4003 = vunpack.c.l.b16 %v1236
        %v4004 = vunpack.c.h.b16 %v1236
        %v4005 = vunpack.c.l.b16 %v1237
        %v4006 = vpack.c.b16 %v2251, %v2224
        %v4007 = vpack.c.b16 %v2252, %v2225
        %v4008 = vpack.c.b16 %v2253, %v2226
        %v4009 = vpack.c.b16 %v2254, %v2227
        %v4010 = vpack.c.b16 %v2255, %v2228
        %v4011 = vpack.c.b16 %v2256, %v2229
        %v4012 = vpack.c.b16 %v2257, %v2230
        %v4013 = vpack.c.b16 %v2258, %v2231
        %v4014 = vpack.c.b16 %v2259, %v2232
        %v4015 = vpack.c.b16 %v2260, %v2233
        %v4016 = vpack.c.b16 %v2261, %v2234
        %v4017 = vpack.c.b16 %v2262, %v2235
        %v4018 = vpack.c.b16 %v2263, %v2236
        %v4019 = vpack.c.b16 %v2264, %v2237
        %v4020 = vpack.c.b16 %v2265, %v2238
        %v4021 = vpack.c.b16 %v2266, %v2239
        %v4022 = vpack.c.b16 %v2267, %v2240
        %v4023 = vpack.c.b16 %v2268, %v2241
        %v4024 = vpack.c.b16 %v2269, %v2242
        %v4025 = vpack.c.b16 %v2270, %v2243
        %v4026 = vpack.c.b16 %v2271, %v2244
        %v4027 = vpack.c.b16 %v2272, %v2245
        %v4028 = vpack.c.b16 %v2273, %v2246
        %v4029 = vpack.c.b16 %v2274, %v2247
        %v4030 = vpack.c.b16 %v2275, %v2248
        %v4031 = vpack.c.b16 %v2276, %v2249
        %v4032 = vpack.c.b16 %v2277, %v2250
        %v4033 = vpack.c.b16 %v2305, %v2278
        %v4034 = vpack.c.b16 %v2306, %v2279
        %v4035 = vpack.c.b16 %v2307, %v2280
        %v4036 = vpack.c.b16 %v2308, %v2281
        %v4037 = vpack.c.b16 %v2309, %v2282
        %v4038 = vpack.c.b16 %v2310, %v2283
        %v4039 = vpack.c.b16 %v2311, %v2284
        %v4040 = vpack.c.b16 %v2312, %v2285
        %v4041 = vpack.c.b16 %v2313, %v2286
        %v4042 = vpack.c.b16 %v2314, %v2287
        %v4043 = vpack.c.b16 %v2315, %v2288
        %v4044 = vpack.c.b16 %v2316, %v2289
        %v4045 = vpack.c.b16 %v2317, %v2290
        %v4046 = vpack.c.b16 %v2318, %v2291
        %v4047 = vpack.c.b16 %v2319, %v2292
        %v4048 = vpack.c.b16 %v2320, %v2293
        %v4049 = vpack.c.b16 %v2321, %v2294
        %v4050 = vpack.c.b16 %v2322, %v2295
        %v4051 = vpack.c.b16 %v2323, %v2296
        %v4052 = vpack.c.b16 %v2324, %v2297
        %v4053 = vpack.c.b16 %v2325, %v2298
        %v4054 = vpack.c.b16 %v2326, %v2299
        %v4055 = vpack.c.b16 %v2327, %v2300
        %v4056 = vpack.c.b16 %v2328, %v2301
        %v4057 = vpack.c.b16 %v2329, %v2302
        %v4058 = vpack.c.b16 %v2330, %v2303
        %v4059 = vpack.c.b16 %v2331, %v2304
        %v4060 = vpack.c.b16 %v2359, %v2332
        %v4061 = vpack.c.b16 %v2360, %v2333
        %v4062 = vpack.c.b16 %v2361, %v2334
        %v4063 = vpack.c.b16 %v2362, %v2335
        %v4064 = vpack.c.b16 %v2363, %v2336
        %v4065 = vpack.c.b16 %v2364, %v2337
        %v4066 = vpack.c.b16 %v2365, %v2338
        %v4067 = vpack.c.b16 %v2366, %v2339
        %v4068 = vpack.c.b16 %v2367, %v2340
        %v4069 = vpack.c.b16 %v2368, %v2341
        %v4070 = vpack.c.b16 %v2369, %v2342
        %v4071 = vpack.c.b16 %v2370, %v2343
        %v4072 = vpack.c.b16 %v2371, %v2344
        %v4073 = vpack.c.b16 %v2372, %v2345
        %v4074 = vpack.c.b16 %v2373, %v2346
        %v4075 = vpack.c.b16 %v2374, %v2347
        %v4076 = vpack.c.b16 %v2375, %v2348
        %v4077 = vpack.c.b16 %v2376, %v2349
        %v4078 = vpack.c.b16 %v2377, %v2350
        %v4079 = vpack.c.b16 %v2378, %v2351
        %v4080 = vpack.c.b16 %v2379, %v2352
        %v4081 = vpack.c.b16 %v2380, %v2353
        %v4082 = vpack.c.b16 %v2381, %v2354
        %v4083 = vpack.c.b16 %v2382, %v2355
        %v4084 = vpack.c.b16 %v2383, %v2356
        %v4085 = vpack.c.b16 %v2384, %v2357
        %v4086 = vpack.c.b16 %v2385, %v2358
        %v4087 = vpack.c.b16 %v2413, %v2386
        %v4088 = vpack.c.b16 %v2414, %v2387
        %v4089 = vpack.c.b16 %v2415, %v2388
        %v4090 = vpack.c.b16 %v2416, %v2389
        %v4091 = vpack.c.b16 %v2417, %v2390
        %v4092 = vpack.c.b16 %v2418, %v2391
        %v4093 = vpack.c.b16 %v2419, %v2392
        %v4094 = vpack.c.b16 %v2420, %v2393
        %v4095 = vpack.c.b16 %v2421, %v2394
        %v4096 = vpack.c.b16 %v2422, %v2395
        %v4097 = vpack.c.b16 %v2423, %v2396
        %v4098 = vpack.c.b16 %v2424, %v2397
        %v4099 = vpack.c.b16 %v2425, %v2398
        %v4100 = vpack.c.b16 %v2426, %v2399
        %v4101 = vpack.c.b16 %v2427, %v2400
        %v4102 = vpack.c.b16 %v2428, %v2401
        %v4103 = vpack.c.b16 %v2429, %v2402
        %v4104 = vpack.c.b16 %v2430, %v2403
        %v4105 = vpack.c.b16 %v2431, %v2404
        %v4106 = vpack.c.b16 %v2432, %v2405
        %v4107 = vpack.c.b16 %v2433, %v2406
        %v4108 = vpack.c.b16 %v2434, %v2407
        %v4109 = vpack.c.b16 %v2435, %v2408
        %v4110 = vpack.c.b16 %v2436, %v2409
        %v4111 = vpack.c.b16 %v2437, %v2410
        %v4112 = vpack.c.b16 %v2438, %v2411
        %v4113 = vpack.c.b16 %v2439, %v2412
        %v4114 = vpack.c.b16 %v2467, %v2440
        %v4115 = vpack.c.b16 %v2468, %v2441
        %v4116 = vpack.c.b16 %v2469, %v2442
        %v4117 = vpack.c.b16 %v2470, %v2443
        %v4118 = vpack.c.b16 %v2471, %v2444
        %v4119 = vpack.c.b16 %v2472, %v2445
        %v4120 = vpack.c.b16 %v2473, %v2446
        %v4121 = vpack.c.b16 %v2474, %v2447
        %v4122 = vpack.c.b16 %v2475, %v2448
        %v4123 = vpack.c.b16 %v2476, %v2449
        %v4124 = vpack.c.b16 %v2477, %v2450
        %v4125 = vpack.c.b16 %v2478, %v2451
        %v4126 = vpack.c.b16 %v2479, %v2452
        %v4127 = vpack.c.b16 %v2480, %v2453
        %v4128 = vpack.c.b16 %v2481, %v2454
        %v4129 = vpack.c.b16 %v2482, %v2455
        %v4130 = vpack.c.b16 %v2483, %v2456
        %v4131 = vpack.c.b16 %v2484, %v2457
        %v4132 = vpack.c.b16 %v2485, %v2458
        %v4133 = vpack.c.b16 %v2486, %v2459
        %v4134 = vpack.c.b16 %v2487, %v2460
        %v4135 = vpack.c.b16 %v2488, %v2461
        %v4136 = vpack.c.b16 %v2489, %v2462
        %v4137 = vpack.c.b16 %v2490, %v2463
        %v4138 = vpack.c.b16 %v2491, %v2464
        %v4139 = vpack.c.b16 %v2492, %v2465
        %v4140 = vpack.c.b16 %v2493, %v2466
        %v4141 = vpack.c.b16 %v2521, %v2494
        %v4142 = vpack.c.b16 %v2522, %v2495
        %v4143 = vpack.c.b16 %v2523, %v2496
        %v4144 = vpack.c.b16 %v2524, %v2497
        %v4145 = vpack.c.b16 %v2525, %v2498
        %v4146 = vpack.c.b16 %v2526, %v2499
        %v4147 = vpack.c.b16 %v2527, %v2500
        %v4148 = vpack.c.b16 %v2528, %v2501
        %v4149 = vpack.c.b16 %v2529, %v2502
        %v4150 = vpack.c.b16 %v2530, %v2503
        %v4151 = vpack.c.b16 %v2531, %v2504
        %v4152 = vpack.c.b16 %v2532, %v2505
        %v4153 = vpack.c.b16 %v2533, %v2506
        %v4154 = vpack.c.b16 %v2534, %v2507
        %v4155 = vpack.c.b16 %v2535, %v2508
        %v4156 = vpack.c.b16 %v2536, %v2509
        %v4157 = vpack.c.b16 %v2537, %v2510
        %v4158 = vpack.c.b16 %v2538, %v2511
        %v4159 = vpack.c.b16 %v2539, %v2512
        %v4160 = vpack.c.b16 %v2540, %v2513
        %v4161 = vpack.c.b16 %v2541, %v2514
        %v4162 = vpack.c.b16 %v2542, %v2515
        %v4163 = vpack.c.b16 %v2543, %v2516
        %v4164 = vpack.c.b16 %v2544, %v2517
        %v4165 = vpack.c.b16 %v2545, %v2518
        %v4166 = vpack.c.b16 %v2546, %v2519
        %v4167 = vpack.c.b16 %v2547, %v2520
        %v4168 = vpack.c.b16 %v2575, %v2548
        %v4169 = vpack.c.b16 %v2576, %v2549
        %v4170 = vpack.c.b16 %v2577, %v2550
        %v4171 = vpack.c.b16 %v2578, %v2551
        %v4172 = vpack.c.b16 %v2579, %v2552
        %v4173 = vpack.c.b16 %v2580, %v2553
        %v4174 = vpack.c.b16 %v2581, %v2554
        %v4175 = vpack.c.b16 %v2582, %v2555
        %v4176 = vpack.c.b16 %v2583, %v2556
        %v4177 = vpack.c.b16 %v2584, %v2557
        %v4178 = vpack.c.b16 %v2585, %v2558
        %v4179 = vpack.c.b16 %v2586, %v2559
        %v4180 = vpack.c.b16 %v2587, %v2560
        %v4181 = vpack.c.b16 %v2588, %v2561
        %v4182 = vpack.c.b16 %v2589, %v2562
        %v4183 = vpack.c.b16 %v2590, %v2563
        %v4184 = vpack.c.b16 %v2591, %v2564
        %v4185 = vpack.c.b16 %v2592, %v2565
        %v4186 = vpack.c.b16 %v2593, %v2566
        %v4187 = vpack.c.b16 %v2594, %v2567
        %v4188 = vpack.c.b16 %v2595, %v2568
        %v4189 = vpack.c.b16 %v2596, %v2569
        %v4190 = vpack.c.b16 %v2597, %v2570
        %v4191 = vpack.c.b16 %v2598, %v2571
        %v4192 = vpack.c.b16 %v2599, %v2572
        %v4193 = vpack.c.b16 %v2600, %v2573
        %v4194 = vpack.c.b16 %v2601, %v2574
        %v4195 = vpack.c.b16 %v2629, %v2602
        %v4196 = vpack.c.b16 %v2630, %v2603
        %v4197 = vpack.c.b16 %v2631, %v2604
        %v4198 = vpack.c.b16 %v2632, %v2605
        %v4199 = vpack.c.b16 %v2633, %v2606
        %v4200 = vpack.c.b16 %v2634, %v2607
        %v4201 = vpack.c.b16 %v2635, %v2608
        %v4202 = vpack.c.b16 %v2636, %v2609
        %v4203 = vpack.c.b16 %v2637, %v2610
        %v4204 = vpack.c.b16 %v2638, %v2611
        %v4205 = vpack.c.b16 %v2639, %v2612
        %v4206 = vpack.c.b16 %v2640, %v2613
        %v4207 = vpack.c.b16 %v2641, %v2614
        %v4208 = vpack.c.b16 %v2642, %v2615
        %v4209 = vpack.c.b16 %v2643, %v2616
        %v4210 = vpack.c.b16 %v2644, %v2617
        %v4211 = vpack.c.b16 %v2645, %v2618
        %v4212 = vpack.c.b16 %v2646, %v2619
        %v4213 = vpack.c.b16 %v2647, %v2620
        %v4214 = vpack.c.b16 %v2648, %v2621
        %v4215 = vpack.c.b16 %v2649, %v2622
        %v4216 = vpack.c.b16 %v2650, %v2623
        %v4217 = vpack.c.b16 %v2651, %v2624
        %v4218 = vpack.c.b16 %v2652, %v2625
        %v4219 = vpack.c.b16 %v2653, %v2626
        %v4220 = vpack.c.b16 %v2654, %v2627
        %v4221 = vpack.c.b16 %v2655, %v2628
        %v4222 = vpack.c.b16 %v2683, %v2656
        %v4223 = vpack.c.b16 %v2684, %v2657
        %v4224 = vpack.c.b16 %v2685, %v2658
        %v4225 = vpack.c.b16 %v2686, %v2659
        %v4226 = vpack.c.b16 %v2687, %v2660
        %v4227 = vpack.c.b16 %v2688, %v2661
        %v4228 = vpack.c.b16 %v2689, %v2662
        %v4229 = vpack.c.b16 %v2690, %v2663
        %v4230 = vpack.c.b16 %v2691, %v2664
        %v4231 = vpack.c.b16 %v2692, %v2665
        %v4232 = vpack.c.b16 %v2693, %v2666
        %v4233 = vpack.c.b16 %v2694, %v2667
        %v4234 = vpack.c.b16 %v2695, %v2668
        %v4235 = vpack.c.b16 %v2696, %v2669
        %v4236 = vpack.c.b16 %v2697, %v2670
        %v4237 = vpack.c.b16 %v2698, %v2671
        %v4238 = vpack.c.b16 %v2699, %v2672
        %v4239 = vpack.c.b16 %v2700, %v2673
        %v4240 = vpack.c.b16 %v2701, %v2674
        %v4241 = vpack.c.b16 %v2702, %v2675
        %v4242 = vpack.c.b16 %v2703, %v2676
        %v4243 = vpack.c.b16 %v2704, %v2677
        %v4244 = vpack.c.b16 %v2705, %v2678
        %v4245 = vpack.c.b16 %v2706, %v2679
        %v4246 = vpack.c.b16 %v2707, %v2680
        %v4247 = vpack.c.b16 %v2708, %v2681
        %v4248 = vpack.c.b16 %v2709, %v2682
        %v4249 = vpack.c.b16 %v2737, %v2710
        %v4250 = vpack.c.b16 %v2738, %v2711
        %v4251 = vpack.c.b16 %v2739, %v2712
        %v4252 = vpack.c.b16 %v2740, %v2713
        %v4253 = vpack.c.b16 %v2741, %v2714
        %v4254 = vpack.c.b16 %v2742, %v2715
        %v4255 = vpack.c.b16 %v2743, %v2716
        %v4256 = vpack.c.b16 %v2744, %v2717
        %v4257 = vpack.c.b16 %v2745, %v2718
        %v4258 = vpack.c.b16 %v2746, %v2719
        %v4259 = vpack.c.b16 %v2747, %v2720
        %v4260 = vpack.c.b16 %v2748, %v2721
        %v4261 = vpack.c.b16 %v2749, %v2722
        %v4262 = vpack.c.b16 %v2750, %v2723
        %v4263 = vpack.c.b16 %v2751, %v2724
        %v4264 = vpack.c.b16 %v2752, %v2725
        %v4265 = vpack.c.b16 %v2753, %v2726
        %v4266 = vpack.c.b16 %v2754, %v2727
        %v4267 = vpack.c.b16 %v2755, %v2728
        %v4268 = vpack.c.b16 %v2756, %v2729
        %v4269 = vpack.c.b16 %v2757, %v2730
        %v4270 = vpack.c.b16 %v2758, %v2731
        %v4271 = vpack.c.b16 %v2759, %v2732
        %v4272 = vpack.c.b16 %v2760, %v2733
        %v4273 = vpack.c.b16 %v2761, %v2734
        %v4274 = vpack.c.b16 %v2762, %v2735
        %v4275 = vpack.c.b16 %v2763, %v2736
        %v4276 = vpack.c.b16 %v2791, %v2764
        %v4277 = vpack.c.b16 %v2792, %v2765
        %v4278 = vpack.c.b16 %v2793, %v2766
        %v4279 = vpack.c.b16 %v2794, %v2767
        %v4280 = vpack.c.b16 %v2795, %v2768
        %v4281 = vpack.c.b16 %v2796, %v2769
        %v4282 = vpack.c.b16 %v2797, %v2770
        %v4283 = vpack.c.b16 %v2798, %v2771
        %v4284 = vpack.c.b16 %v2799, %v2772
        %v4285 = vpack.c.b16 %v2800, %v2773
        %v4286 = vpack.c.b16 %v2801, %v2774
        %v4287 = vpack.c.b16 %v2802, %v2775
        %v4288 = vpack.c.b16 %v2803, %v2776
        %v4289 = vpack.c.b16 %v2804, %v2777
        %v4290 = vpack.c.b16 %v2805, %v2778
        %v4291 = vpack.c.b16 %v2806, %v2779
        %v4292 = vpack.c.b16 %v2807, %v2780
        %v4293 = vpack.c.b16 %v2808, %v2781
        %v4294 = vpack.c.b16 %v2809, %v2782
        %v4295 = vpack.c.b16 %v2810, %v2783
        %v4296 = vpack.c.b16 %v2811, %v2784
        %v4297 = vpack.c.b16 %v2812, %v2785
        %v4298 = vpack.c.b16 %v2813, %v2786
        %v4299 = vpack.c.b16 %v2814, %v2787
        %v4300 = vpack.c.b16 %v2815, %v2788
        %v4301 = vpack.c.b16 %v2816, %v2789
        %v4302 = vpack.c.b16 %v2817, %v2790
        %v4303 = vpack.c.b16 %v2845, %v2818
        %v4304 = vpack.c.b16 %v2846, %v2819
        %v4305 = vpack.c.b16 %v2847, %v2820
        %v4306 = vpack.c.b16 %v2848, %v2821
        %v4307 = vpack.c.b16 %v2849, %v2822
        %v4308 = vpack.c.b16 %v2850, %v2823
        %v4309 = vpack.c.b16 %v2851, %v2824
        %v4310 = vpack.c.b16 %v2852, %v2825
        %v4311 = vpack.c.b16 %v2853, %v2826
        %v4312 = vpack.c.b16 %v2854, %v2827
        %v4313 = vpack.c.b16 %v2855, %v2828
        %v4314 = vpack.c.b16 %v2856, %v2829
        %v4315 = vpack.c.b16 %v2857, %v2830
        %v4316 = vpack.c.b16 %v2858, %v2831
        %v4317 = vpack.c.b16 %v2859, %v2832
        %v4318 = vpack.c.b16 %v2860, %v2833
        %v4319 = vpack.c.b16 %v2861, %v2834
        %v4320 = vpack.c.b16 %v2862, %v2835
        %v4321 = vpack.c.b16 %v2863, %v2836
        %v4322 = vpack.c.b16 %v2864, %v2837
        %v4323 = vpack.c.b16 %v2865, %v2838
        %v4324 = vpack.c.b16 %v2866, %v2839
        %v4325 = vpack.c.b16 %v2867, %v2840
        %v4326 = vpack.c.b16 %v2868, %v2841
        %v4327 = vpack.c.b16 %v2869, %v2842
        %v4328 = vpack.c.b16 %v2870, %v2843
        %v4329 = vpack.c.b16 %v2871, %v2844
        %v4330 = vpack.c.b16 %v2899, %v2872
        %v4331 = vpack.c.b16 %v2900, %v2873
        %v4332 = vpack.c.b16 %v2901, %v2874
        %v4333 = vpack.c.b16 %v2902, %v2875
        %v4334 = vpack.c.b16 %v2903, %v2876
        %v4335 = vpack.c.b16 %v2904, %v2877
        %v4336 = vpack.c.b16 %v2905, %v2878
        %v4337 = vpack.c.b16 %v2906, %v2879
        %v4338 = vpack.c.b16 %v2907, %v2880
        %v4339 = vpack.c.b16 %v2908, %v2881
        %v4340 = vpack.c.b16 %v2909, %v2882
        %v4341 = vpack.c.b16 %v2910, %v2883
        %v4342 = vpack.c.b16 %v2911, %v2884
        %v4343 = vpack.c.b16 %v2912, %v2885
        %v4344 = vpack.c.b16 %v2913, %v2886
        %v4345 = vpack.c.b16 %v2914, %v2887
        %v4346 = vpack.c.b16 %v2915, %v2888
        %v4347 = vpack.c.b16 %v2916, %v2889
        %v4348 = vpack.c.b16 %v2917, %v2890
        %v4349 = vpack.c.b16 %v2918, %v2891
        %v4350 = vpack.c.b16 %v2919, %v2892
        %v4351 = vpack.c.b16 %v2920, %v2893
        %v4352 = vpack.c.b16 %v2921, %v2894
        %v4353 = vpack.c.b16 %v2922, %v2895
        %v4354 = vpack.c.b16 %v2923, %v2896
        %v4355 = vpack.c.b16 %v2924, %v2897
        %v4356 = vpack.c.b16 %v2925, %v2898
        %v4357 = vpack.c.b16 %v2953, %v2926
        %v4358 = vpack.c.b16 %v2954, %v2927
        %v4359 = vpack.c.b16 %v2955, %v2928
        %v4360 = vpack.c.b16 %v2956, %v2929
        %v4361 = vpack.c.b16 %v2957, %v2930
        %v4362 = vpack.c.b16 %v2958, %v2931
        %v4363 = vpack.c.b16 %v2959, %v2932
        %v4364 = vpack.c.b16 %v2960, %v2933
        %v4365 = vpack.c.b16 %v2961, %v2934
        %v4366 = vpack.c.b16 %v2962, %v2935
        %v4367 = vpack.c.b16 %v2963, %v2936
        %v4368 = vpack.c.b16 %v2964, %v2937
        %v4369 = vpack.c.b16 %v2965, %v2938
        %v4370 = vpack.c.b16 %v2966, %v2939
        %v4371 = vpack.c.b16 %v2967, %v2940
        %v4372 = vpack.c.b16 %v2968, %v2941
        %v4373 = vpack.c.b16 %v2969, %v2942
        %v4374 = vpack.c.b16 %v2970, %v2943
        %v4375 = vpack.c.b16 %v2971, %v2944
        %v4376 = vpack.c.b16 %v2972, %v2945
        %v4377 = vpack.c.b16 %v2973, %v2946
        %v4378 = vpack.c.b16 %v2974, %v2947
        %v4379 = vpack.c.b16 %v2975, %v2948
        %v4380 = vpack.c.b16 %v2976, %v2949
        %v4381 = vpack.c.b16 %v2977, %v2950
        %v4382 = vpack.c.b16 %v2978, %v2951
        %v4383 = vpack.c.b16 %v2979, %v2952
        %v4384 = vpack.c.b16 %v3007, %v2980
        %v4385 = vpack.c.b16 %v3008, %v2981
        %v4386 = vpack.c.b16 %v3009, %v2982
        %v4387 = vpack.c.b16 %v3010, %v2983
        %v4388 = vpack.c.b16 %v3011, %v2984
        %v4389 = vpack.c.b16 %v3012, %v2985
        %v4390 = vpack.c.b16 %v3013, %v2986
        %v4391 = vpack.c.b16 %v3014, %v2987
        %v4392 = vpack.c.b16 %v3015, %v2988
        %v4393 = vpack.c.b16 %v3016, %v2989
        %v4394 = vpack.c.b16 %v3017, %v2990
        %v4395 = vpack.c.b16 %v3018, %v2991
        %v4396 = vpack.c.b16 %v3019, %v2992
        %v4397 = vpack.c.b16 %v3020, %v2993
        %v4398 = vpack.c.b16 %v3021, %v2994
        %v4399 = vpack.c.b16 %v3022, %v2995
        %v4400 = vpack.c.b16 %v3023, %v2996
        %v4401 = vpack.c.b16 %v3024, %v2997
        %v4402 = vpack.c.b16 %v3025, %v2998
        %v4403 = vpack.c.b16 %v3026, %v2999
        %v4404 = vpack.c.b16 %v3027, %v3000
        %v4405 = vpack.c.b16 %v3028, %v3001
        %v4406 = vpack.c.b16 %v3029, %v3002
        %v4407 = vpack.c.b16 %v3030, %v3003
        %v4408 = vpack.c.b16 %v3031, %v3004
        %v4409 = vpack.c.b16 %v3032, %v3005
        %v4410 = vpack.c.b16 %v3033, %v3006
        %v4411 = vpack.c.b16 %v3061, %v3034
        %v4412 = vpack.c.b16 %v3062, %v3035
        %v4413 = vpack.c.b16 %v3063, %v3036
        %v4414 = vpack.c.b16 %v3064, %v3037
        %v4415 = vpack.c.b16 %v3065, %v3038
        %v4416 = vpack.c.b16 %v3066, %v3039
        %v4417 = vpack.c.b16 %v3067, %v3040
        %v4418 = vpack.c.b16 %v3068, %v3041
        %v4419 = vpack.c.b16 %v3069, %v3042
        %v4420 = vpack.c.b16 %v3070, %v3043
        %v4421 = vpack.c.b16 %v3071, %v3044
        %v4422 = vpack.c.b16 %v3072, %v3045
        %v4423 = vpack.c.b16 %v3073, %v3046
        %v4424 = vpack.c.b16 %v3074, %v3047
        %v4425 = vpack.c.b16 %v3075, %v3048
        %v4426 = vpack.c.b16 %v3076, %v3049
        %v4427 = vpack.c.b16 %v3077, %v3050
        %v4428 = vpack.c.b16 %v3078, %v3051
        %v4429 = vpack.c.b16 %v3079, %v3052
        %v4430 = vpack.c.b16 %v3080, %v3053
        %v4431 = vpack.c.b16 %v3081, %v3054
        %v4432 = vpack.c.b16 %v3082, %v3055
        %v4433 = vpack.c.b16 %v3083, %v3056
        %v4434 = vpack.c.b16 %v3084, %v3057
        %v4435 = vpack.c.b16 %v3085, %v3058
        %v4436 = vpack.c.b16 %v3086, %v3059
        %v4437 = vpack.c.b16 %v3087, %v3060
        %v4438 = vpack.c.b16 %v3115, %v3088
        %v4439 = vpack.c.b16 %v3116, %v3089
        %v4440 = vpack.c.b16 %v3117, %v3090
        %v4441 = vpack.c.b16 %v3118, %v3091
        %v4442 = vpack.c.b16 %v3119, %v3092
        %v4443 = vpack.c.b16 %v3120, %v3093
        %v4444 = vpack.c.b16 %v3121, %v3094
        %v4445 = vpack.c.b16 %v3122, %v3095
        %v4446 = vpack.c.b16 %v3123, %v3096
        %v4447 = vpack.c.b16 %v3124, %v3097
        %v4448 = vpack.c.b16 %v3125, %v3098
        %v4449 = vpack.c.b16 %v3126, %v3099
        %v4450 = vpack.c.b16 %v3127, %v3100
        %v4451 = vpack.c.b16 %v3128, %v3101
        %v4452 = vpack.c.b16 %v3129, %v3102
        %v4453 = vpack.c.b16 %v3130, %v3103
        %v4454 = vpack.c.b16 %v3131, %v3104
        %v4455 = vpack.c.b16 %v3132, %v3105
        %v4456 = vpack.c.b16 %v3133, %v3106
        %v4457 = vpack.c.b16 %v3134, %v3107
        %v4458 = vpack.c.b16 %v3135, %v3108
        %v4459 = vpack.c.b16 %v3136, %v3109
        %v4460 = vpack.c.b16 %v3137, %v3110
        %v4461 = vpack.c.b16 %v3138, %v3111
        %v4462 = vpack.c.b16 %v3139, %v3112
        %v4463 = vpack.c.b16 %v3140, %v3113
        %v4464 = vpack.c.b16 %v3141, %v3114
        %v4465 = vpack.c.b16 %v3169, %v3142
        %v4466 = vpack.c.b16 %v3170, %v3143
        %v4467 = vpack.c.b16 %v3171, %v3144
        %v4468 = vpack.c.b16 %v3172, %v3145
        %v4469 = vpack.c.b16 %v3173, %v3146
        %v4470 = vpack.c.b16 %v3174, %v3147
        %v4471 = vpack.c.b16 %v3175, %v3148
        %v4472 = vpack.c.b16 %v3176, %v3149
        %v4473 = vpack.c.b16 %v3177, %v3150
        %v4474 = vpack.c.b16 %v3178, %v3151
        %v4475 = vpack.c.b16 %v3179, %v3152
        %v4476 = vpack.c.b16 %v3180, %v3153
        %v4477 = vpack.c.b16 %v3181, %v3154
        %v4478 = vpack.c.b16 %v3182, %v3155
        %v4479 = vpack.c.b16 %v3183, %v3156
        %v4480 = vpack.c.b16 %v3184, %v3157
        %v4481 = vpack.c.b16 %v3185, %v3158
        %v4482 = vpack.c.b16 %v3186, %v3159
        %v4483 = vpack.c.b16 %v3187, %v3160
        %v4484 = vpack.c.b16 %v3188, %v3161
        %v4485 = vpack.c.b16 %v3189, %v3162
        %v4486 = vpack.c.b16 %v3190, %v3163
        %v4487 = vpack.c.b16 %v3191, %v3164
        %v4488 = vpack.c.b16 %v3192, %v3165
        %v4489 = vpack.c.b16 %v3193, %v3166
        %v4490 = vpack.c.b16 %v3194, %v3167
        %v4491 = vpack.c.b16 %v3195, %v3168
        %v4492 = vpack.c.b16 %v3223, %v3196
        %v4493 = vpack.c.b16 %v3224, %v3197
        %v4494 = vpack.c.b16 %v3225, %v3198
        %v4495 = vpack.c.b16 %v3226, %v3199
        %v4496 = vpack.c.b16 %v3227, %v3200
        %v4497 = vpack.c.b16 %v3228, %v3201
        %v4498 = vpack.c.b16 %v3229, %v3202
        %v4499 = vpack.c.b16 %v3230, %v3203
        %v4500 = vpack.c.b16 %v3231, %v3204
        %v4501 = vpack.c.b16 %v3232, %v3205
        %v4502 = vpack.c.b16 %v3233, %v3206
        %v4503 = vpack.c.b16 %v3234, %v3207
        %v4504 = vpack.c.b16 %v3235, %v3208
        %v4505 = vpack.c.b16 %v3236, %v3209
        %v4506 = vpack.c.b16 %v3237, %v3210
        %v4507 = vpack.c.b16 %v3238, %v3211
        %v4508 = vpack.c.b16 %v3239, %v3212
        %v4509 = vpack.c.b16 %v3240, %v3213
        %v4510 = vpack.c.b16 %v3241, %v3214
        %v4511 = vpack.c.b16 %v3242, %v3215
        %v4512 = vpack.c.b16 %v3243, %v3216
        %v4513 = vpack.c.b16 %v3244, %v3217
        %v4514 = vpack.c.b16 %v3245, %v3218
        %v4515 = vpack.c.b16 %v3246, %v3219
        %v4516 = vpack.c.b16 %v3247, %v3220
        %v4517 = vpack.c.b16 %v3248, %v3221
        %v4518 = vpack.c.b16 %v3249, %v3222
        %v4519 = vpack.c.b16 %v3277, %v3250
        %v4520 = vpack.c.b16 %v3278, %v3251
        %v4521 = vpack.c.b16 %v3279, %v3252
        %v4522 = vpack.c.b16 %v3280, %v3253
        %v4523 = vpack.c.b16 %v3281, %v3254
        %v4524 = vpack.c.b16 %v3282, %v3255
        %v4525 = vpack.c.b16 %v3283, %v3256
        %v4526 = vpack.c.b16 %v3284, %v3257
        %v4527 = vpack.c.b16 %v3285, %v3258
        %v4528 = vpack.c.b16 %v3286, %v3259
        %v4529 = vpack.c.b16 %v3287, %v3260
        %v4530 = vpack.c.b16 %v3288, %v3261
        %v4531 = vpack.c.b16 %v3289, %v3262
        %v4532 = vpack.c.b16 %v3290, %v3263
        %v4533 = vpack.c.b16 %v3291, %v3264
        %v4534 = vpack.c.b16 %v3292, %v3265
        %v4535 = vpack.c.b16 %v3293, %v3266
        %v4536 = vpack.c.b16 %v3294, %v3267
        %v4537 = vpack.c.b16 %v3295, %v3268
        %v4538 = vpack.c.b16 %v3296, %v3269
        %v4539 = vpack.c.b16 %v3297, %v3270
        %v4540 = vpack.c.b16 %v3298, %v3271
        %v4541 = vpack.c.b16 %v3299, %v3272
        %v4542 = vpack.c.b16 %v3300, %v3273
        %v4543 = vpack.c.b16 %v3301, %v3274
        %v4544 = vpack.c.b16 %v3302, %v3275
        %v4545 = vpack.c.b16 %v3303, %v3276
        %v4546 = vpack.c.b16 %v3331, %v3304
        %v4547 = vpack.c.b16 %v3332, %v3305
        %v4548 = vpack.c.b16 %v3333, %v3306
        %v4549 = vpack.c.b16 %v3334, %v3307
        %v4550 = vpack.c.b16 %v3335, %v3308
        %v4551 = vpack.c.b16 %v3336, %v3309
        %v4552 = vpack.c.b16 %v3337, %v3310
        %v4553 = vpack.c.b16 %v3338, %v3311
        %v4554 = vpack.c.b16 %v3339, %v3312
        %v4555 = vpack.c.b16 %v3340, %v3313
        %v4556 = vpack.c.b16 %v3341, %v3314
        %v4557 = vpack.c.b16 %v3342, %v3315
        %v4558 = vpack.c.b16 %v3343, %v3316
        %v4559 = vpack.c.b16 %v3344, %v3317
        %v4560 = vpack.c.b16 %v3345, %v3318
        %v4561 = vpack.c.b16 %v3346, %v3319
        %v4562 = vpack.c.b16 %v3347, %v3320
        %v4563 = vpack.c.b16 %v3348, %v3321
        %v4564 = vpack.c.b16 %v3349, %v3322
        %v4565 = vpack.c.b16 %v3350, %v3323
        %v4566 = vpack.c.b16 %v3351, %v3324
        %v4567 = vpack.c.b16 %v3352, %v3325
        %v4568 = vpack.c.b16 %v3353, %v3326
        %v4569 = vpack.c.b16 %v3354, %v3327
        %v4570 = vpack.c.b16 %v3355, %v3328
        %v4571 = vpack.c.b16 %v3356, %v3329
        %v4572 = vpack.c.b16 %v3357, %v3330
        %v4573 = vpack.c.b16 %v3385, %v3358
        %v4574 = vpack.c.b16 %v3386, %v3359
        %v4575 = vpack.c.b16 %v3387, %v3360
        %v4576 = vpack.c.b16 %v3388, %v3361
        %v4577 = vpack.c.b16 %v3389, %v3362
        %v4578 = vpack.c.b16 %v3390, %v3363
        %v4579 = vpack.c.b16 %v3391, %v3364
        %v4580 = vpack.c.b16 %v3392, %v3365
        %v4581 = vpack.c.b16 %v3393, %v3366
        %v4582 = vpack.c.b16 %v3394, %v3367
        %v4583 = vpack.c.b16 %v3395, %v3368
        %v4584 = vpack.c.b16 %v3396, %v3369
        %v4585 = vpack.c.b16 %v3397, %v3370
        %v4586 = vpack.c.b16 %v3398, %v3371
        %v4587 = vpack.c.b16 %v3399, %v3372
        %v4588 = vpack.c.b16 %v3400, %v3373
        %v4589 = vpack.c.b16 %v3401, %v3374
        %v4590 = vpack.c.b16 %v3402, %v3375
        %v4591 = vpack.c.b16 %v3403, %v3376
        %v4592 = vpack.c.b16 %v3404, %v3377
        %v4593 = vpack.c.b16 %v3405, %v3378
        %v4594 = vpack.c.b16 %v3406, %v3379
        %v4595 = vpack.c.b16 %v3407, %v3380
        %v4596 = vpack.c.b16 %v3408, %v3381
        %v4597 = vpack.c.b16 %v3409, %v3382
        %v4598 = vpack.c.b16 %v3410, %v3383
        %v4599 = vpack.c.b16 %v3411, %v3384
        %v4600 = vpack.c.b16 %v3439, %v3412
        %v4601 = vpack.c.b16 %v3440, %v3413
        %v4602 = vpack.c.b16 %v3441, %v3414
        %v4603 = vpack.c.b16 %v3442, %v3415
        %v4604 = vpack.c.b16 %v3443, %v3416
        %v4605 = vpack.c.b16 %v3444, %v3417
        %v4606 = vpack.c.b16 %v3445, %v3418
        %v4607 = vpack.c.b16 %v3446, %v3419
        %v4608 = vpack.c.b16 %v3447, %v3420
        %v4609 = vpack.c.b16 %v3448, %v3421
        %v4610 = vpack.c.b16 %v3449, %v3422
        %v4611 = vpack.c.b16 %v3450, %v3423
        %v4612 = vpack.c.b16 %v3451, %v3424
        %v4613 = vpack.c.b16 %v3452, %v3425
        %v4614 = vpack.c.b16 %v3453, %v3426
        %v4615 = vpack.c.b16 %v3454, %v3427
        %v4616 = vpack.c.b16 %v3455, %v3428
        %v4617 = vpack.c.b16 %v3456, %v3429
        %v4618 = vpack.c.b16 %v3457, %v3430
        %v4619 = vpack.c.b16 %v3458, %v3431
        %v4620 = vpack.c.b16 %v3459, %v3432
        %v4621 = vpack.c.b16 %v3460, %v3433
        %v4622 = vpack.c.b16 %v3461, %v3434
        %v4623 = vpack.c.b16 %v3462, %v3435
        %v4624 = vpack.c.b16 %v3463, %v3436
        %v4625 = vpack.c.b16 %v3464, %v3437
        %v4626 = vpack.c.b16 %v3465, %v3438
        %v4627 = vpack.c.b16 %v3493, %v3466
        %v4628 = vpack.c.b16 %v3494, %v3467
        %v4629 = vpack.c.b16 %v3495, %v3468
        %v4630 = vpack.c.b16 %v3496, %v3469
        %v4631 = vpack.c.b16 %v3497, %v3470
        %v4632 = vpack.c.b16 %v3498, %v3471
        %v4633 = vpack.c.b16 %v3499, %v3472
        %v4634 = vpack.c.b16 %v3500, %v3473
        %v4635 = vpack.c.b16 %v3501, %v3474
        %v4636 = vpack.c.b16 %v3502, %v3475
        %v4637 = vpack.c.b16 %v3503, %v3476
        %v4638 = vpack.c.b16 %v3504, %v3477
        %v4639 = vpack.c.b16 %v3505, %v3478
        %v4640 = vpack.c.b16 %v3506, %v3479
        %v4641 = vpack.c.b16 %v3507, %v3480
        %v4642 = vpack.c.b16 %v3508, %v3481
        %v4643 = vpack.c.b16 %v3509, %v3482
        %v4644 = vpack.c.b16 %v3510, %v3483
        %v4645 = vpack.c.b16 %v3511, %v3484
        %v4646 = vpack.c.b16 %v3512, %v3485
        %v4647 = vpack.c.b16 %v3513, %v3486
        %v4648 = vpack.c.b16 %v3514, %v3487
        %v4649 = vpack.c.b16 %v3515, %v3488
        %v4650 = vpack.c.b16 %v3516, %v3489
        %v4651 = vpack.c.b16 %v3517, %v3490
        %v4652 = vpack.c.b16 %v3518, %v3491
        %v4653 = vpack.c.b16 %v3519, %v3492
        %v4654 = vpack.c.b16 %v3547, %v3520
        %v4655 = vpack.c.b16 %v3548, %v3521
        %v4656 = vpack.c.b16 %v3549, %v3522
        %v4657 = vpack.c.b16 %v3550, %v3523
        %v4658 = vpack.c.b16 %v3551, %v3524
        %v4659 = vpack.c.b16 %v3552, %v3525
        %v4660 = vpack.c.b16 %v3553, %v3526
        %v4661 = vpack.c.b16 %v3554, %v3527
        %v4662 = vpack.c.b16 %v3555, %v3528
        %v4663 = vpack.c.b16 %v3556, %v3529
        %v4664 = vpack.c.b16 %v3557, %v3530
        %v4665 = vpack.c.b16 %v3558, %v3531
        %v4666 = vpack.c.b16 %v3559, %v3532
        %v4667 = vpack.c.b16 %v3560, %v3533
        %v4668 = vpack.c.b16 %v3561, %v3534
        %v4669 = vpack.c.b16 %v3562, %v3535
        %v4670 = vpack.c.b16 %v3563, %v3536
        %v4671 = vpack.c.b16 %v3564, %v3537
        %v4672 = vpack.c.b16 %v3565, %v3538
        %v4673 = vpack.c.b16 %v3566, %v3539
        %v4674 = vpack.c.b16 %v3567, %v3540
        %v4675 = vpack.c.b16 %v3568, %v3541
        %v4676 = vpack.c.b16 %v3569, %v3542
        %v4677 = vpack.c.b16 %v3570, %v3543
        %v4678 = vpack.c.b16 %v3571, %v3544
        %v4679 = vpack.c.b16 %v3572, %v3545
        %v4680 = vpack.c.b16 %v3573, %v3546
        %v4681 = vpack.c.b16 %v3601, %v3574
        %v4682 = vpack.c.b16 %v3602, %v3575
        %v4683 = vpack.c.b16 %v3603, %v3576
        %v4684 = vpack.c.b16 %v3604, %v3577
        %v4685 = vpack.c.b16 %v3605, %v3578
        %v4686 = vpack.c.b16 %v3606, %v3579
        %v4687 = vpack.c.b16 %v3607, %v3580
        %v4688 = vpack.c.b16 %v3608, %v3581
        %v4689 = vpack.c.b16 %v3609, %v3582
        %v4690 = vpack.c.b16 %v3610, %v3583
        %v4691 = vpack.c.b16 %v3611, %v3584
        %v4692 = vpack.c.b16 %v3612, %v3585
        %v4693 = vpack.c.b16 %v3613, %v3586
        %v4694 = vpack.c.b16 %v3614, %v3587
        %v4695 = vpack.c.b16 %v3615, %v3588
        %v4696 = vpack.c.b16 %v3616, %v3589
        %v4697 = vpack.c.b16 %v3617, %v3590
        %v4698 = vpack.c.b16 %v3618, %v3591
        %v4699 = vpack.c.b16 %v3619, %v3592
        %v4700 = vpack.c.b16 %v3620, %v3593
        %v4701 = vpack.c.b16 %v3621, %v3594
        %v4702 = vpack.c.b16 %v3622, %v3595
        %v4703 = vpack.c.b16 %v3623, %v3596
        %v4704 = vpack.c.b16 %v3624, %v3597
        %v4705 = vpack.c.b16 %v3625, %v3598
        %v4706 = vpack.c.b16 %v3626, %v3599
        %v4707 = vpack.c.b16 %v3627, %v3600
        %v4708 = vpack.c.b16 %v3655, %v3628
        %v4709 = vpack.c.b16 %v3656, %v3629
        %v4710 = vpack.c.b16 %v3657, %v3630
        %v4711 = vpack.c.b16 %v3658, %v3631
        %v4712 = vpack.c.b16 %v3659, %v3632
        %v4713 = vpack.c.b16 %v3660, %v3633
        %v4714 = vpack.c.b16 %v3661, %v3634
        %v4715 = vpack.c.b16 %v3662, %v3635
        %v4716 = vpack.c.b16 %v3663, %v3636
        %v4717 = vpack.c.b16 %v3664, %v3637
        %v4718 = vpack.c.b16 %v3665, %v3638
        %v4719 = vpack.c.b16 %v3666, %v3639
        %v4720 = vpack.c.b16 %v3667, %v3640
        %v4721 = vpack.c.b16 %v3668, %v3641
        %v4722 = vpack.c.b16 %v3669, %v3642
        %v4723 = vpack.c.b16 %v3670, %v3643
        %v4724 = vpack.c.b16 %v3671, %v3644
        %v4725 = vpack.c.b16 %v3672, %v3645
        %v4726 = vpack.c.b16 %v3673, %v3646
        %v4727 = vpack.c.b16 %v3674, %v3647
        %v4728 = vpack.c.b16 %v3675, %v3648
        %v4729 = vpack.c.b16 %v3676, %v3649
        %v4730 = vpack.c.b16 %v3677, %v3650
        %v4731 = vpack.c.b16 %v3678, %v3651
        %v4732 = vpack.c.b16 %v3679, %v3652
        %v4733 = vpack.c.b16 %v3680, %v3653
        %v4734 = vpack.c.b16 %v3681, %v3654
        %v4735 = vpack.c.b16 %v3709, %v3682
        %v4736 = vpack.c.b16 %v3710, %v3683
        %v4737 = vpack.c.b16 %v3711, %v3684
        %v4738 = vpack.c.b16 %v3712, %v3685
        %v4739 = vpack.c.b16 %v3713, %v3686
        %v4740 = vpack.c.b16 %v3714, %v3687
        %v4741 = vpack.c.b16 %v3715, %v3688
        %v4742 = vpack.c.b16 %v3716, %v3689
        %v4743 = vpack.c.b16 %v3717, %v3690
        %v4744 = vpack.c.b16 %v3718, %v3691
        %v4745 = vpack.c.b16 %v3719, %v3692
        %v4746 = vpack.c.b16 %v3720, %v3693
        %v4747 = vpack.c.b16 %v3721, %v3694
        %v4748 = vpack.c.b16 %v3722, %v3695
        %v4749 = vpack.c.b16 %v3723, %v3696
        %v4750 = vpack.c.b16 %v3724, %v3697
        %v4751 = vpack.c.b16 %v3725, %v3698
        %v4752 = vpack.c.b16 %v3726, %v3699
        %v4753 = vpack.c.b16 %v3727, %v3700
        %v4754 = vpack.c.b16 %v3728, %v3701
        %v4755 = vpack.c.b16 %v3729, %v3702
        %v4756 = vpack.c.b16 %v3730, %v3703
        %v4757 = vpack.c.b16 %v3731, %v3704
        %v4758 = vpack.c.b16 %v3732, %v3705
        %v4759 = vpack.c.b16 %v3733, %v3706
        %v4760 = vpack.c.b16 %v3734, %v3707
        %v4761 = vpack.c.b16 %v3735, %v3708
        %v4762 = vpack.c.b16 %v3763, %v3736
        %v4763 = vpack.c.b16 %v3764, %v3737
        %v4764 = vpack.c.b16 %v3765, %v3738
        %v4765 = vpack.c.b16 %v3766, %v3739
        %v4766 = vpack.c.b16 %v3767, %v3740
        %v4767 = vpack.c.b16 %v3768, %v3741
        %v4768 = vpack.c.b16 %v3769, %v3742
        %v4769 = vpack.c.b16 %v3770, %v3743
        %v4770 = vpack.c.b16 %v3771, %v3744
        %v4771 = vpack.c.b16 %v3772, %v3745
        %v4772 = vpack.c.b16 %v3773, %v3746
        %v4773 = vpack.c.b16 %v3774, %v3747
        %v4774 = vpack.c.b16 %v3775, %v3748
        %v4775 = vpack.c.b16 %v3776, %v3749
        %v4776 = vpack.c.b16 %v3777, %v3750
        %v4777 = vpack.c.b16 %v3778, %v3751
        %v4778 = vpack.c.b16 %v3779, %v3752
        %v4779 = vpack.c.b16 %v3780, %v3753
        %v4780 = vpack.c.b16 %v3781, %v3754
        %v4781 = vpack.c.b16 %v3782, %v3755
        %v4782 = vpack.c.b16 %v3783, %v3756
        %v4783 = vpack.c.b16 %v3784, %v3757
        %v4784 = vpack.c.b16 %v3785, %v3758
        %v4785 = vpack.c.b16 %v3786, %v3759
        %v4786 = vpack.c.b16 %v3787, %v3760
        %v4787 = vpack.c.b16 %v3788, %v3761
        %v4788 = vpack.c.b16 %v3789, %v3762
        %v4789 = vpack.c.b16 %v3817, %v3790
        %v4790 = vpack.c.b16 %v3818, %v3791
        %v4791 = vpack.c.b16 %v3819, %v3792
        %v4792 = vpack.c.b16 %v3820, %v3793
        %v4793 = vpack.c.b16 %v3821, %v3794
        %v4794 = vpack.c.b16 %v3822, %v3795
        %v4795 = vpack.c.b16 %v3823, %v3796
        %v4796 = vpack.c.b16 %v3824, %v3797
        %v4797 = vpack.c.b16 %v3825, %v3798
        %v4798 = vpack.c.b16 %v3826, %v3799
        %v4799 = vpack.c.b16 %v3827, %v3800
        %v4800 = vpack.c.b16 %v3828, %v3801
        %v4801 = vpack.c.b16 %v3829, %v3802
        %v4802 = vpack.c.b16 %v3830, %v3803
        %v4803 = vpack.c.b16 %v3831, %v3804
        %v4804 = vpack.c.b16 %v3832, %v3805
        %v4805 = vpack.c.b16 %v3833, %v3806
        %v4806 = vpack.c.b16 %v3834, %v3807
        %v4807 = vpack.c.b16 %v3835, %v3808
        %v4808 = vpack.c.b16 %v3836, %v3809
        %v4809 = vpack.c.b16 %v3837, %v3810
        %v4810 = vpack.c.b16 %v3838, %v3811
        %v4811 = vpack.c.b16 %v3839, %v3812
        %v4812 = vpack.c.b16 %v3840, %v3813
        %v4813 = vpack.c.b16 %v3841, %v3814
        %v4814 = vpack.c.b16 %v3842, %v3815
        %v4815 = vpack.c.b16 %v3843, %v3816
        %v4816 = vpack.c.b16 %v3871, %v3844
        %v4817 = vpack.c.b16 %v3872, %v3845
        %v4818 = vpack.c.b16 %v3873, %v3846
        %v4819 = vpack.c.b16 %v3874, %v3847
        %v4820 = vpack.c.b16 %v3875, %v3848
        %v4821 = vpack.c.b16 %v3876, %v3849
        %v4822 = vpack.c.b16 %v3877, %v3850
        %v4823 = vpack.c.b16 %v3878, %v3851
        %v4824 = vpack.c.b16 %v3879, %v3852
        %v4825 = vpack.c.b16 %v3880, %v3853
        %v4826 = vpack.c.b16 %v3881, %v3854
        %v4827 = vpack.c.b16 %v3882, %v3855
        %v4828 = vpack.c.b16 %v3883, %v3856
        %v4829 = vpack.c.b16 %v3884, %v3857
        %v4830 = vpack.c.b16 %v3885, %v3858
        %v4831 = vpack.c.b16 %v3886, %v3859
        %v4832 = vpack.c.b16 %v3887, %v3860
        %v4833 = vpack.c.b16 %v3888, %v3861
        %v4834 = vpack.c.b16 %v3889, %v3862
        %v4835 = vpack.c.b16 %v3890, %v3863
        %v4836 = vpack.c.b16 %v3891, %v3864
        %v4837 = vpack.c.b16 %v3892, %v3865
        %v4838 = vpack.c.b16 %v3893, %v3866
        %v4839 = vpack.c.b16 %v3894, %v3867
        %v4840 = vpack.c.b16 %v3895, %v3868
        %v4841 = vpack.c.b16 %v3896, %v3869
        %v4842 = vpack.c.b16 %v3897, %v3870
        %v4843 = vpack.c.b16 %v3925, %v3898
        %v4844 = vpack.c.b16 %v3926, %v3899
        %v4845 = vpack.c.b16 %v3927, %v3900
        %v4846 = vpack.c.b16 %v3928, %v3901
        %v4847 = vpack.c.b16 %v3929, %v3902
        %v4848 = vpack.c.b16 %v3930, %v3903
        %v4849 = vpack.c.b16 %v3931, %v3904
        %v4850 = vpack.c.b16 %v3932, %v3905
        %v4851 = vpack.c.b16 %v3933, %v3906
        %v4852 = vpack.c.b16 %v3934, %v3907
        %v4853 = vpack.c.b16 %v3935, %v3908
        %v4854 = vpack.c.b16 %v3936, %v3909
        %v4855 = vpack.c.b16 %v3937, %v3910
        %v4856 = vpack.c.b16 %v3938, %v3911
        %v4857 = vpack.c.b16 %v3939, %v3912
        %v4858 = vpack.c.b16 %v3940, %v3913
        %v4859 = vpack.c.b16 %v3941, %v3914
        %v4860 = vpack.c.b16 %v3942, %v3915
        %v4861 = vpack.c.b16 %v3943, %v3916
        %v4862 = vpack.c.b16 %v3944, %v3917
        %v4863 = vpack.c.b16 %v3945, %v3918
        %v4864 = vpack.c.b16 %v3946, %v3919
        %v4865 = vpack.c.b16 %v3947, %v3920
        %v4866 = vpack.c.b16 %v3948, %v3921
        %v4867 = vpack.c.b16 %v3949, %v3922
        %v4868 = vpack.c.b16 %v3950, %v3923
        %v4869 = vpack.c.b16 %v3951, %v3924
        %v4870 = vpack.c.b16 %v3979, %v3952
        %v4871 = vpack.c.b16 %v3980, %v3953
        %v4872 = vpack.c.b16 %v3981, %v3954
        %v4873 = vpack.c.b16 %v3982, %v3955
        %v4874 = vpack.c.b16 %v3983, %v3956
        %v4875 = vpack.c.b16 %v3984, %v3957
        %v4876 = vpack.c.b16 %v3985, %v3958
        %v4877 = vpack.c.b16 %v3986, %v3959
        %v4878 = vpack.c.b16 %v3987, %v3960
        %v4879 = vpack.c.b16 %v3988, %v3961
        %v4880 = vpack.c.b16 %v3989, %v3962
        %v4881 = vpack.c.b16 %v3990, %v3963
        %v4882 = vpack.c.b16 %v3991, %v3964
        %v4883 = vpack.c.b16 %v3992, %v3965
        %v4884 = vpack.c.b16 %v3993, %v3966
        %v4885 = vpack.c.b16 %v3994, %v3967
        %v4886 = vpack.c.b16 %v3995, %v3968
        %v4887 = vpack.c.b16 %v3996, %v3969
        %v4888 = vpack.c.b16 %v3997, %v3970
        %v4889 = vpack.c.b16 %v3998, %v3971
        %v4890 = vpack.c.b16 %v3999, %v3972
        %v4891 = vpack.c.b16 %v4000, %v3973
        %v4892 = vpack.c.b16 %v4001, %v3974
        %v4893 = vpack.c.b16 %v4002, %v3975
        %v4894 = vpack.c.b16 %v4003, %v3976
        %v4895 = vpack.c.b16 %v4004, %v3977
        %v4896 = vpack.c.b16 %v4005, %v3978
        %v5789 = vsel %vm299, %v313, 0
        %5791 = vmatpush.bf16.msra.mxu0 %v4195
        %5792 = vmatpush.bf16.msra.mxu0 %v4168
        %5793 = vmatpush.bf16.msra.mxu0 %v4141
        %5794 = vmatpush.bf16.msra.mxu0 %v4114
        %5795 = vmatpush.bf16.msra.mxu0 %v4087
        %5796 = vmatpush.bf16.msra.mxu0 %v4060
        %5797 = vmatpush.bf16.msra.mxu0 %v4033
        %5798 = vmatpush.bf16.msra.mxu0 %v4006
        %5799 = vmatmul.bf16.gmra.mxu0 %v309
        %v5800 = vpop.f32.mrf.mxu0
        %v5801 = vadd.f32 %v1246, %v5800
        %v5802 = vpop.f32.mrf.mxu0
        %5803 = vdwg.mxu0
        %5804 = vmatpush.bf16.msra.mxu0 %v4411
        %5805 = vmatpush.bf16.msra.mxu0 %v4384
        %5806 = vmatpush.bf16.msra.mxu0 %v4357
        %5807 = vmatpush.bf16.msra.mxu0 %v4330
        %5808 = vmatpush.bf16.msra.mxu0 %v4303
        %5809 = vmatpush.bf16.msra.mxu0 %v4276
        %5810 = vmatpush.bf16.msra.mxu0 %v4249
        %5811 = vmatpush.bf16.msra.mxu0 %v4222
        %5812 = vmatmul.bf16.gmra.mxu0 %v310
        %v5813 = vpop.f32.mrf.mxu0
        %v5814 = vadd.f32 %v5801, %v5813
        %v5815 = vpop.f32.mrf.mxu0
        %5816 = vdwg.mxu0
        %5817 = vmatpush.bf16.msra.mxu0 %v4627
        %5818 = vmatpush.bf16.msra.mxu0 %v4600
        %5819 = vmatpush.bf16.msra.mxu0 %v4573
        %5820 = vmatpush.bf16.msra.mxu0 %v4546
        %5821 = vmatpush.bf16.msra.mxu0 %v4519
        %5822 = vmatpush.bf16.msra.mxu0 %v4492
        %5823 = vmatpush.bf16.msra.mxu0 %v4465
        %5824 = vmatpush.bf16.msra.mxu0 %v4438
        %5825 = vmatmul.bf16.gmra.mxu0 %v311
        %v5826 = vpop.f32.mrf.mxu0
        %v5827 = vadd.f32 %v5814, %v5826
        %v5828 = vpop.f32.mrf.mxu0
        %5829 = vdwg.mxu0
        %5830 = vmatpush.bf16.msra.mxu0 %v4843
        %5831 = vmatpush.bf16.msra.mxu0 %v4816
        %5832 = vmatpush.bf16.msra.mxu0 %v4789
        %5833 = vmatpush.bf16.msra.mxu0 %v4762
        %5834 = vmatpush.bf16.msra.mxu0 %v4735
        %5835 = vmatpush.bf16.msra.mxu0 %v4708
        %5836 = vmatpush.bf16.msra.mxu0 %v4681
        %5837 = vmatpush.bf16.msra.mxu0 %v4654
        %5838 = vmatmul.bf16.gmra.mxu0 %v312
        %v5839 = vpop.f32.mrf.mxu0
        %v5840 = vadd.f32 %v5827, %v5839
        %v5841 = vpop.f32.mrf.mxu0
        %5842 = vdwg.mxu0
        %5843 = vmatpush.bf16.msra.mxu0 0
        %5844 = vmatpush.bf16.msra.mxu0 0
        %5845 = vmatpush.bf16.msra.mxu0 0
        %5846 = vmatpush.bf16.msra.mxu0 0
        %5847 = vmatpush.bf16.msra.mxu0 0
        %5848 = vmatpush.bf16.msra.mxu0 0
        %5849 = vmatpush.bf16.msra.mxu0 0
        %5850 = vmatpush.bf16.msra.mxu0 %v4870
        %5851 = vmatmul.bf16.gmra.mxu0 %v5789
        %v5852 = vpop.f32.mrf.mxu0
        %v5853 = vadd.f32 %v5840, %v5852
        %v5854 = vpop.f32.mrf.mxu0
        %5855 = vdwg.mxu0
        %5856 = vmatpush.bf16.msra.mxu0 %v4196
        %5857 = vmatpush.bf16.msra.mxu0 %v4169
        %5858 = vmatpush.bf16.msra.mxu0 %v4142
        %5859 = vmatpush.bf16.msra.mxu0 %v4115
        %5860 = vmatpush.bf16.msra.mxu0 %v4088
        %5861 = vmatpush.bf16.msra.mxu0 %v4061
        %5862 = vmatpush.bf16.msra.mxu0 %v4034
        %5863 = vmatpush.bf16.msra.mxu0 %v4007
        %5864 = vmatmul.bf16.gmra.mxu0 %v309
        %v5865 = vpop.f32.mrf.mxu0
        %v5866 = vadd.f32 %v1247, %v5865
        %v5867 = vpop.f32.mrf.mxu0
        %5868 = vdwg.mxu0
        %5869 = vmatpush.bf16.msra.mxu0 %v4412
        %5870 = vmatpush.bf16.msra.mxu0 %v4385
        %5871 = vmatpush.bf16.msra.mxu0 %v4358
        %5872 = vmatpush.bf16.msra.mxu0 %v4331
        %5873 = vmatpush.bf16.msra.mxu0 %v4304
        %5874 = vmatpush.bf16.msra.mxu0 %v4277
        %5875 = vmatpush.bf16.msra.mxu0 %v4250
        %5876 = vmatpush.bf16.msra.mxu0 %v4223
        %5877 = vmatmul.bf16.gmra.mxu0 %v310
        %v5878 = vpop.f32.mrf.mxu0
        %v5879 = vadd.f32 %v5866, %v5878
        %v5880 = vpop.f32.mrf.mxu0
        %5881 = vdwg.mxu0
        %5882 = vmatpush.bf16.msra.mxu0 %v4628
        %5883 = vmatpush.bf16.msra.mxu0 %v4601
        %5884 = vmatpush.bf16.msra.mxu0 %v4574
        %5885 = vmatpush.bf16.msra.mxu0 %v4547
        %5886 = vmatpush.bf16.msra.mxu0 %v4520
        %5887 = vmatpush.bf16.msra.mxu0 %v4493
        %5888 = vmatpush.bf16.msra.mxu0 %v4466
        %5889 = vmatpush.bf16.msra.mxu0 %v4439
        %5890 = vmatmul.bf16.gmra.mxu0 %v311
        %v5891 = vpop.f32.mrf.mxu0
        %v5892 = vadd.f32 %v5879, %v5891
        %v5893 = vpop.f32.mrf.mxu0
        %5894 = vdwg.mxu0
        %5895 = vmatpush.bf16.msra.mxu0 %v4844
        %5896 = vmatpush.bf16.msra.mxu0 %v4817
        %5897 = vmatpush.bf16.msra.mxu0 %v4790
        %5898 = vmatpush.bf16.msra.mxu0 %v4763
        %5899 = vmatpush.bf16.msra.mxu0 %v4736
        %5900 = vmatpush.bf16.msra.mxu0 %v4709
        %5901 = vmatpush.bf16.msra.mxu0 %v4682
        %5902 = vmatpush.bf16.msra.mxu0 %v4655
        %5903 = vmatmul.bf16.gmra.mxu0 %v312
        %v5904 = vpop.f32.mrf.mxu0
        %v5905 = vadd.f32 %v5892, %v5904
        %v5906 = vpop.f32.mrf.mxu0
        %5907 = vdwg.mxu0
        %5908 = vmatpush.bf16.msra.mxu0 0
        %5909 = vmatpush.bf16.msra.mxu0 0
        %5910 = vmatpush.bf16.msra.mxu0 0
        %5911 = vmatpush.bf16.msra.mxu0 0
        %5912 = vmatpush.bf16.msra.mxu0 0
        %5913 = vmatpush.bf16.msra.mxu0 0
        %5914 = vmatpush.bf16.msra.mxu0 0
        %5915 = vmatpush.bf16.msra.mxu0 %v4871
        %5916 = vmatmul.bf16.gmra.mxu0 %v5789
        %v5917 = vpop.f32.mrf.mxu0
        %v5918 = vadd.f32 %v5905, %v5917
        %v5919 = vpop.f32.mrf.mxu0
        %5920 = vdwg.mxu0
        %5921 = vmatpush.bf16.msra.mxu0 %v4197
        %5922 = vmatpush.bf16.msra.mxu0 %v4170
        %5923 = vmatpush.bf16.msra.mxu0 %v4143
        %5924 = vmatpush.bf16.msra.mxu0 %v4116
        %5925 = vmatpush.bf16.msra.mxu0 %v4089
        %5926 = vmatpush.bf16.msra.mxu0 %v4062
        %5927 = vmatpush.bf16.msra.mxu0 %v4035
        %5928 = vmatpush.bf16.msra.mxu0 %v4008
        %5929 = vmatmul.bf16.gmra.mxu0 %v309
        %v5930 = vpop.f32.mrf.mxu0
        %v5931 = vadd.f32 %v1248, %v5930
        %v5932 = vpop.f32.mrf.mxu0
        %5933 = vdwg.mxu0
        %5934 = vmatpush.bf16.msra.mxu0 %v4413
        %5935 = vmatpush.bf16.msra.mxu0 %v4386
        %5936 = vmatpush.bf16.msra.mxu0 %v4359
        %5937 = vmatpush.bf16.msra.mxu0 %v4332
        %5938 = vmatpush.bf16.msra.mxu0 %v4305
        %5939 = vmatpush.bf16.msra.mxu0 %v4278
        %5940 = vmatpush.bf16.msra.mxu0 %v4251
        %5941 = vmatpush.bf16.msra.mxu0 %v4224
        %5942 = vmatmul.bf16.gmra.mxu0 %v310
        %v5943 = vpop.f32.mrf.mxu0
        %v5944 = vadd.f32 %v5931, %v5943
        %v5945 = vpop.f32.mrf.mxu0
        %5946 = vdwg.mxu0
        %5947 = vmatpush.bf16.msra.mxu0 %v4629
        %5948 = vmatpush.bf16.msra.mxu0 %v4602
        %5949 = vmatpush.bf16.msra.mxu0 %v4575
        %5950 = vmatpush.bf16.msra.mxu0 %v4548
        %5951 = vmatpush.bf16.msra.mxu0 %v4521
        %5952 = vmatpush.bf16.msra.mxu0 %v4494
        %5953 = vmatpush.bf16.msra.mxu0 %v4467
        %5954 = vmatpush.bf16.msra.mxu0 %v4440
        %5955 = vmatmul.bf16.gmra.mxu0 %v311
        %v5956 = vpop.f32.mrf.mxu0
        %v5957 = vadd.f32 %v5944, %v5956
        %v5958 = vpop.f32.mrf.mxu0
        %5959 = vdwg.mxu0
        %5960 = vmatpush.bf16.msra.mxu0 %v4845
        %5961 = vmatpush.bf16.msra.mxu0 %v4818
        %5962 = vmatpush.bf16.msra.mxu0 %v4791
        %5963 = vmatpush.bf16.msra.mxu0 %v4764
        %5964 = vmatpush.bf16.msra.mxu0 %v4737
        %5965 = vmatpush.bf16.msra.mxu0 %v4710
        %5966 = vmatpush.bf16.msra.mxu0 %v4683
        %5967 = vmatpush.bf16.msra.mxu0 %v4656
        %5968 = vmatmul.bf16.gmra.mxu0 %v312
        %v5969 = vpop.f32.mrf.mxu0
        %v5970 = vadd.f32 %v5957, %v5969
        %v5971 = vpop.f32.mrf.mxu0
        %5972 = vdwg.mxu0
        %5973 = vmatpush.bf16.msra.mxu0 0
        %5974 = vmatpush.bf16.msra.mxu0 0
        %5975 = vmatpush.bf16.msra.mxu0 0
        %5976 = vmatpush.bf16.msra.mxu0 0
        %5977 = vmatpush.bf16.msra.mxu0 0
        %5978 = vmatpush.bf16.msra.mxu0 0
        %5979 = vmatpush.bf16.msra.mxu0 0
        %5980 = vmatpush.bf16.msra.mxu0 %v4872
        %5981 = vmatmul.bf16.gmra.mxu0 %v5789
        %v5982 = vpop.f32.mrf.mxu0
        %v5983 = vadd.f32 %v5970, %v5982
        %v5984 = vpop.f32.mrf.mxu0
        %5985 = vdwg.mxu0
        %5986 = vmatpush.bf16.msra.mxu0 %v4198
        %5987 = vmatpush.bf16.msra.mxu0 %v4171
        %5988 = vmatpush.bf16.msra.mxu0 %v4144
        %5989 = vmatpush.bf16.msra.mxu0 %v4117
        %5990 = vmatpush.bf16.msra.mxu0 %v4090
        %5991 = vmatpush.bf16.msra.mxu0 %v4063
        %5992 = vmatpush.bf16.msra.mxu0 %v4036
        %5993 = vmatpush.bf16.msra.mxu0 %v4009
        %5994 = vmatmul.bf16.gmra.mxu0 %v309
        %v5995 = vpop.f32.mrf.mxu0
        %v5996 = vadd.f32 %v1249, %v5995
        %v5997 = vpop.f32.mrf.mxu0
        %5998 = vdwg.mxu0
        %5999 = vmatpush.bf16.msra.mxu0 %v4414
        %6000 = vmatpush.bf16.msra.mxu0 %v4387
        %6001 = vmatpush.bf16.msra.mxu0 %v4360
        %6002 = vmatpush.bf16.msra.mxu0 %v4333
        %6003 = vmatpush.bf16.msra.mxu0 %v4306
        %6004 = vmatpush.bf16.msra.mxu0 %v4279
        %6005 = vmatpush.bf16.msra.mxu0 %v4252
        %6006 = vmatpush.bf16.msra.mxu0 %v4225
        %6007 = vmatmul.bf16.gmra.mxu0 %v310
        %v6008 = vpop.f32.mrf.mxu0
        %v6009 = vadd.f32 %v5996, %v6008
        %v6010 = vpop.f32.mrf.mxu0
        %6011 = vdwg.mxu0
        %6012 = vmatpush.bf16.msra.mxu0 %v4630
        %6013 = vmatpush.bf16.msra.mxu0 %v4603
        %6014 = vmatpush.bf16.msra.mxu0 %v4576
        %6015 = vmatpush.bf16.msra.mxu0 %v4549
        %6016 = vmatpush.bf16.msra.mxu0 %v4522
        %6017 = vmatpush.bf16.msra.mxu0 %v4495
        %6018 = vmatpush.bf16.msra.mxu0 %v4468
        %6019 = vmatpush.bf16.msra.mxu0 %v4441
        %6020 = vmatmul.bf16.gmra.mxu0 %v311
        %v6021 = vpop.f32.mrf.mxu0
        %v6022 = vadd.f32 %v6009, %v6021
        %v6023 = vpop.f32.mrf.mxu0
        %6024 = vdwg.mxu0
        %6025 = vmatpush.bf16.msra.mxu0 %v4846
        %6026 = vmatpush.bf16.msra.mxu0 %v4819
        %6027 = vmatpush.bf16.msra.mxu0 %v4792
        %6028 = vmatpush.bf16.msra.mxu0 %v4765
        %6029 = vmatpush.bf16.msra.mxu0 %v4738
        %6030 = vmatpush.bf16.msra.mxu0 %v4711
        %6031 = vmatpush.bf16.msra.mxu0 %v4684
        %6032 = vmatpush.bf16.msra.mxu0 %v4657
        %6033 = vmatmul.bf16.gmra.mxu0 %v312
        %v6034 = vpop.f32.mrf.mxu0
        %v6035 = vadd.f32 %v6022, %v6034
        %v6036 = vpop.f32.mrf.mxu0
        %6037 = vdwg.mxu0
        %6038 = vmatpush.bf16.msra.mxu0 0
        %6039 = vmatpush.bf16.msra.mxu0 0
        %6040 = vmatpush.bf16.msra.mxu0 0
        %6041 = vmatpush.bf16.msra.mxu0 0
        %6042 = vmatpush.bf16.msra.mxu0 0
        %6043 = vmatpush.bf16.msra.mxu0 0
        %6044 = vmatpush.bf16.msra.mxu0 0
        %6045 = vmatpush.bf16.msra.mxu0 %v4873
        %6046 = vmatmul.bf16.gmra.mxu0 %v5789
        %v6047 = vpop.f32.mrf.mxu0
        %v6048 = vadd.f32 %v6035, %v6047
        %v6049 = vpop.f32.mrf.mxu0
        %6050 = vdwg.mxu0
        %6051 = vmatpush.bf16.msra.mxu0 %v4199
        %6052 = vmatpush.bf16.msra.mxu0 %v4172
        %6053 = vmatpush.bf16.msra.mxu0 %v4145
        %6054 = vmatpush.bf16.msra.mxu0 %v4118
        %6055 = vmatpush.bf16.msra.mxu0 %v4091
        %6056 = vmatpush.bf16.msra.mxu0 %v4064
        %6057 = vmatpush.bf16.msra.mxu0 %v4037
        %6058 = vmatpush.bf16.msra.mxu0 %v4010
        %6059 = vmatmul.bf16.gmra.mxu0 %v309
        %v6060 = vpop.f32.mrf.mxu0
        %v6061 = vadd.f32 %v1250, %v6060
        %v6062 = vpop.f32.mrf.mxu0
        %6063 = vdwg.mxu0
        %6064 = vmatpush.bf16.msra.mxu0 %v4415
        %6065 = vmatpush.bf16.msra.mxu0 %v4388
        %6066 = vmatpush.bf16.msra.mxu0 %v4361
        %6067 = vmatpush.bf16.msra.mxu0 %v4334
        %6068 = vmatpush.bf16.msra.mxu0 %v4307
        %6069 = vmatpush.bf16.msra.mxu0 %v4280
        %6070 = vmatpush.bf16.msra.mxu0 %v4253
        %6071 = vmatpush.bf16.msra.mxu0 %v4226
        %6072 = vmatmul.bf16.gmra.mxu0 %v310
        %v6073 = vpop.f32.mrf.mxu0
        %v6074 = vadd.f32 %v6061, %v6073
        %v6075 = vpop.f32.mrf.mxu0
        %6076 = vdwg.mxu0
        %6077 = vmatpush.bf16.msra.mxu0 %v4631
        %6078 = vmatpush.bf16.msra.mxu0 %v4604
        %6079 = vmatpush.bf16.msra.mxu0 %v4577
        %6080 = vmatpush.bf16.msra.mxu0 %v4550
        %6081 = vmatpush.bf16.msra.mxu0 %v4523
        %6082 = vmatpush.bf16.msra.mxu0 %v4496
        %6083 = vmatpush.bf16.msra.mxu0 %v4469
        %6084 = vmatpush.bf16.msra.mxu0 %v4442
        %6085 = vmatmul.bf16.gmra.mxu0 %v311
        %v6086 = vpop.f32.mrf.mxu0
        %v6087 = vadd.f32 %v6074, %v6086
        %v6088 = vpop.f32.mrf.mxu0
        %6089 = vdwg.mxu0
        %6090 = vmatpush.bf16.msra.mxu0 %v4847
        %6091 = vmatpush.bf16.msra.mxu0 %v4820
        %6092 = vmatpush.bf16.msra.mxu0 %v4793
        %6093 = vmatpush.bf16.msra.mxu0 %v4766
        %6094 = vmatpush.bf16.msra.mxu0 %v4739
        %6095 = vmatpush.bf16.msra.mxu0 %v4712
        %6096 = vmatpush.bf16.msra.mxu0 %v4685
        %6097 = vmatpush.bf16.msra.mxu0 %v4658
        %6098 = vmatmul.bf16.gmra.mxu0 %v312
        %v6099 = vpop.f32.mrf.mxu0
        %v6100 = vadd.f32 %v6087, %v6099
        %v6101 = vpop.f32.mrf.mxu0
        %6102 = vdwg.mxu0
        %6103 = vmatpush.bf16.msra.mxu0 0
        %6104 = vmatpush.bf16.msra.mxu0 0
        %6105 = vmatpush.bf16.msra.mxu0 0
        %6106 = vmatpush.bf16.msra.mxu0 0
        %6107 = vmatpush.bf16.msra.mxu0 0
        %6108 = vmatpush.bf16.msra.mxu0 0
        %6109 = vmatpush.bf16.msra.mxu0 0
        %6110 = vmatpush.bf16.msra.mxu0 %v4874
        %6111 = vmatmul.bf16.gmra.mxu0 %v5789
        %v6112 = vpop.f32.mrf.mxu0
        %v6113 = vadd.f32 %v6100, %v6112
        %v6114 = vpop.f32.mrf.mxu0
        %6115 = vdwg.mxu0
        %6116 = vmatpush.bf16.msra.mxu0 %v4200
        %6117 = vmatpush.bf16.msra.mxu0 %v4173
        %6118 = vmatpush.bf16.msra.mxu0 %v4146
        %6119 = vmatpush.bf16.msra.mxu0 %v4119
        %6120 = vmatpush.bf16.msra.mxu0 %v4092
        %6121 = vmatpush.bf16.msra.mxu0 %v4065
        %6122 = vmatpush.bf16.msra.mxu0 %v4038
        %6123 = vmatpush.bf16.msra.mxu0 %v4011
        %6124 = vmatmul.bf16.gmra.mxu0 %v309
        %v6125 = vpop.f32.mrf.mxu0
        %v6126 = vadd.f32 %v1251, %v6125
        %v6127 = vpop.f32.mrf.mxu0
        %6128 = vdwg.mxu0
        %6129 = vmatpush.bf16.msra.mxu0 %v4416
        %6130 = vmatpush.bf16.msra.mxu0 %v4389
        %6131 = vmatpush.bf16.msra.mxu0 %v4362
        %6132 = vmatpush.bf16.msra.mxu0 %v4335
        %6133 = vmatpush.bf16.msra.mxu0 %v4308
        %6134 = vmatpush.bf16.msra.mxu0 %v4281
        %6135 = vmatpush.bf16.msra.mxu0 %v4254
        %6136 = vmatpush.bf16.msra.mxu0 %v4227
        %6137 = vmatmul.bf16.gmra.mxu0 %v310
        %v6138 = vpop.f32.mrf.mxu0
        %v6139 = vadd.f32 %v6126, %v6138
        %v6140 = vpop.f32.mrf.mxu0
        %6141 = vdwg.mxu0
        %6142 = vmatpush.bf16.msra.mxu0 %v4632
        %6143 = vmatpush.bf16.msra.mxu0 %v4605
        %6144 = vmatpush.bf16.msra.mxu0 %v4578
        %6145 = vmatpush.bf16.msra.mxu0 %v4551
        %6146 = vmatpush.bf16.msra.mxu0 %v4524
        %6147 = vmatpush.bf16.msra.mxu0 %v4497
        %6148 = vmatpush.bf16.msra.mxu0 %v4470
        %6149 = vmatpush.bf16.msra.mxu0 %v4443
        %6150 = vmatmul.bf16.gmra.mxu0 %v311
        %v6151 = vpop.f32.mrf.mxu0
        %v6152 = vadd.f32 %v6139, %v6151
        %v6153 = vpop.f32.mrf.mxu0
        %6154 = vdwg.mxu0
        %6155 = vmatpush.bf16.msra.mxu0 %v4848
        %6156 = vmatpush.bf16.msra.mxu0 %v4821
        %6157 = vmatpush.bf16.msra.mxu0 %v4794
        %6158 = vmatpush.bf16.msra.mxu0 %v4767
        %6159 = vmatpush.bf16.msra.mxu0 %v4740
        %6160 = vmatpush.bf16.msra.mxu0 %v4713
        %6161 = vmatpush.bf16.msra.mxu0 %v4686
        %6162 = vmatpush.bf16.msra.mxu0 %v4659
        %6163 = vmatmul.bf16.gmra.mxu0 %v312
        %v6164 = vpop.f32.mrf.mxu0
        %v6165 = vadd.f32 %v6152, %v6164
        %v6166 = vpop.f32.mrf.mxu0
        %6167 = vdwg.mxu0
        %6168 = vmatpush.bf16.msra.mxu0 0
        %6169 = vmatpush.bf16.msra.mxu0 0
        %6170 = vmatpush.bf16.msra.mxu0 0
        %6171 = vmatpush.bf16.msra.mxu0 0
        %6172 = vmatpush.bf16.msra.mxu0 0
        %6173 = vmatpush.bf16.msra.mxu0 0
        %6174 = vmatpush.bf16.msra.mxu0 0
        %6175 = vmatpush.bf16.msra.mxu0 %v4875
        %6176 = vmatmul.bf16.gmra.mxu0 %v5789
        %v6177 = vpop.f32.mrf.mxu0
        %v6178 = vadd.f32 %v6165, %v6177
        %v6179 = vpop.f32.mrf.mxu0
        %6180 = vdwg.mxu0
        %6181 = vmatpush.bf16.msra.mxu0 %v4201
        %6182 = vmatpush.bf16.msra.mxu0 %v4174
        %6183 = vmatpush.bf16.msra.mxu0 %v4147
        %6184 = vmatpush.bf16.msra.mxu0 %v4120
        %6185 = vmatpush.bf16.msra.mxu0 %v4093
        %6186 = vmatpush.bf16.msra.mxu0 %v4066
        %6187 = vmatpush.bf16.msra.mxu0 %v4039
        %6188 = vmatpush.bf16.msra.mxu0 %v4012
        %6189 = vmatmul.bf16.gmra.mxu0 %v309
        %v6190 = vpop.f32.mrf.mxu0
        %v6191 = vadd.f32 %v1252, %v6190
        %v6192 = vpop.f32.mrf.mxu0
        %6193 = vdwg.mxu0
        %6194 = vmatpush.bf16.msra.mxu0 %v4417
        %6195 = vmatpush.bf16.msra.mxu0 %v4390
        %6196 = vmatpush.bf16.msra.mxu0 %v4363
        %6197 = vmatpush.bf16.msra.mxu0 %v4336
        %6198 = vmatpush.bf16.msra.mxu0 %v4309
        %6199 = vmatpush.bf16.msra.mxu0 %v4282
        %6200 = vmatpush.bf16.msra.mxu0 %v4255
        %6201 = vmatpush.bf16.msra.mxu0 %v4228
        %6202 = vmatmul.bf16.gmra.mxu0 %v310
        %v6203 = vpop.f32.mrf.mxu0
        %v6204 = vadd.f32 %v6191, %v6203
        %v6205 = vpop.f32.mrf.mxu0
        %6206 = vdwg.mxu0
        %6207 = vmatpush.bf16.msra.mxu0 %v4633
        %6208 = vmatpush.bf16.msra.mxu0 %v4606
        %6209 = vmatpush.bf16.msra.mxu0 %v4579
        %6210 = vmatpush.bf16.msra.mxu0 %v4552
        %6211 = vmatpush.bf16.msra.mxu0 %v4525
        %6212 = vmatpush.bf16.msra.mxu0 %v4498
        %6213 = vmatpush.bf16.msra.mxu0 %v4471
        %6214 = vmatpush.bf16.msra.mxu0 %v4444
        %6215 = vmatmul.bf16.gmra.mxu0 %v311
        %v6216 = vpop.f32.mrf.mxu0
        %v6217 = vadd.f32 %v6204, %v6216
        %v6218 = vpop.f32.mrf.mxu0
        %6219 = vdwg.mxu0
        %6220 = vmatpush.bf16.msra.mxu0 %v4849
        %6221 = vmatpush.bf16.msra.mxu0 %v4822
        %6222 = vmatpush.bf16.msra.mxu0 %v4795
        %6223 = vmatpush.bf16.msra.mxu0 %v4768
        %6224 = vmatpush.bf16.msra.mxu0 %v4741
        %6225 = vmatpush.bf16.msra.mxu0 %v4714
        %6226 = vmatpush.bf16.msra.mxu0 %v4687
        %6227 = vmatpush.bf16.msra.mxu0 %v4660
        %6228 = vmatmul.bf16.gmra.mxu0 %v312
        %v6229 = vpop.f32.mrf.mxu0
        %v6230 = vadd.f32 %v6217, %v6229
        %v6231 = vpop.f32.mrf.mxu0
        %6232 = vdwg.mxu0
        %6233 = vmatpush.bf16.msra.mxu0 0
        %6234 = vmatpush.bf16.msra.mxu0 0
        %6235 = vmatpush.bf16.msra.mxu0 0
        %6236 = vmatpush.bf16.msra.mxu0 0
        %6237 = vmatpush.bf16.msra.mxu0 0
        %6238 = vmatpush.bf16.msra.mxu0 0
        %6239 = vmatpush.bf16.msra.mxu0 0
        %6240 = vmatpush.bf16.msra.mxu0 %v4876
        %6241 = vmatmul.bf16.gmra.mxu0 %v5789
        %v6242 = vpop.f32.mrf.mxu0
        %v6243 = vadd.f32 %v6230, %v6242
        %v6244 = vpop.f32.mrf.mxu0
        %6245 = vdwg.mxu0
        %6246 = vmatpush.bf16.msra.mxu0 %v4202
        %6247 = vmatpush.bf16.msra.mxu0 %v4175
        %6248 = vmatpush.bf16.msra.mxu0 %v4148
        %6249 = vmatpush.bf16.msra.mxu0 %v4121
        %6250 = vmatpush.bf16.msra.mxu0 %v4094
        %6251 = vmatpush.bf16.msra.mxu0 %v4067
        %6252 = vmatpush.bf16.msra.mxu0 %v4040
        %6253 = vmatpush.bf16.msra.mxu0 %v4013
        %6254 = vmatmul.bf16.gmra.mxu0 %v309
        %v6255 = vpop.f32.mrf.mxu0
        %v6256 = vadd.f32 %v1253, %v6255
        %v6257 = vpop.f32.mrf.mxu0
        %6258 = vdwg.mxu0
        %6259 = vmatpush.bf16.msra.mxu0 %v4418
        %6260 = vmatpush.bf16.msra.mxu0 %v4391
        %6261 = vmatpush.bf16.msra.mxu0 %v4364
        %6262 = vmatpush.bf16.msra.mxu0 %v4337
        %6263 = vmatpush.bf16.msra.mxu0 %v4310
        %6264 = vmatpush.bf16.msra.mxu0 %v4283
        %6265 = vmatpush.bf16.msra.mxu0 %v4256
        %6266 = vmatpush.bf16.msra.mxu0 %v4229
        %6267 = vmatmul.bf16.gmra.mxu0 %v310
        %v6268 = vpop.f32.mrf.mxu0
        %v6269 = vadd.f32 %v6256, %v6268
        %v6270 = vpop.f32.mrf.mxu0
        %6271 = vdwg.mxu0
        %6272 = vmatpush.bf16.msra.mxu0 %v4634
        %6273 = vmatpush.bf16.msra.mxu0 %v4607
        %6274 = vmatpush.bf16.msra.mxu0 %v4580
        %6275 = vmatpush.bf16.msra.mxu0 %v4553
        %6276 = vmatpush.bf16.msra.mxu0 %v4526
        %6277 = vmatpush.bf16.msra.mxu0 %v4499
        %6278 = vmatpush.bf16.msra.mxu0 %v4472
        %6279 = vmatpush.bf16.msra.mxu0 %v4445
        %6280 = vmatmul.bf16.gmra.mxu0 %v311
        %v6281 = vpop.f32.mrf.mxu0
        %v6282 = vadd.f32 %v6269, %v6281
        %v6283 = vpop.f32.mrf.mxu0
        %6284 = vdwg.mxu0
        %6285 = vmatpush.bf16.msra.mxu0 %v4850
        %6286 = vmatpush.bf16.msra.mxu0 %v4823
        %6287 = vmatpush.bf16.msra.mxu0 %v4796
        %6288 = vmatpush.bf16.msra.mxu0 %v4769
        %6289 = vmatpush.bf16.msra.mxu0 %v4742
        %6290 = vmatpush.bf16.msra.mxu0 %v4715
        %6291 = vmatpush.bf16.msra.mxu0 %v4688
        %6292 = vmatpush.bf16.msra.mxu0 %v4661
        %6293 = vmatmul.bf16.gmra.mxu0 %v312
        %v6294 = vpop.f32.mrf.mxu0
        %v6295 = vadd.f32 %v6282, %v6294
        %v6296 = vpop.f32.mrf.mxu0
        %6297 = vdwg.mxu0
        %6298 = vmatpush.bf16.msra.mxu0 0
        %6299 = vmatpush.bf16.msra.mxu0 0
        %6300 = vmatpush.bf16.msra.mxu0 0
        %6301 = vmatpush.bf16.msra.mxu0 0
        %6302 = vmatpush.bf16.msra.mxu0 0
        %6303 = vmatpush.bf16.msra.mxu0 0
        %6304 = vmatpush.bf16.msra.mxu0 0
        %6305 = vmatpush.bf16.msra.mxu0 %v4877
        %6306 = vmatmul.bf16.gmra.mxu0 %v5789
        %v6307 = vpop.f32.mrf.mxu0
        %v6308 = vadd.f32 %v6295, %v6307
        %v6309 = vpop.f32.mrf.mxu0
        %6310 = vdwg.mxu0
        %6311 = vmatpush.bf16.msra.mxu0 %v4203
        %6312 = vmatpush.bf16.msra.mxu0 %v4176
        %6313 = vmatpush.bf16.msra.mxu0 %v4149
        %6314 = vmatpush.bf16.msra.mxu0 %v4122
        %6315 = vmatpush.bf16.msra.mxu0 %v4095
        %6316 = vmatpush.bf16.msra.mxu0 %v4068
        %6317 = vmatpush.bf16.msra.mxu0 %v4041
        %6318 = vmatpush.bf16.msra.mxu0 %v4014
        %6319 = vmatmul.bf16.gmra.mxu0 %v309
        %v6320 = vpop.f32.mrf.mxu0
        %v6321 = vadd.f32 %v1254, %v6320
        %v6322 = vpop.f32.mrf.mxu0
        %6323 = vdwg.mxu0
        %6324 = vmatpush.bf16.msra.mxu0 %v4419
        %6325 = vmatpush.bf16.msra.mxu0 %v4392
        %6326 = vmatpush.bf16.msra.mxu0 %v4365
        %6327 = vmatpush.bf16.msra.mxu0 %v4338
        %6328 = vmatpush.bf16.msra.mxu0 %v4311
        %6329 = vmatpush.bf16.msra.mxu0 %v4284
        %6330 = vmatpush.bf16.msra.mxu0 %v4257
        %6331 = vmatpush.bf16.msra.mxu0 %v4230
        %6332 = vmatmul.bf16.gmra.mxu0 %v310
        %v6333 = vpop.f32.mrf.mxu0
        %v6334 = vadd.f32 %v6321, %v6333
        %v6335 = vpop.f32.mrf.mxu0
        %6336 = vdwg.mxu0
        %6337 = vmatpush.bf16.msra.mxu0 %v4635
        %6338 = vmatpush.bf16.msra.mxu0 %v4608
        %6339 = vmatpush.bf16.msra.mxu0 %v4581
        %6340 = vmatpush.bf16.msra.mxu0 %v4554
        %6341 = vmatpush.bf16.msra.mxu0 %v4527
        %6342 = vmatpush.bf16.msra.mxu0 %v4500
        %6343 = vmatpush.bf16.msra.mxu0 %v4473
        %6344 = vmatpush.bf16.msra.mxu0 %v4446
        %6345 = vmatmul.bf16.gmra.mxu0 %v311
        %v6346 = vpop.f32.mrf.mxu0
        %v6347 = vadd.f32 %v6334, %v6346
        %v6348 = vpop.f32.mrf.mxu0
        %6349 = vdwg.mxu0
        %6350 = vmatpush.bf16.msra.mxu0 %v4851
        %6351 = vmatpush.bf16.msra.mxu0 %v4824
        %6352 = vmatpush.bf16.msra.mxu0 %v4797
        %6353 = vmatpush.bf16.msra.mxu0 %v4770
        %6354 = vmatpush.bf16.msra.mxu0 %v4743
        %6355 = vmatpush.bf16.msra.mxu0 %v4716
        %6356 = vmatpush.bf16.msra.mxu0 %v4689
        %6357 = vmatpush.bf16.msra.mxu0 %v4662
        %6358 = vmatmul.bf16.gmra.mxu0 %v312
        %v6359 = vpop.f32.mrf.mxu0
        %v6360 = vadd.f32 %v6347, %v6359
        %v6361 = vpop.f32.mrf.mxu0
        %6362 = vdwg.mxu0
        %6363 = vmatpush.bf16.msra.mxu0 0
        %6364 = vmatpush.bf16.msra.mxu0 0
        %6365 = vmatpush.bf16.msra.mxu0 0
        %6366 = vmatpush.bf16.msra.mxu0 0
        %6367 = vmatpush.bf16.msra.mxu0 0
        %6368 = vmatpush.bf16.msra.mxu0 0
        %6369 = vmatpush.bf16.msra.mxu0 0
        %6370 = vmatpush.bf16.msra.mxu0 %v4878
        %6371 = vmatmul.bf16.gmra.mxu0 %v5789
        %v6372 = vpop.f32.mrf.mxu0
        %v6373 = vadd.f32 %v6360, %v6372
        %v6374 = vpop.f32.mrf.mxu0
        %6375 = vdwg.mxu0
        %6376 = vmatpush.bf16.msra.mxu0 %v4204
        %6377 = vmatpush.bf16.msra.mxu0 %v4177
        %6378 = vmatpush.bf16.msra.mxu0 %v4150
        %6379 = vmatpush.bf16.msra.mxu0 %v4123
        %6380 = vmatpush.bf16.msra.mxu0 %v4096
        %6381 = vmatpush.bf16.msra.mxu0 %v4069
        %6382 = vmatpush.bf16.msra.mxu0 %v4042
        %6383 = vmatpush.bf16.msra.mxu0 %v4015
        %6384 = vmatmul.bf16.gmra.mxu0 %v309
        %v6385 = vpop.f32.mrf.mxu0
        %v6386 = vadd.f32 %v1255, %v6385
        %v6387 = vpop.f32.mrf.mxu0
        %6388 = vdwg.mxu0
        %6389 = vmatpush.bf16.msra.mxu0 %v4420
        %6390 = vmatpush.bf16.msra.mxu0 %v4393
        %6391 = vmatpush.bf16.msra.mxu0 %v4366
        %6392 = vmatpush.bf16.msra.mxu0 %v4339
        %6393 = vmatpush.bf16.msra.mxu0 %v4312
        %6394 = vmatpush.bf16.msra.mxu0 %v4285
        %6395 = vmatpush.bf16.msra.mxu0 %v4258
        %6396 = vmatpush.bf16.msra.mxu0 %v4231
        %6397 = vmatmul.bf16.gmra.mxu0 %v310
        %v6398 = vpop.f32.mrf.mxu0
        %v6399 = vadd.f32 %v6386, %v6398
        %v6400 = vpop.f32.mrf.mxu0
        %6401 = vdwg.mxu0
        %6402 = vmatpush.bf16.msra.mxu0 %v4636
        %6403 = vmatpush.bf16.msra.mxu0 %v4609
        %6404 = vmatpush.bf16.msra.mxu0 %v4582
        %6405 = vmatpush.bf16.msra.mxu0 %v4555
        %6406 = vmatpush.bf16.msra.mxu0 %v4528
        %6407 = vmatpush.bf16.msra.mxu0 %v4501
        %6408 = vmatpush.bf16.msra.mxu0 %v4474
        %6409 = vmatpush.bf16.msra.mxu0 %v4447
        %6410 = vmatmul.bf16.gmra.mxu0 %v311
        %v6411 = vpop.f32.mrf.mxu0
        %v6412 = vadd.f32 %v6399, %v6411
        %v6413 = vpop.f32.mrf.mxu0
        %6414 = vdwg.mxu0
        %6415 = vmatpush.bf16.msra.mxu0 %v4852
        %6416 = vmatpush.bf16.msra.mxu0 %v4825
        %6417 = vmatpush.bf16.msra.mxu0 %v4798
        %6418 = vmatpush.bf16.msra.mxu0 %v4771
        %6419 = vmatpush.bf16.msra.mxu0 %v4744
        %6420 = vmatpush.bf16.msra.mxu0 %v4717
        %6421 = vmatpush.bf16.msra.mxu0 %v4690
        %6422 = vmatpush.bf16.msra.mxu0 %v4663
        %6423 = vmatmul.bf16.gmra.mxu0 %v312
        %v6424 = vpop.f32.mrf.mxu0
        %v6425 = vadd.f32 %v6412, %v6424
        %v6426 = vpop.f32.mrf.mxu0
        %6427 = vdwg.mxu0
        %6428 = vmatpush.bf16.msra.mxu0 0
        %6429 = vmatpush.bf16.msra.mxu0 0
        %6430 = vmatpush.bf16.msra.mxu0 0
        %6431 = vmatpush.bf16.msra.mxu0 0
        %6432 = vmatpush.bf16.msra.mxu0 0
        %6433 = vmatpush.bf16.msra.mxu0 0
        %6434 = vmatpush.bf16.msra.mxu0 0
        %6435 = vmatpush.bf16.msra.mxu0 %v4879
        %6436 = vmatmul.bf16.gmra.mxu0 %v5789
        %v6437 = vpop.f32.mrf.mxu0
        %v6438 = vadd.f32 %v6425, %v6437
        %v6439 = vpop.f32.mrf.mxu0
        %6440 = vdwg.mxu0
        %6441 = vmatpush.bf16.msra.mxu0 %v4205
        %6442 = vmatpush.bf16.msra.mxu0 %v4178
        %6443 = vmatpush.bf16.msra.mxu0 %v4151
        %6444 = vmatpush.bf16.msra.mxu0 %v4124
        %6445 = vmatpush.bf16.msra.mxu0 %v4097
        %6446 = vmatpush.bf16.msra.mxu0 %v4070
        %6447 = vmatpush.bf16.msra.mxu0 %v4043
        %6448 = vmatpush.bf16.msra.mxu0 %v4016
        %6449 = vmatmul.bf16.gmra.mxu0 %v309
        %v6450 = vpop.f32.mrf.mxu0
        %v6451 = vadd.f32 %v1256, %v6450
        %v6452 = vpop.f32.mrf.mxu0
        %6453 = vdwg.mxu0
        %6454 = vmatpush.bf16.msra.mxu0 %v4421
        %6455 = vmatpush.bf16.msra.mxu0 %v4394
        %6456 = vmatpush.bf16.msra.mxu0 %v4367
        %6457 = vmatpush.bf16.msra.mxu0 %v4340
        %6458 = vmatpush.bf16.msra.mxu0 %v4313
        %6459 = vmatpush.bf16.msra.mxu0 %v4286
        %6460 = vmatpush.bf16.msra.mxu0 %v4259
        %6461 = vmatpush.bf16.msra.mxu0 %v4232
        %6462 = vmatmul.bf16.gmra.mxu0 %v310
        %v6463 = vpop.f32.mrf.mxu0
        %v6464 = vadd.f32 %v6451, %v6463
        %v6465 = vpop.f32.mrf.mxu0
        %6466 = vdwg.mxu0
        %6467 = vmatpush.bf16.msra.mxu0 %v4637
        %6468 = vmatpush.bf16.msra.mxu0 %v4610
        %6469 = vmatpush.bf16.msra.mxu0 %v4583
        %6470 = vmatpush.bf16.msra.mxu0 %v4556
        %6471 = vmatpush.bf16.msra.mxu0 %v4529
        %6472 = vmatpush.bf16.msra.mxu0 %v4502
        %6473 = vmatpush.bf16.msra.mxu0 %v4475
        %6474 = vmatpush.bf16.msra.mxu0 %v4448
        %6475 = vmatmul.bf16.gmra.mxu0 %v311
        %v6476 = vpop.f32.mrf.mxu0
        %v6477 = vadd.f32 %v6464, %v6476
        %v6478 = vpop.f32.mrf.mxu0
        %6479 = vdwg.mxu0
        %6480 = vmatpush.bf16.msra.mxu0 %v4853
        %6481 = vmatpush.bf16.msra.mxu0 %v4826
        %6482 = vmatpush.bf16.msra.mxu0 %v4799
        %6483 = vmatpush.bf16.msra.mxu0 %v4772
        %6484 = vmatpush.bf16.msra.mxu0 %v4745
        %6485 = vmatpush.bf16.msra.mxu0 %v4718
        %6486 = vmatpush.bf16.msra.mxu0 %v4691
        %6487 = vmatpush.bf16.msra.mxu0 %v4664
        %6488 = vmatmul.bf16.gmra.mxu0 %v312
        %v6489 = vpop.f32.mrf.mxu0
        %v6490 = vadd.f32 %v6477, %v6489
        %v6491 = vpop.f32.mrf.mxu0
        %6492 = vdwg.mxu0
        %6493 = vmatpush.bf16.msra.mxu0 0
        %6494 = vmatpush.bf16.msra.mxu0 0
        %6495 = vmatpush.bf16.msra.mxu0 0
        %6496 = vmatpush.bf16.msra.mxu0 0
        %6497 = vmatpush.bf16.msra.mxu0 0
        %6498 = vmatpush.bf16.msra.mxu0 0
        %6499 = vmatpush.bf16.msra.mxu0 0
        %6500 = vmatpush.bf16.msra.mxu0 %v4880
        %6501 = vmatmul.bf16.gmra.mxu0 %v5789
        %v6502 = vpop.f32.mrf.mxu0
        %v6503 = vadd.f32 %v6490, %v6502
        %v6504 = vpop.f32.mrf.mxu0
        %6505 = vdwg.mxu0
        %6506 = vmatpush.bf16.msra.mxu0 %v4206
        %6507 = vmatpush.bf16.msra.mxu0 %v4179
        %6508 = vmatpush.bf16.msra.mxu0 %v4152
        %6509 = vmatpush.bf16.msra.mxu0 %v4125
        %6510 = vmatpush.bf16.msra.mxu0 %v4098
        %6511 = vmatpush.bf16.msra.mxu0 %v4071
        %6512 = vmatpush.bf16.msra.mxu0 %v4044
        %6513 = vmatpush.bf16.msra.mxu0 %v4017
        %6514 = vmatmul.bf16.gmra.mxu0 %v309
        %v6515 = vpop.f32.mrf.mxu0
        %v6516 = vadd.f32 %v1257, %v6515
        %v6517 = vpop.f32.mrf.mxu0
        %6518 = vdwg.mxu0
        %6519 = vmatpush.bf16.msra.mxu0 %v4422
        %6520 = vmatpush.bf16.msra.mxu0 %v4395
        %6521 = vmatpush.bf16.msra.mxu0 %v4368
        %6522 = vmatpush.bf16.msra.mxu0 %v4341
        %6523 = vmatpush.bf16.msra.mxu0 %v4314
        %6524 = vmatpush.bf16.msra.mxu0 %v4287
        %6525 = vmatpush.bf16.msra.mxu0 %v4260
        %6526 = vmatpush.bf16.msra.mxu0 %v4233
        %6527 = vmatmul.bf16.gmra.mxu0 %v310
        %v6528 = vpop.f32.mrf.mxu0
        %v6529 = vadd.f32 %v6516, %v6528
        %v6530 = vpop.f32.mrf.mxu0
        %6531 = vdwg.mxu0
        %6532 = vmatpush.bf16.msra.mxu0 %v4638
        %6533 = vmatpush.bf16.msra.mxu0 %v4611
        %6534 = vmatpush.bf16.msra.mxu0 %v4584
        %6535 = vmatpush.bf16.msra.mxu0 %v4557
        %6536 = vmatpush.bf16.msra.mxu0 %v4530
        %6537 = vmatpush.bf16.msra.mxu0 %v4503
        %6538 = vmatpush.bf16.msra.mxu0 %v4476
        %6539 = vmatpush.bf16.msra.mxu0 %v4449
        %6540 = vmatmul.bf16.gmra.mxu0 %v311
        %v6541 = vpop.f32.mrf.mxu0
        %v6542 = vadd.f32 %v6529, %v6541
        %v6543 = vpop.f32.mrf.mxu0
        %6544 = vdwg.mxu0
        %6545 = vmatpush.bf16.msra.mxu0 %v4854
        %6546 = vmatpush.bf16.msra.mxu0 %v4827
        %6547 = vmatpush.bf16.msra.mxu0 %v4800
        %6548 = vmatpush.bf16.msra.mxu0 %v4773
        %6549 = vmatpush.bf16.msra.mxu0 %v4746
        %6550 = vmatpush.bf16.msra.mxu0 %v4719
        %6551 = vmatpush.bf16.msra.mxu0 %v4692
        %6552 = vmatpush.bf16.msra.mxu0 %v4665
        %6553 = vmatmul.bf16.gmra.mxu0 %v312
        %v6554 = vpop.f32.mrf.mxu0
        %v6555 = vadd.f32 %v6542, %v6554
        %v6556 = vpop.f32.mrf.mxu0
        %6557 = vdwg.mxu0
        %6558 = vmatpush.bf16.msra.mxu0 0
        %6559 = vmatpush.bf16.msra.mxu0 0
        %6560 = vmatpush.bf16.msra.mxu0 0
        %6561 = vmatpush.bf16.msra.mxu0 0
        %6562 = vmatpush.bf16.msra.mxu0 0
        %6563 = vmatpush.bf16.msra.mxu0 0
        %6564 = vmatpush.bf16.msra.mxu0 0
        %6565 = vmatpush.bf16.msra.mxu0 %v4881
        %6566 = vmatmul.bf16.gmra.mxu0 %v5789
        %v6567 = vpop.f32.mrf.mxu0
        %v6568 = vadd.f32 %v6555, %v6567
        %v6569 = vpop.f32.mrf.mxu0
        %6570 = vdwg.mxu0
        %6571 = vmatpush.bf16.msra.mxu0 %v4207
        %6572 = vmatpush.bf16.msra.mxu0 %v4180
        %6573 = vmatpush.bf16.msra.mxu0 %v4153
        %6574 = vmatpush.bf16.msra.mxu0 %v4126
        %6575 = vmatpush.bf16.msra.mxu0 %v4099
        %6576 = vmatpush.bf16.msra.mxu0 %v4072
        %6577 = vmatpush.bf16.msra.mxu0 %v4045
        %6578 = vmatpush.bf16.msra.mxu0 %v4018
        %6579 = vmatmul.bf16.gmra.mxu0 %v309
        %v6580 = vpop.f32.mrf.mxu0
        %v6581 = vadd.f32 %v1258, %v6580
        %v6582 = vpop.f32.mrf.mxu0
        %6583 = vdwg.mxu0
        %6584 = vmatpush.bf16.msra.mxu0 %v4423
        %6585 = vmatpush.bf16.msra.mxu0 %v4396
        %6586 = vmatpush.bf16.msra.mxu0 %v4369
        %6587 = vmatpush.bf16.msra.mxu0 %v4342
        %6588 = vmatpush.bf16.msra.mxu0 %v4315
        %6589 = vmatpush.bf16.msra.mxu0 %v4288
        %6590 = vmatpush.bf16.msra.mxu0 %v4261
        %6591 = vmatpush.bf16.msra.mxu0 %v4234
        %6592 = vmatmul.bf16.gmra.mxu0 %v310
        %v6593 = vpop.f32.mrf.mxu0
        %v6594 = vadd.f32 %v6581, %v6593
        %v6595 = vpop.f32.mrf.mxu0
        %6596 = vdwg.mxu0
        %6597 = vmatpush.bf16.msra.mxu0 %v4639
        %6598 = vmatpush.bf16.msra.mxu0 %v4612
        %6599 = vmatpush.bf16.msra.mxu0 %v4585
        %6600 = vmatpush.bf16.msra.mxu0 %v4558
        %6601 = vmatpush.bf16.msra.mxu0 %v4531
        %6602 = vmatpush.bf16.msra.mxu0 %v4504
        %6603 = vmatpush.bf16.msra.mxu0 %v4477
        %6604 = vmatpush.bf16.msra.mxu0 %v4450
        %6605 = vmatmul.bf16.gmra.mxu0 %v311
        %v6606 = vpop.f32.mrf.mxu0
        %v6607 = vadd.f32 %v6594, %v6606
        %v6608 = vpop.f32.mrf.mxu0
        %6609 = vdwg.mxu0
        %6610 = vmatpush.bf16.msra.mxu0 %v4855
        %6611 = vmatpush.bf16.msra.mxu0 %v4828
        %6612 = vmatpush.bf16.msra.mxu0 %v4801
        %6613 = vmatpush.bf16.msra.mxu0 %v4774
        %6614 = vmatpush.bf16.msra.mxu0 %v4747
        %6615 = vmatpush.bf16.msra.mxu0 %v4720
        %6616 = vmatpush.bf16.msra.mxu0 %v4693
        %6617 = vmatpush.bf16.msra.mxu0 %v4666
        %6618 = vmatmul.bf16.gmra.mxu0 %v312
        %v6619 = vpop.f32.mrf.mxu0
        %v6620 = vadd.f32 %v6607, %v6619
        %v6621 = vpop.f32.mrf.mxu0
        %6622 = vdwg.mxu0
        %6623 = vmatpush.bf16.msra.mxu0 0
        %6624 = vmatpush.bf16.msra.mxu0 0
        %6625 = vmatpush.bf16.msra.mxu0 0
        %6626 = vmatpush.bf16.msra.mxu0 0
        %6627 = vmatpush.bf16.msra.mxu0 0
        %6628 = vmatpush.bf16.msra.mxu0 0
        %6629 = vmatpush.bf16.msra.mxu0 0
        %6630 = vmatpush.bf16.msra.mxu0 %v4882
        %6631 = vmatmul.bf16.gmra.mxu0 %v5789
        %v6632 = vpop.f32.mrf.mxu0
        %v6633 = vadd.f32 %v6620, %v6632
        %v6634 = vpop.f32.mrf.mxu0
        %6635 = vdwg.mxu0
        %6636 = vmatpush.bf16.msra.mxu0 %v4208
        %6637 = vmatpush.bf16.msra.mxu0 %v4181
        %6638 = vmatpush.bf16.msra.mxu0 %v4154
        %6639 = vmatpush.bf16.msra.mxu0 %v4127
        %6640 = vmatpush.bf16.msra.mxu0 %v4100
        %6641 = vmatpush.bf16.msra.mxu0 %v4073
        %6642 = vmatpush.bf16.msra.mxu0 %v4046
        %6643 = vmatpush.bf16.msra.mxu0 %v4019
        %6644 = vmatmul.bf16.gmra.mxu0 %v309
        %v6645 = vpop.f32.mrf.mxu0
        %v6646 = vadd.f32 %v1259, %v6645
        %v6647 = vpop.f32.mrf.mxu0
        %6648 = vdwg.mxu0
        %6649 = vmatpush.bf16.msra.mxu0 %v4424
        %6650 = vmatpush.bf16.msra.mxu0 %v4397
        %6651 = vmatpush.bf16.msra.mxu0 %v4370
        %6652 = vmatpush.bf16.msra.mxu0 %v4343
        %6653 = vmatpush.bf16.msra.mxu0 %v4316
        %6654 = vmatpush.bf16.msra.mxu0 %v4289
        %6655 = vmatpush.bf16.msra.mxu0 %v4262
        %6656 = vmatpush.bf16.msra.mxu0 %v4235
        %6657 = vmatmul.bf16.gmra.mxu0 %v310
        %v6658 = vpop.f32.mrf.mxu0
        %v6659 = vadd.f32 %v6646, %v6658
        %v6660 = vpop.f32.mrf.mxu0
        %6661 = vdwg.mxu0
        %6662 = vmatpush.bf16.msra.mxu0 %v4640
        %6663 = vmatpush.bf16.msra.mxu0 %v4613
        %6664 = vmatpush.bf16.msra.mxu0 %v4586
        %6665 = vmatpush.bf16.msra.mxu0 %v4559
        %6666 = vmatpush.bf16.msra.mxu0 %v4532
        %6667 = vmatpush.bf16.msra.mxu0 %v4505
        %6668 = vmatpush.bf16.msra.mxu0 %v4478
        %6669 = vmatpush.bf16.msra.mxu0 %v4451
        %6670 = vmatmul.bf16.gmra.mxu0 %v311
        %v6671 = vpop.f32.mrf.mxu0
        %v6672 = vadd.f32 %v6659, %v6671
        %v6673 = vpop.f32.mrf.mxu0
        %6674 = vdwg.mxu0
        %6675 = vmatpush.bf16.msra.mxu0 %v4856
        %6676 = vmatpush.bf16.msra.mxu0 %v4829
        %6677 = vmatpush.bf16.msra.mxu0 %v4802
        %6678 = vmatpush.bf16.msra.mxu0 %v4775
        %6679 = vmatpush.bf16.msra.mxu0 %v4748
        %6680 = vmatpush.bf16.msra.mxu0 %v4721
        %6681 = vmatpush.bf16.msra.mxu0 %v4694
        %6682 = vmatpush.bf16.msra.mxu0 %v4667
        %6683 = vmatmul.bf16.gmra.mxu0 %v312
        %v6684 = vpop.f32.mrf.mxu0
        %v6685 = vadd.f32 %v6672, %v6684
        %v6686 = vpop.f32.mrf.mxu0
        %6687 = vdwg.mxu0
        %6688 = vmatpush.bf16.msra.mxu0 0
        %6689 = vmatpush.bf16.msra.mxu0 0
        %6690 = vmatpush.bf16.msra.mxu0 0
        %6691 = vmatpush.bf16.msra.mxu0 0
        %6692 = vmatpush.bf16.msra.mxu0 0
        %6693 = vmatpush.bf16.msra.mxu0 0
        %6694 = vmatpush.bf16.msra.mxu0 0
        %6695 = vmatpush.bf16.msra.mxu0 %v4883
        %6696 = vmatmul.bf16.gmra.mxu0 %v5789
        %v6697 = vpop.f32.mrf.mxu0
        %v6698 = vadd.f32 %v6685, %v6697
        %v6699 = vpop.f32.mrf.mxu0
        %6700 = vdwg.mxu0
        %6701 = vmatpush.bf16.msra.mxu0 %v4209
        %6702 = vmatpush.bf16.msra.mxu0 %v4182
        %6703 = vmatpush.bf16.msra.mxu0 %v4155
        %6704 = vmatpush.bf16.msra.mxu0 %v4128
        %6705 = vmatpush.bf16.msra.mxu0 %v4101
        %6706 = vmatpush.bf16.msra.mxu0 %v4074
        %6707 = vmatpush.bf16.msra.mxu0 %v4047
        %6708 = vmatpush.bf16.msra.mxu0 %v4020
        %6709 = vmatmul.bf16.gmra.mxu0 %v309
        %v6710 = vpop.f32.mrf.mxu0
        %v6711 = vadd.f32 %v1260, %v6710
        %v6712 = vpop.f32.mrf.mxu0
        %6713 = vdwg.mxu0
        %6714 = vmatpush.bf16.msra.mxu0 %v4425
        %6715 = vmatpush.bf16.msra.mxu0 %v4398
        %6716 = vmatpush.bf16.msra.mxu0 %v4371
        %6717 = vmatpush.bf16.msra.mxu0 %v4344
        %6718 = vmatpush.bf16.msra.mxu0 %v4317
        %6719 = vmatpush.bf16.msra.mxu0 %v4290
        %6720 = vmatpush.bf16.msra.mxu0 %v4263
        %6721 = vmatpush.bf16.msra.mxu0 %v4236
        %6722 = vmatmul.bf16.gmra.mxu0 %v310
        %v6723 = vpop.f32.mrf.mxu0
        %v6724 = vadd.f32 %v6711, %v6723
        %v6725 = vpop.f32.mrf.mxu0
        %6726 = vdwg.mxu0
        %6727 = vmatpush.bf16.msra.mxu0 %v4641
        %6728 = vmatpush.bf16.msra.mxu0 %v4614
        %6729 = vmatpush.bf16.msra.mxu0 %v4587
        %6730 = vmatpush.bf16.msra.mxu0 %v4560
        %6731 = vmatpush.bf16.msra.mxu0 %v4533
        %6732 = vmatpush.bf16.msra.mxu0 %v4506
        %6733 = vmatpush.bf16.msra.mxu0 %v4479
        %6734 = vmatpush.bf16.msra.mxu0 %v4452
        %6735 = vmatmul.bf16.gmra.mxu0 %v311
        %v6736 = vpop.f32.mrf.mxu0
        %v6737 = vadd.f32 %v6724, %v6736
        %v6738 = vpop.f32.mrf.mxu0
        %6739 = vdwg.mxu0
        %6740 = vmatpush.bf16.msra.mxu0 %v4857
        %6741 = vmatpush.bf16.msra.mxu0 %v4830
        %6742 = vmatpush.bf16.msra.mxu0 %v4803
        %6743 = vmatpush.bf16.msra.mxu0 %v4776
        %6744 = vmatpush.bf16.msra.mxu0 %v4749
        %6745 = vmatpush.bf16.msra.mxu0 %v4722
        %6746 = vmatpush.bf16.msra.mxu0 %v4695
        %6747 = vmatpush.bf16.msra.mxu0 %v4668
        %6748 = vmatmul.bf16.gmra.mxu0 %v312
        %v6749 = vpop.f32.mrf.mxu0
        %v6750 = vadd.f32 %v6737, %v6749
        %v6751 = vpop.f32.mrf.mxu0
        %6752 = vdwg.mxu0
        %6753 = vmatpush.bf16.msra.mxu0 0
        %6754 = vmatpush.bf16.msra.mxu0 0
        %6755 = vmatpush.bf16.msra.mxu0 0
        %6756 = vmatpush.bf16.msra.mxu0 0
        %6757 = vmatpush.bf16.msra.mxu0 0
        %6758 = vmatpush.bf16.msra.mxu0 0
        %6759 = vmatpush.bf16.msra.mxu0 0
        %6760 = vmatpush.bf16.msra.mxu0 %v4884
        %6761 = vmatmul.bf16.gmra.mxu0 %v5789
        %v6762 = vpop.f32.mrf.mxu0
        %v6763 = vadd.f32 %v6750, %v6762
        %v6764 = vpop.f32.mrf.mxu0
        %6765 = vdwg.mxu0
        %6766 = vmatpush.bf16.msra.mxu0 %v4210
        %6767 = vmatpush.bf16.msra.mxu0 %v4183
        %6768 = vmatpush.bf16.msra.mxu0 %v4156
        %6769 = vmatpush.bf16.msra.mxu0 %v4129
        %6770 = vmatpush.bf16.msra.mxu0 %v4102
        %6771 = vmatpush.bf16.msra.mxu0 %v4075
        %6772 = vmatpush.bf16.msra.mxu0 %v4048
        %6773 = vmatpush.bf16.msra.mxu0 %v4021
        %6774 = vmatmul.bf16.gmra.mxu0 %v309
        %v6775 = vpop.f32.mrf.mxu0
        %v6776 = vadd.f32 %v1261, %v6775
        %v6777 = vpop.f32.mrf.mxu0
        %6778 = vdwg.mxu0
        %6779 = vmatpush.bf16.msra.mxu0 %v4426
        %6780 = vmatpush.bf16.msra.mxu0 %v4399
        %6781 = vmatpush.bf16.msra.mxu0 %v4372
        %6782 = vmatpush.bf16.msra.mxu0 %v4345
        %6783 = vmatpush.bf16.msra.mxu0 %v4318
        %6784 = vmatpush.bf16.msra.mxu0 %v4291
        %6785 = vmatpush.bf16.msra.mxu0 %v4264
        %6786 = vmatpush.bf16.msra.mxu0 %v4237
        %6787 = vmatmul.bf16.gmra.mxu0 %v310
        %v6788 = vpop.f32.mrf.mxu0
        %v6789 = vadd.f32 %v6776, %v6788
        %v6790 = vpop.f32.mrf.mxu0
        %6791 = vdwg.mxu0
        %6792 = vmatpush.bf16.msra.mxu0 %v4642
        %6793 = vmatpush.bf16.msra.mxu0 %v4615
        %6794 = vmatpush.bf16.msra.mxu0 %v4588
        %6795 = vmatpush.bf16.msra.mxu0 %v4561
        %6796 = vmatpush.bf16.msra.mxu0 %v4534
        %6797 = vmatpush.bf16.msra.mxu0 %v4507
        %6798 = vmatpush.bf16.msra.mxu0 %v4480
        %6799 = vmatpush.bf16.msra.mxu0 %v4453
        %6800 = vmatmul.bf16.gmra.mxu0 %v311
        %v6801 = vpop.f32.mrf.mxu0
        %v6802 = vadd.f32 %v6789, %v6801
        %v6803 = vpop.f32.mrf.mxu0
        %6804 = vdwg.mxu0
        %6805 = vmatpush.bf16.msra.mxu0 %v4858
        %6806 = vmatpush.bf16.msra.mxu0 %v4831
        %6807 = vmatpush.bf16.msra.mxu0 %v4804
        %6808 = vmatpush.bf16.msra.mxu0 %v4777
        %6809 = vmatpush.bf16.msra.mxu0 %v4750
        %6810 = vmatpush.bf16.msra.mxu0 %v4723
        %6811 = vmatpush.bf16.msra.mxu0 %v4696
        %6812 = vmatpush.bf16.msra.mxu0 %v4669
        %6813 = vmatmul.bf16.gmra.mxu0 %v312
        %v6814 = vpop.f32.mrf.mxu0
        %v6815 = vadd.f32 %v6802, %v6814
        %v6816 = vpop.f32.mrf.mxu0
        %6817 = vdwg.mxu0
        %6818 = vmatpush.bf16.msra.mxu0 0
        %6819 = vmatpush.bf16.msra.mxu0 0
        %6820 = vmatpush.bf16.msra.mxu0 0
        %6821 = vmatpush.bf16.msra.mxu0 0
        %6822 = vmatpush.bf16.msra.mxu0 0
        %6823 = vmatpush.bf16.msra.mxu0 0
        %6824 = vmatpush.bf16.msra.mxu0 0
        %6825 = vmatpush.bf16.msra.mxu0 %v4885
        %6826 = vmatmul.bf16.gmra.mxu0 %v5789
        %v6827 = vpop.f32.mrf.mxu0
        %v6828 = vadd.f32 %v6815, %v6827
        %v6829 = vpop.f32.mrf.mxu0
        %6830 = vdwg.mxu0
        %6831 = vmatpush.bf16.msra.mxu0 %v4211
        %6832 = vmatpush.bf16.msra.mxu0 %v4184
        %6833 = vmatpush.bf16.msra.mxu0 %v4157
        %6834 = vmatpush.bf16.msra.mxu0 %v4130
        %6835 = vmatpush.bf16.msra.mxu0 %v4103
        %6836 = vmatpush.bf16.msra.mxu0 %v4076
        %6837 = vmatpush.bf16.msra.mxu0 %v4049
        %6838 = vmatpush.bf16.msra.mxu0 %v4022
        %6839 = vmatmul.bf16.gmra.mxu0 %v309
        %v6840 = vpop.f32.mrf.mxu0
        %v6841 = vadd.f32 %v1262, %v6840
        %v6842 = vpop.f32.mrf.mxu0
        %6843 = vdwg.mxu0
        %6844 = vmatpush.bf16.msra.mxu0 %v4427
        %6845 = vmatpush.bf16.msra.mxu0 %v4400
        %6846 = vmatpush.bf16.msra.mxu0 %v4373
        %6847 = vmatpush.bf16.msra.mxu0 %v4346
        %6848 = vmatpush.bf16.msra.mxu0 %v4319
        %6849 = vmatpush.bf16.msra.mxu0 %v4292
        %6850 = vmatpush.bf16.msra.mxu0 %v4265
        %6851 = vmatpush.bf16.msra.mxu0 %v4238
        %6852 = vmatmul.bf16.gmra.mxu0 %v310
        %v6853 = vpop.f32.mrf.mxu0
        %v6854 = vadd.f32 %v6841, %v6853
        %v6855 = vpop.f32.mrf.mxu0
        %6856 = vdwg.mxu0
        %6857 = vmatpush.bf16.msra.mxu0 %v4643
        %6858 = vmatpush.bf16.msra.mxu0 %v4616
        %6859 = vmatpush.bf16.msra.mxu0 %v4589
        %6860 = vmatpush.bf16.msra.mxu0 %v4562
        %6861 = vmatpush.bf16.msra.mxu0 %v4535
        %6862 = vmatpush.bf16.msra.mxu0 %v4508
        %6863 = vmatpush.bf16.msra.mxu0 %v4481
        %6864 = vmatpush.bf16.msra.mxu0 %v4454
        %6865 = vmatmul.bf16.gmra.mxu0 %v311
        %v6866 = vpop.f32.mrf.mxu0
        %v6867 = vadd.f32 %v6854, %v6866
        %v6868 = vpop.f32.mrf.mxu0
        %6869 = vdwg.mxu0
        %6870 = vmatpush.bf16.msra.mxu0 %v4859
        %6871 = vmatpush.bf16.msra.mxu0 %v4832
        %6872 = vmatpush.bf16.msra.mxu0 %v4805
        %6873 = vmatpush.bf16.msra.mxu0 %v4778
        %6874 = vmatpush.bf16.msra.mxu0 %v4751
        %6875 = vmatpush.bf16.msra.mxu0 %v4724
        %6876 = vmatpush.bf16.msra.mxu0 %v4697
        %6877 = vmatpush.bf16.msra.mxu0 %v4670
        %6878 = vmatmul.bf16.gmra.mxu0 %v312
        %v6879 = vpop.f32.mrf.mxu0
        %v6880 = vadd.f32 %v6867, %v6879
        %v6881 = vpop.f32.mrf.mxu0
        %6882 = vdwg.mxu0
        %6883 = vmatpush.bf16.msra.mxu0 0
        %6884 = vmatpush.bf16.msra.mxu0 0
        %6885 = vmatpush.bf16.msra.mxu0 0
        %6886 = vmatpush.bf16.msra.mxu0 0
        %6887 = vmatpush.bf16.msra.mxu0 0
        %6888 = vmatpush.bf16.msra.mxu0 0
        %6889 = vmatpush.bf16.msra.mxu0 0
        %6890 = vmatpush.bf16.msra.mxu0 %v4886
        %6891 = vmatmul.bf16.gmra.mxu0 %v5789
        %v6892 = vpop.f32.mrf.mxu0
        %v6893 = vadd.f32 %v6880, %v6892
        %v6894 = vpop.f32.mrf.mxu0
        %6895 = vdwg.mxu0
        %6896 = vmatpush.bf16.msra.mxu0 %v4212
        %6897 = vmatpush.bf16.msra.mxu0 %v4185
        %6898 = vmatpush.bf16.msra.mxu0 %v4158
        %6899 = vmatpush.bf16.msra.mxu0 %v4131
        %6900 = vmatpush.bf16.msra.mxu0 %v4104
        %6901 = vmatpush.bf16.msra.mxu0 %v4077
        %6902 = vmatpush.bf16.msra.mxu0 %v4050
        %6903 = vmatpush.bf16.msra.mxu0 %v4023
        %6904 = vmatmul.bf16.gmra.mxu0 %v309
        %v6905 = vpop.f32.mrf.mxu0
        %v6906 = vadd.f32 %v1263, %v6905
        %v6907 = vpop.f32.mrf.mxu0
        %6908 = vdwg.mxu0
        %6909 = vmatpush.bf16.msra.mxu0 %v4428
        %6910 = vmatpush.bf16.msra.mxu0 %v4401
        %6911 = vmatpush.bf16.msra.mxu0 %v4374
        %6912 = vmatpush.bf16.msra.mxu0 %v4347
        %6913 = vmatpush.bf16.msra.mxu0 %v4320
        %6914 = vmatpush.bf16.msra.mxu0 %v4293
        %6915 = vmatpush.bf16.msra.mxu0 %v4266
        %6916 = vmatpush.bf16.msra.mxu0 %v4239
        %6917 = vmatmul.bf16.gmra.mxu0 %v310
        %v6918 = vpop.f32.mrf.mxu0
        %v6919 = vadd.f32 %v6906, %v6918
        %v6920 = vpop.f32.mrf.mxu0
        %6921 = vdwg.mxu0
        %6922 = vmatpush.bf16.msra.mxu0 %v4644
        %6923 = vmatpush.bf16.msra.mxu0 %v4617
        %6924 = vmatpush.bf16.msra.mxu0 %v4590
        %6925 = vmatpush.bf16.msra.mxu0 %v4563
        %6926 = vmatpush.bf16.msra.mxu0 %v4536
        %6927 = vmatpush.bf16.msra.mxu0 %v4509
        %6928 = vmatpush.bf16.msra.mxu0 %v4482
        %6929 = vmatpush.bf16.msra.mxu0 %v4455
        %6930 = vmatmul.bf16.gmra.mxu0 %v311
        %v6931 = vpop.f32.mrf.mxu0
        %v6932 = vadd.f32 %v6919, %v6931
        %v6933 = vpop.f32.mrf.mxu0
        %6934 = vdwg.mxu0
        %6935 = vmatpush.bf16.msra.mxu0 %v4860
        %6936 = vmatpush.bf16.msra.mxu0 %v4833
        %6937 = vmatpush.bf16.msra.mxu0 %v4806
        %6938 = vmatpush.bf16.msra.mxu0 %v4779
        %6939 = vmatpush.bf16.msra.mxu0 %v4752
        %6940 = vmatpush.bf16.msra.mxu0 %v4725
        %6941 = vmatpush.bf16.msra.mxu0 %v4698
        %6942 = vmatpush.bf16.msra.mxu0 %v4671
        %6943 = vmatmul.bf16.gmra.mxu0 %v312
        %v6944 = vpop.f32.mrf.mxu0
        %v6945 = vadd.f32 %v6932, %v6944
        %v6946 = vpop.f32.mrf.mxu0
        %6947 = vdwg.mxu0
        %6948 = vmatpush.bf16.msra.mxu0 0
        %6949 = vmatpush.bf16.msra.mxu0 0
        %6950 = vmatpush.bf16.msra.mxu0 0
        %6951 = vmatpush.bf16.msra.mxu0 0
        %6952 = vmatpush.bf16.msra.mxu0 0
        %6953 = vmatpush.bf16.msra.mxu0 0
        %6954 = vmatpush.bf16.msra.mxu0 0
        %6955 = vmatpush.bf16.msra.mxu0 %v4887
        %6956 = vmatmul.bf16.gmra.mxu0 %v5789
        %v6957 = vpop.f32.mrf.mxu0
        %v6958 = vadd.f32 %v6945, %v6957
        %v6959 = vpop.f32.mrf.mxu0
        %6960 = vdwg.mxu0
        %6961 = vmatpush.bf16.msra.mxu0 %v4213
        %6962 = vmatpush.bf16.msra.mxu0 %v4186
        %6963 = vmatpush.bf16.msra.mxu0 %v4159
        %6964 = vmatpush.bf16.msra.mxu0 %v4132
        %6965 = vmatpush.bf16.msra.mxu0 %v4105
        %6966 = vmatpush.bf16.msra.mxu0 %v4078
        %6967 = vmatpush.bf16.msra.mxu0 %v4051
        %6968 = vmatpush.bf16.msra.mxu0 %v4024
        %6969 = vmatmul.bf16.gmra.mxu0 %v309
        %v6970 = vpop.f32.mrf.mxu0
        %v6971 = vadd.f32 %v1264, %v6970
        %v6972 = vpop.f32.mrf.mxu0
        %6973 = vdwg.mxu0
        %6974 = vmatpush.bf16.msra.mxu0 %v4429
        %6975 = vmatpush.bf16.msra.mxu0 %v4402
        %6976 = vmatpush.bf16.msra.mxu0 %v4375
        %6977 = vmatpush.bf16.msra.mxu0 %v4348
        %6978 = vmatpush.bf16.msra.mxu0 %v4321
        %6979 = vmatpush.bf16.msra.mxu0 %v4294
        %6980 = vmatpush.bf16.msra.mxu0 %v4267
        %6981 = vmatpush.bf16.msra.mxu0 %v4240
        %6982 = vmatmul.bf16.gmra.mxu0 %v310
        %v6983 = vpop.f32.mrf.mxu0
        %v6984 = vadd.f32 %v6971, %v6983
        %v6985 = vpop.f32.mrf.mxu0
        %6986 = vdwg.mxu0
        %6987 = vmatpush.bf16.msra.mxu0 %v4645
        %6988 = vmatpush.bf16.msra.mxu0 %v4618
        %6989 = vmatpush.bf16.msra.mxu0 %v4591
        %6990 = vmatpush.bf16.msra.mxu0 %v4564
        %6991 = vmatpush.bf16.msra.mxu0 %v4537
        %6992 = vmatpush.bf16.msra.mxu0 %v4510
        %6993 = vmatpush.bf16.msra.mxu0 %v4483
        %6994 = vmatpush.bf16.msra.mxu0 %v4456
        %6995 = vmatmul.bf16.gmra.mxu0 %v311
        %v6996 = vpop.f32.mrf.mxu0
        %v6997 = vadd.f32 %v6984, %v6996
        %v6998 = vpop.f32.mrf.mxu0
        %6999 = vdwg.mxu0
        %7000 = vmatpush.bf16.msra.mxu0 %v4861
        %7001 = vmatpush.bf16.msra.mxu0 %v4834
        %7002 = vmatpush.bf16.msra.mxu0 %v4807
        %7003 = vmatpush.bf16.msra.mxu0 %v4780
        %7004 = vmatpush.bf16.msra.mxu0 %v4753
        %7005 = vmatpush.bf16.msra.mxu0 %v4726
        %7006 = vmatpush.bf16.msra.mxu0 %v4699
        %7007 = vmatpush.bf16.msra.mxu0 %v4672
        %7008 = vmatmul.bf16.gmra.mxu0 %v312
        %v7009 = vpop.f32.mrf.mxu0
        %v7010 = vadd.f32 %v6997, %v7009
        %v7011 = vpop.f32.mrf.mxu0
        %7012 = vdwg.mxu0
        %7013 = vmatpush.bf16.msra.mxu0 0
        %7014 = vmatpush.bf16.msra.mxu0 0
        %7015 = vmatpush.bf16.msra.mxu0 0
        %7016 = vmatpush.bf16.msra.mxu0 0
        %7017 = vmatpush.bf16.msra.mxu0 0
        %7018 = vmatpush.bf16.msra.mxu0 0
        %7019 = vmatpush.bf16.msra.mxu0 0
        %7020 = vmatpush.bf16.msra.mxu0 %v4888
        %7021 = vmatmul.bf16.gmra.mxu0 %v5789
        %v7022 = vpop.f32.mrf.mxu0
        %v7023 = vadd.f32 %v7010, %v7022
        %v7024 = vpop.f32.mrf.mxu0
        %7025 = vdwg.mxu0
        %7026 = vmatpush.bf16.msra.mxu0 %v4214
        %7027 = vmatpush.bf16.msra.mxu0 %v4187
        %7028 = vmatpush.bf16.msra.mxu0 %v4160
        %7029 = vmatpush.bf16.msra.mxu0 %v4133
        %7030 = vmatpush.bf16.msra.mxu0 %v4106
        %7031 = vmatpush.bf16.msra.mxu0 %v4079
        %7032 = vmatpush.bf16.msra.mxu0 %v4052
        %7033 = vmatpush.bf16.msra.mxu0 %v4025
        %7034 = vmatmul.bf16.gmra.mxu0 %v309
        %v7035 = vpop.f32.mrf.mxu0
        %v7036 = vadd.f32 %v1265, %v7035
        %v7037 = vpop.f32.mrf.mxu0
        %7038 = vdwg.mxu0
        %7039 = vmatpush.bf16.msra.mxu0 %v4430
        %7040 = vmatpush.bf16.msra.mxu0 %v4403
        %7041 = vmatpush.bf16.msra.mxu0 %v4376
        %7042 = vmatpush.bf16.msra.mxu0 %v4349
        %7043 = vmatpush.bf16.msra.mxu0 %v4322
        %7044 = vmatpush.bf16.msra.mxu0 %v4295
        %7045 = vmatpush.bf16.msra.mxu0 %v4268
        %7046 = vmatpush.bf16.msra.mxu0 %v4241
        %7047 = vmatmul.bf16.gmra.mxu0 %v310
        %v7048 = vpop.f32.mrf.mxu0
        %v7049 = vadd.f32 %v7036, %v7048
        %v7050 = vpop.f32.mrf.mxu0
        %7051 = vdwg.mxu0
        %7052 = vmatpush.bf16.msra.mxu0 %v4646
        %7053 = vmatpush.bf16.msra.mxu0 %v4619
        %7054 = vmatpush.bf16.msra.mxu0 %v4592
        %7055 = vmatpush.bf16.msra.mxu0 %v4565
        %7056 = vmatpush.bf16.msra.mxu0 %v4538
        %7057 = vmatpush.bf16.msra.mxu0 %v4511
        %7058 = vmatpush.bf16.msra.mxu0 %v4484
        %7059 = vmatpush.bf16.msra.mxu0 %v4457
        %7060 = vmatmul.bf16.gmra.mxu0 %v311
        %v7061 = vpop.f32.mrf.mxu0
        %v7062 = vadd.f32 %v7049, %v7061
        %v7063 = vpop.f32.mrf.mxu0
        %7064 = vdwg.mxu0
        %7065 = vmatpush.bf16.msra.mxu0 %v4862
        %7066 = vmatpush.bf16.msra.mxu0 %v4835
        %7067 = vmatpush.bf16.msra.mxu0 %v4808
        %7068 = vmatpush.bf16.msra.mxu0 %v4781
        %7069 = vmatpush.bf16.msra.mxu0 %v4754
        %7070 = vmatpush.bf16.msra.mxu0 %v4727
        %7071 = vmatpush.bf16.msra.mxu0 %v4700
        %7072 = vmatpush.bf16.msra.mxu0 %v4673
        %7073 = vmatmul.bf16.gmra.mxu0 %v312
        %v7074 = vpop.f32.mrf.mxu0
        %v7075 = vadd.f32 %v7062, %v7074
        %v7076 = vpop.f32.mrf.mxu0
        %7077 = vdwg.mxu0
        %7078 = vmatpush.bf16.msra.mxu0 0
        %7079 = vmatpush.bf16.msra.mxu0 0
        %7080 = vmatpush.bf16.msra.mxu0 0
        %7081 = vmatpush.bf16.msra.mxu0 0
        %7082 = vmatpush.bf16.msra.mxu0 0
        %7083 = vmatpush.bf16.msra.mxu0 0
        %7084 = vmatpush.bf16.msra.mxu0 0
        %7085 = vmatpush.bf16.msra.mxu0 %v4889
        %7086 = vmatmul.bf16.gmra.mxu0 %v5789
        %v7087 = vpop.f32.mrf.mxu0
        %v7088 = vadd.f32 %v7075, %v7087
        %v7089 = vpop.f32.mrf.mxu0
        %7090 = vdwg.mxu0
        %7091 = vmatpush.bf16.msra.mxu0 %v4215
        %7092 = vmatpush.bf16.msra.mxu0 %v4188
        %7093 = vmatpush.bf16.msra.mxu0 %v4161
        %7094 = vmatpush.bf16.msra.mxu0 %v4134
        %7095 = vmatpush.bf16.msra.mxu0 %v4107
        %7096 = vmatpush.bf16.msra.mxu0 %v4080
        %7097 = vmatpush.bf16.msra.mxu0 %v4053
        %7098 = vmatpush.bf16.msra.mxu0 %v4026
        %7099 = vmatmul.bf16.gmra.mxu0 %v309
        %v7100 = vpop.f32.mrf.mxu0
        %v7101 = vadd.f32 %v1266, %v7100
        %v7102 = vpop.f32.mrf.mxu0
        %7103 = vdwg.mxu0
        %7104 = vmatpush.bf16.msra.mxu0 %v4431
        %7105 = vmatpush.bf16.msra.mxu0 %v4404
        %7106 = vmatpush.bf16.msra.mxu0 %v4377
        %7107 = vmatpush.bf16.msra.mxu0 %v4350
        %7108 = vmatpush.bf16.msra.mxu0 %v4323
        %7109 = vmatpush.bf16.msra.mxu0 %v4296
        %7110 = vmatpush.bf16.msra.mxu0 %v4269
        %7111 = vmatpush.bf16.msra.mxu0 %v4242
        %7112 = vmatmul.bf16.gmra.mxu0 %v310
        %v7113 = vpop.f32.mrf.mxu0
        %v7114 = vadd.f32 %v7101, %v7113
        %v7115 = vpop.f32.mrf.mxu0
        %7116 = vdwg.mxu0
        %7117 = vmatpush.bf16.msra.mxu0 %v4647
        %7118 = vmatpush.bf16.msra.mxu0 %v4620
        %7119 = vmatpush.bf16.msra.mxu0 %v4593
        %7120 = vmatpush.bf16.msra.mxu0 %v4566
        %7121 = vmatpush.bf16.msra.mxu0 %v4539
        %7122 = vmatpush.bf16.msra.mxu0 %v4512
        %7123 = vmatpush.bf16.msra.mxu0 %v4485
        %7124 = vmatpush.bf16.msra.mxu0 %v4458
        %7125 = vmatmul.bf16.gmra.mxu0 %v311
        %v7126 = vpop.f32.mrf.mxu0
        %v7127 = vadd.f32 %v7114, %v7126
        %v7128 = vpop.f32.mrf.mxu0
        %7129 = vdwg.mxu0
        %7130 = vmatpush.bf16.msra.mxu0 %v4863
        %7131 = vmatpush.bf16.msra.mxu0 %v4836
        %7132 = vmatpush.bf16.msra.mxu0 %v4809
        %7133 = vmatpush.bf16.msra.mxu0 %v4782
        %7134 = vmatpush.bf16.msra.mxu0 %v4755
        %7135 = vmatpush.bf16.msra.mxu0 %v4728
        %7136 = vmatpush.bf16.msra.mxu0 %v4701
        %7137 = vmatpush.bf16.msra.mxu0 %v4674
        %7138 = vmatmul.bf16.gmra.mxu0 %v312
        %v7139 = vpop.f32.mrf.mxu0
        %v7140 = vadd.f32 %v7127, %v7139
        %v7141 = vpop.f32.mrf.mxu0
        %7142 = vdwg.mxu0
        %7143 = vmatpush.bf16.msra.mxu0 0
        %7144 = vmatpush.bf16.msra.mxu0 0
        %7145 = vmatpush.bf16.msra.mxu0 0
        %7146 = vmatpush.bf16.msra.mxu0 0
        %7147 = vmatpush.bf16.msra.mxu0 0
        %7148 = vmatpush.bf16.msra.mxu0 0
        %7149 = vmatpush.bf16.msra.mxu0 0
        %7150 = vmatpush.bf16.msra.mxu0 %v4890
        %7151 = vmatmul.bf16.gmra.mxu0 %v5789
        %v7152 = vpop.f32.mrf.mxu0
        %v7153 = vadd.f32 %v7140, %v7152
        %v7154 = vpop.f32.mrf.mxu0
        %7155 = vdwg.mxu0
        %7156 = vmatpush.bf16.msra.mxu0 %v4216
        %7157 = vmatpush.bf16.msra.mxu0 %v4189
        %7158 = vmatpush.bf16.msra.mxu0 %v4162
        %7159 = vmatpush.bf16.msra.mxu0 %v4135
        %7160 = vmatpush.bf16.msra.mxu0 %v4108
        %7161 = vmatpush.bf16.msra.mxu0 %v4081
        %7162 = vmatpush.bf16.msra.mxu0 %v4054
        %7163 = vmatpush.bf16.msra.mxu0 %v4027
        %7164 = vmatmul.bf16.gmra.mxu0 %v309
        %v7165 = vpop.f32.mrf.mxu0
        %v7166 = vadd.f32 %v1267, %v7165
        %v7167 = vpop.f32.mrf.mxu0
        %7168 = vdwg.mxu0
        %7169 = vmatpush.bf16.msra.mxu0 %v4432
        %7170 = vmatpush.bf16.msra.mxu0 %v4405
        %7171 = vmatpush.bf16.msra.mxu0 %v4378
        %7172 = vmatpush.bf16.msra.mxu0 %v4351
        %7173 = vmatpush.bf16.msra.mxu0 %v4324
        %7174 = vmatpush.bf16.msra.mxu0 %v4297
        %7175 = vmatpush.bf16.msra.mxu0 %v4270
        %7176 = vmatpush.bf16.msra.mxu0 %v4243
        %7177 = vmatmul.bf16.gmra.mxu0 %v310
        %v7178 = vpop.f32.mrf.mxu0
        %v7179 = vadd.f32 %v7166, %v7178
        %v7180 = vpop.f32.mrf.mxu0
        %7181 = vdwg.mxu0
        %7182 = vmatpush.bf16.msra.mxu0 %v4648
        %7183 = vmatpush.bf16.msra.mxu0 %v4621
        %7184 = vmatpush.bf16.msra.mxu0 %v4594
        %7185 = vmatpush.bf16.msra.mxu0 %v4567
        %7186 = vmatpush.bf16.msra.mxu0 %v4540
        %7187 = vmatpush.bf16.msra.mxu0 %v4513
        %7188 = vmatpush.bf16.msra.mxu0 %v4486
        %7189 = vmatpush.bf16.msra.mxu0 %v4459
        %7190 = vmatmul.bf16.gmra.mxu0 %v311
        %v7191 = vpop.f32.mrf.mxu0
        %v7192 = vadd.f32 %v7179, %v7191
        %v7193 = vpop.f32.mrf.mxu0
        %7194 = vdwg.mxu0
        %7195 = vmatpush.bf16.msra.mxu0 %v4864
        %7196 = vmatpush.bf16.msra.mxu0 %v4837
        %7197 = vmatpush.bf16.msra.mxu0 %v4810
        %7198 = vmatpush.bf16.msra.mxu0 %v4783
        %7199 = vmatpush.bf16.msra.mxu0 %v4756
        %7200 = vmatpush.bf16.msra.mxu0 %v4729
        %7201 = vmatpush.bf16.msra.mxu0 %v4702
        %7202 = vmatpush.bf16.msra.mxu0 %v4675
        %7203 = vmatmul.bf16.gmra.mxu0 %v312
        %v7204 = vpop.f32.mrf.mxu0
        %v7205 = vadd.f32 %v7192, %v7204
        %v7206 = vpop.f32.mrf.mxu0
        %7207 = vdwg.mxu0
        %7208 = vmatpush.bf16.msra.mxu0 0
        %7209 = vmatpush.bf16.msra.mxu0 0
        %7210 = vmatpush.bf16.msra.mxu0 0
        %7211 = vmatpush.bf16.msra.mxu0 0
        %7212 = vmatpush.bf16.msra.mxu0 0
        %7213 = vmatpush.bf16.msra.mxu0 0
        %7214 = vmatpush.bf16.msra.mxu0 0
        %7215 = vmatpush.bf16.msra.mxu0 %v4891
        %7216 = vmatmul.bf16.gmra.mxu0 %v5789
        %v7217 = vpop.f32.mrf.mxu0
        %v7218 = vadd.f32 %v7205, %v7217
        %v7219 = vpop.f32.mrf.mxu0
        %7220 = vdwg.mxu0
        %7221 = vmatpush.bf16.msra.mxu0 %v4217
        %7222 = vmatpush.bf16.msra.mxu0 %v4190
        %7223 = vmatpush.bf16.msra.mxu0 %v4163
        %7224 = vmatpush.bf16.msra.mxu0 %v4136
        %7225 = vmatpush.bf16.msra.mxu0 %v4109
        %7226 = vmatpush.bf16.msra.mxu0 %v4082
        %7227 = vmatpush.bf16.msra.mxu0 %v4055
        %7228 = vmatpush.bf16.msra.mxu0 %v4028
        %7229 = vmatmul.bf16.gmra.mxu0 %v309
        %v7230 = vpop.f32.mrf.mxu0
        %v7231 = vadd.f32 %v1268, %v7230
        %v7232 = vpop.f32.mrf.mxu0
        %7233 = vdwg.mxu0
        %7234 = vmatpush.bf16.msra.mxu0 %v4433
        %7235 = vmatpush.bf16.msra.mxu0 %v4406
        %7236 = vmatpush.bf16.msra.mxu0 %v4379
        %7237 = vmatpush.bf16.msra.mxu0 %v4352
        %7238 = vmatpush.bf16.msra.mxu0 %v4325
        %7239 = vmatpush.bf16.msra.mxu0 %v4298
        %7240 = vmatpush.bf16.msra.mxu0 %v4271
        %7241 = vmatpush.bf16.msra.mxu0 %v4244
        %7242 = vmatmul.bf16.gmra.mxu0 %v310
        %v7243 = vpop.f32.mrf.mxu0
        %v7244 = vadd.f32 %v7231, %v7243
        %v7245 = vpop.f32.mrf.mxu0
        %7246 = vdwg.mxu0
        %7247 = vmatpush.bf16.msra.mxu0 %v4649
        %7248 = vmatpush.bf16.msra.mxu0 %v4622
        %7249 = vmatpush.bf16.msra.mxu0 %v4595
        %7250 = vmatpush.bf16.msra.mxu0 %v4568
        %7251 = vmatpush.bf16.msra.mxu0 %v4541
        %7252 = vmatpush.bf16.msra.mxu0 %v4514
        %7253 = vmatpush.bf16.msra.mxu0 %v4487
        %7254 = vmatpush.bf16.msra.mxu0 %v4460
        %7255 = vmatmul.bf16.gmra.mxu0 %v311
        %v7256 = vpop.f32.mrf.mxu0
        %v7257 = vadd.f32 %v7244, %v7256
        %v7258 = vpop.f32.mrf.mxu0
        %7259 = vdwg.mxu0
        %7260 = vmatpush.bf16.msra.mxu0 %v4865
        %7261 = vmatpush.bf16.msra.mxu0 %v4838
        %7262 = vmatpush.bf16.msra.mxu0 %v4811
        %7263 = vmatpush.bf16.msra.mxu0 %v4784
        %7264 = vmatpush.bf16.msra.mxu0 %v4757
        %7265 = vmatpush.bf16.msra.mxu0 %v4730
        %7266 = vmatpush.bf16.msra.mxu0 %v4703
        %7267 = vmatpush.bf16.msra.mxu0 %v4676
        %7268 = vmatmul.bf16.gmra.mxu0 %v312
        %v7269 = vpop.f32.mrf.mxu0
        %v7270 = vadd.f32 %v7257, %v7269
        %v7271 = vpop.f32.mrf.mxu0
        %7272 = vdwg.mxu0
        %7273 = vmatpush.bf16.msra.mxu0 0
        %7274 = vmatpush.bf16.msra.mxu0 0
        %7275 = vmatpush.bf16.msra.mxu0 0
        %7276 = vmatpush.bf16.msra.mxu0 0
        %7277 = vmatpush.bf16.msra.mxu0 0
        %7278 = vmatpush.bf16.msra.mxu0 0
        %7279 = vmatpush.bf16.msra.mxu0 0
        %7280 = vmatpush.bf16.msra.mxu0 %v4892
        %7281 = vmatmul.bf16.gmra.mxu0 %v5789
        %v7282 = vpop.f32.mrf.mxu0
        %v7283 = vadd.f32 %v7270, %v7282
        %v7284 = vpop.f32.mrf.mxu0
        %7285 = vdwg.mxu0
        %7286 = vmatpush.bf16.msra.mxu0 %v4218
        %7287 = vmatpush.bf16.msra.mxu0 %v4191
        %7288 = vmatpush.bf16.msra.mxu0 %v4164
        %7289 = vmatpush.bf16.msra.mxu0 %v4137
        %7290 = vmatpush.bf16.msra.mxu0 %v4110
        %7291 = vmatpush.bf16.msra.mxu0 %v4083
        %7292 = vmatpush.bf16.msra.mxu0 %v4056
        %7293 = vmatpush.bf16.msra.mxu0 %v4029
        %7294 = vmatmul.bf16.gmra.mxu0 %v309
        %v7295 = vpop.f32.mrf.mxu0
        %v7296 = vadd.f32 %v1269, %v7295
        %v7297 = vpop.f32.mrf.mxu0
        %7298 = vdwg.mxu0
        %7299 = vmatpush.bf16.msra.mxu0 %v4434
        %7300 = vmatpush.bf16.msra.mxu0 %v4407
        %7301 = vmatpush.bf16.msra.mxu0 %v4380
        %7302 = vmatpush.bf16.msra.mxu0 %v4353
        %7303 = vmatpush.bf16.msra.mxu0 %v4326
        %7304 = vmatpush.bf16.msra.mxu0 %v4299
        %7305 = vmatpush.bf16.msra.mxu0 %v4272
        %7306 = vmatpush.bf16.msra.mxu0 %v4245
        %7307 = vmatmul.bf16.gmra.mxu0 %v310
        %v7308 = vpop.f32.mrf.mxu0
        %v7309 = vadd.f32 %v7296, %v7308
        %v7310 = vpop.f32.mrf.mxu0
        %7311 = vdwg.mxu0
        %7312 = vmatpush.bf16.msra.mxu0 %v4650
        %7313 = vmatpush.bf16.msra.mxu0 %v4623
        %7314 = vmatpush.bf16.msra.mxu0 %v4596
        %7315 = vmatpush.bf16.msra.mxu0 %v4569
        %7316 = vmatpush.bf16.msra.mxu0 %v4542
        %7317 = vmatpush.bf16.msra.mxu0 %v4515
        %7318 = vmatpush.bf16.msra.mxu0 %v4488
        %7319 = vmatpush.bf16.msra.mxu0 %v4461
        %7320 = vmatmul.bf16.gmra.mxu0 %v311
        %v7321 = vpop.f32.mrf.mxu0
        %v7322 = vadd.f32 %v7309, %v7321
        %v7323 = vpop.f32.mrf.mxu0
        %7324 = vdwg.mxu0
        %7325 = vmatpush.bf16.msra.mxu0 %v4866
        %7326 = vmatpush.bf16.msra.mxu0 %v4839
        %7327 = vmatpush.bf16.msra.mxu0 %v4812
        %7328 = vmatpush.bf16.msra.mxu0 %v4785
        %7329 = vmatpush.bf16.msra.mxu0 %v4758
        %7330 = vmatpush.bf16.msra.mxu0 %v4731
        %7331 = vmatpush.bf16.msra.mxu0 %v4704
        %7332 = vmatpush.bf16.msra.mxu0 %v4677
        %7333 = vmatmul.bf16.gmra.mxu0 %v312
        %v7334 = vpop.f32.mrf.mxu0
        %v7335 = vadd.f32 %v7322, %v7334
        %v7336 = vpop.f32.mrf.mxu0
        %7337 = vdwg.mxu0
        %7338 = vmatpush.bf16.msra.mxu0 0
        %7339 = vmatpush.bf16.msra.mxu0 0
        %7340 = vmatpush.bf16.msra.mxu0 0
        %7341 = vmatpush.bf16.msra.mxu0 0
        %7342 = vmatpush.bf16.msra.mxu0 0
        %7343 = vmatpush.bf16.msra.mxu0 0
        %7344 = vmatpush.bf16.msra.mxu0 0
        %7345 = vmatpush.bf16.msra.mxu0 %v4893
        %7346 = vmatmul.bf16.gmra.mxu0 %v5789
        %v7347 = vpop.f32.mrf.mxu0
        %v7348 = vadd.f32 %v7335, %v7347
        %v7349 = vpop.f32.mrf.mxu0
        %7350 = vdwg.mxu0
        %7351 = vmatpush.bf16.msra.mxu0 %v4219
        %7352 = vmatpush.bf16.msra.mxu0 %v4192
        %7353 = vmatpush.bf16.msra.mxu0 %v4165
        %7354 = vmatpush.bf16.msra.mxu0 %v4138
        %7355 = vmatpush.bf16.msra.mxu0 %v4111
        %7356 = vmatpush.bf16.msra.mxu0 %v4084
        %7357 = vmatpush.bf16.msra.mxu0 %v4057
        %7358 = vmatpush.bf16.msra.mxu0 %v4030
        %7359 = vmatmul.bf16.gmra.mxu0 %v309
        %v7360 = vpop.f32.mrf.mxu0
        %v7361 = vadd.f32 %v1270, %v7360
        %v7362 = vpop.f32.mrf.mxu0
        %7363 = vdwg.mxu0
        %7364 = vmatpush.bf16.msra.mxu0 %v4435
        %7365 = vmatpush.bf16.msra.mxu0 %v4408
        %7366 = vmatpush.bf16.msra.mxu0 %v4381
        %7367 = vmatpush.bf16.msra.mxu0 %v4354
        %7368 = vmatpush.bf16.msra.mxu0 %v4327
        %7369 = vmatpush.bf16.msra.mxu0 %v4300
        %7370 = vmatpush.bf16.msra.mxu0 %v4273
        %7371 = vmatpush.bf16.msra.mxu0 %v4246
        %7372 = vmatmul.bf16.gmra.mxu0 %v310
        %v7373 = vpop.f32.mrf.mxu0
        %v7374 = vadd.f32 %v7361, %v7373
        %v7375 = vpop.f32.mrf.mxu0
        %7376 = vdwg.mxu0
        %7377 = vmatpush.bf16.msra.mxu0 %v4651
        %7378 = vmatpush.bf16.msra.mxu0 %v4624
        %7379 = vmatpush.bf16.msra.mxu0 %v4597
        %7380 = vmatpush.bf16.msra.mxu0 %v4570
        %7381 = vmatpush.bf16.msra.mxu0 %v4543
        %7382 = vmatpush.bf16.msra.mxu0 %v4516
        %7383 = vmatpush.bf16.msra.mxu0 %v4489
        %7384 = vmatpush.bf16.msra.mxu0 %v4462
        %7385 = vmatmul.bf16.gmra.mxu0 %v311
        %v7386 = vpop.f32.mrf.mxu0
        %v7387 = vadd.f32 %v7374, %v7386
        %v7388 = vpop.f32.mrf.mxu0
        %7389 = vdwg.mxu0
        %7390 = vmatpush.bf16.msra.mxu0 %v4867
        %7391 = vmatpush.bf16.msra.mxu0 %v4840
        %7392 = vmatpush.bf16.msra.mxu0 %v4813
        %7393 = vmatpush.bf16.msra.mxu0 %v4786
        %7394 = vmatpush.bf16.msra.mxu0 %v4759
        %7395 = vmatpush.bf16.msra.mxu0 %v4732
        %7396 = vmatpush.bf16.msra.mxu0 %v4705
        %7397 = vmatpush.bf16.msra.mxu0 %v4678
        %7398 = vmatmul.bf16.gmra.mxu0 %v312
        %v7399 = vpop.f32.mrf.mxu0
        %v7400 = vadd.f32 %v7387, %v7399
        %v7401 = vpop.f32.mrf.mxu0
        %7402 = vdwg.mxu0
        %7403 = vmatpush.bf16.msra.mxu0 0
        %7404 = vmatpush.bf16.msra.mxu0 0
        %7405 = vmatpush.bf16.msra.mxu0 0
        %7406 = vmatpush.bf16.msra.mxu0 0
        %7407 = vmatpush.bf16.msra.mxu0 0
        %7408 = vmatpush.bf16.msra.mxu0 0
        %7409 = vmatpush.bf16.msra.mxu0 0
        %7410 = vmatpush.bf16.msra.mxu0 %v4894
        %7411 = vmatmul.bf16.gmra.mxu0 %v5789
        %v7412 = vpop.f32.mrf.mxu0
        %v7413 = vadd.f32 %v7400, %v7412
        %v7414 = vpop.f32.mrf.mxu0
        %7415 = vdwg.mxu0
        %7416 = vmatpush.bf16.msra.mxu0 %v4220
        %7417 = vmatpush.bf16.msra.mxu0 %v4193
        %7418 = vmatpush.bf16.msra.mxu0 %v4166
        %7419 = vmatpush.bf16.msra.mxu0 %v4139
        %7420 = vmatpush.bf16.msra.mxu0 %v4112
        %7421 = vmatpush.bf16.msra.mxu0 %v4085
        %7422 = vmatpush.bf16.msra.mxu0 %v4058
        %7423 = vmatpush.bf16.msra.mxu0 %v4031
        %7424 = vmatmul.bf16.gmra.mxu0 %v309
        %v7425 = vpop.f32.mrf.mxu0
        %v7426 = vadd.f32 %v1271, %v7425
        %v7427 = vpop.f32.mrf.mxu0
        %7428 = vdwg.mxu0
        %7429 = vmatpush.bf16.msra.mxu0 %v4436
        %7430 = vmatpush.bf16.msra.mxu0 %v4409
        %7431 = vmatpush.bf16.msra.mxu0 %v4382
        %7432 = vmatpush.bf16.msra.mxu0 %v4355
        %7433 = vmatpush.bf16.msra.mxu0 %v4328
        %7434 = vmatpush.bf16.msra.mxu0 %v4301
        %7435 = vmatpush.bf16.msra.mxu0 %v4274
        %7436 = vmatpush.bf16.msra.mxu0 %v4247
        %7437 = vmatmul.bf16.gmra.mxu0 %v310
        %v7438 = vpop.f32.mrf.mxu0
        %v7439 = vadd.f32 %v7426, %v7438
        %v7440 = vpop.f32.mrf.mxu0
        %7441 = vdwg.mxu0
        %7442 = vmatpush.bf16.msra.mxu0 %v4652
        %7443 = vmatpush.bf16.msra.mxu0 %v4625
        %7444 = vmatpush.bf16.msra.mxu0 %v4598
        %7445 = vmatpush.bf16.msra.mxu0 %v4571
        %7446 = vmatpush.bf16.msra.mxu0 %v4544
        %7447 = vmatpush.bf16.msra.mxu0 %v4517
        %7448 = vmatpush.bf16.msra.mxu0 %v4490
        %7449 = vmatpush.bf16.msra.mxu0 %v4463
        %7450 = vmatmul.bf16.gmra.mxu0 %v311
        %v7451 = vpop.f32.mrf.mxu0
        %v7452 = vadd.f32 %v7439, %v7451
        %v7453 = vpop.f32.mrf.mxu0
        %7454 = vdwg.mxu0
        %7455 = vmatpush.bf16.msra.mxu0 %v4868
        %7456 = vmatpush.bf16.msra.mxu0 %v4841
        %7457 = vmatpush.bf16.msra.mxu0 %v4814
        %7458 = vmatpush.bf16.msra.mxu0 %v4787
        %7459 = vmatpush.bf16.msra.mxu0 %v4760
        %7460 = vmatpush.bf16.msra.mxu0 %v4733
        %7461 = vmatpush.bf16.msra.mxu0 %v4706
        %7462 = vmatpush.bf16.msra.mxu0 %v4679
        %7463 = vmatmul.bf16.gmra.mxu0 %v312
        %v7464 = vpop.f32.mrf.mxu0
        %v7465 = vadd.f32 %v7452, %v7464
        %v7466 = vpop.f32.mrf.mxu0
        %7467 = vdwg.mxu0
        %7468 = vmatpush.bf16.msra.mxu0 0
        %7469 = vmatpush.bf16.msra.mxu0 0
        %7470 = vmatpush.bf16.msra.mxu0 0
        %7471 = vmatpush.bf16.msra.mxu0 0
        %7472 = vmatpush.bf16.msra.mxu0 0
        %7473 = vmatpush.bf16.msra.mxu0 0
        %7474 = vmatpush.bf16.msra.mxu0 0
        %7475 = vmatpush.bf16.msra.mxu0 %v4895
        %7476 = vmatmul.bf16.gmra.mxu0 %v5789
        %v7477 = vpop.f32.mrf.mxu0
        %v7478 = vadd.f32 %v7465, %v7477
        %v7479 = vpop.f32.mrf.mxu0
        %7480 = vdwg.mxu0
        %7481 = vmatpush.bf16.msra.mxu0 %v4221
        %7482 = vmatpush.bf16.msra.mxu0 %v4194
        %7483 = vmatpush.bf16.msra.mxu0 %v4167
        %7484 = vmatpush.bf16.msra.mxu0 %v4140
        %7485 = vmatpush.bf16.msra.mxu0 %v4113
        %7486 = vmatpush.bf16.msra.mxu0 %v4086
        %7487 = vmatpush.bf16.msra.mxu0 %v4059
        %7488 = vmatpush.bf16.msra.mxu0 %v4032
        %7489 = vmatmul.bf16.gmra.mxu0 %v309
        %v7490 = vpop.f32.mrf.mxu0
        %v7491 = vadd.f32 %v1272, %v7490
        %v7492 = vpop.f32.mrf.mxu0
        %7493 = vdwg.mxu0
        %7494 = vmatpush.bf16.msra.mxu0 %v4437
        %7495 = vmatpush.bf16.msra.mxu0 %v4410
        %7496 = vmatpush.bf16.msra.mxu0 %v4383
        %7497 = vmatpush.bf16.msra.mxu0 %v4356
        %7498 = vmatpush.bf16.msra.mxu0 %v4329
        %7499 = vmatpush.bf16.msra.mxu0 %v4302
        %7500 = vmatpush.bf16.msra.mxu0 %v4275
        %7501 = vmatpush.bf16.msra.mxu0 %v4248
        %7502 = vmatmul.bf16.gmra.mxu0 %v310
        %v7503 = vpop.f32.mrf.mxu0
        %v7504 = vadd.f32 %v7491, %v7503
        %v7505 = vpop.f32.mrf.mxu0
        %7506 = vdwg.mxu0
        %7507 = vmatpush.bf16.msra.mxu0 %v4653
        %7508 = vmatpush.bf16.msra.mxu0 %v4626
        %7509 = vmatpush.bf16.msra.mxu0 %v4599
        %7510 = vmatpush.bf16.msra.mxu0 %v4572
        %7511 = vmatpush.bf16.msra.mxu0 %v4545
        %7512 = vmatpush.bf16.msra.mxu0 %v4518
        %7513 = vmatpush.bf16.msra.mxu0 %v4491
        %7514 = vmatpush.bf16.msra.mxu0 %v4464
        %7515 = vmatmul.bf16.gmra.mxu0 %v311
        %v7516 = vpop.f32.mrf.mxu0
        %v7517 = vadd.f32 %v7504, %v7516
        %v7518 = vpop.f32.mrf.mxu0
        %7519 = vdwg.mxu0
        %7520 = vmatpush.bf16.msra.mxu0 %v4869
        %7521 = vmatpush.bf16.msra.mxu0 %v4842
        %7522 = vmatpush.bf16.msra.mxu0 %v4815
        %7523 = vmatpush.bf16.msra.mxu0 %v4788
        %7524 = vmatpush.bf16.msra.mxu0 %v4761
        %7525 = vmatpush.bf16.msra.mxu0 %v4734
        %7526 = vmatpush.bf16.msra.mxu0 %v4707
        %7527 = vmatpush.bf16.msra.mxu0 %v4680
        %7528 = vmatmul.bf16.gmra.mxu0 %v312
        %v7529 = vpop.f32.mrf.mxu0
        %v7530 = vadd.f32 %v7517, %v7529
        %v7531 = vpop.f32.mrf.mxu0
        %7532 = vdwg.mxu0
        %7533 = vmatpush.bf16.msra.mxu0 0
        %7534 = vmatpush.bf16.msra.mxu0 0
        %7535 = vmatpush.bf16.msra.mxu0 0
        %7536 = vmatpush.bf16.msra.mxu0 0
        %7537 = vmatpush.bf16.msra.mxu0 0
        %7538 = vmatpush.bf16.msra.mxu0 0
        %7539 = vmatpush.bf16.msra.mxu0 0
        %7540 = vmatpush.bf16.msra.mxu0 %v4896
        %7541 = vmatmul.bf16.gmra.mxu0 %v5789
        %v7542 = vpop.f32.mrf.mxu0
        %v7543 = vadd.f32 %v7530, %v7542
        %v7544 = vpop.f32.mrf.mxu0
        %7545 = vdwg.mxu0
        %v7546 = vadd.f32 %v5853, %v303
        %v7547 = vadd.f32 %v5918, %v303
        %v7548 = vadd.f32 %v5983, %v303
        %v7549 = vadd.f32 %v6048, %v303
        %v7550 = vadd.f32 %v6113, %v303
        %v7551 = vadd.f32 %v6178, %v303
        %v7552 = vadd.f32 %v6243, %v303
        %v7553 = vadd.f32 %v6308, %v303
        %v7554 = vadd.f32 %v6373, %v303
        %v7555 = vadd.f32 %v6438, %v303
        %v7556 = vadd.f32 %v6503, %v303
        %v7557 = vadd.f32 %v6568, %v303
        %v7558 = vadd.f32 %v6633, %v303
        %v7559 = vadd.f32 %v6698, %v303
        %v7560 = vadd.f32 %v6763, %v303
        %v7561 = vadd.f32 %v6828, %v303
        %v7562 = vadd.f32 %v6893, %v303
        %v7563 = vadd.f32 %v6958, %v303
        %v7564 = vadd.f32 %v7023, %v303
        %v7565 = vadd.f32 %v7088, %v303
        %v7566 = vadd.f32 %v7153, %v303
        %v7567 = vadd.f32 %v7218, %v303
        %v7568 = vadd.f32 %v7283, %v303
        %v7569 = vadd.f32 %v7348, %v303
        %v7570 = vadd.f32 %v7413, %v303
        %v7571 = vadd.f32 %v7478, %v303
        %v7572 = vadd.f32 %v7543, %v303
        %7573 = vst [vmem:[%s271] sm:$0xff] %v7546
        %7574 = vst [vmem:[%s271 + $0x8] sm:$0xff] %v7547
        %7575 = vst [vmem:[%s271 + $0x10] sm:$0xff] %v7548
        %7576 = vst [vmem:[%s271 + $0x18] sm:$0xff] %v7549
        %7577 = vst [vmem:[%s271 + $0x20] sm:$0xff] %v7550
        %7578 = vst [vmem:[%s271 + $0x28] sm:$0xff] %v7551
        %7579 = vst [vmem:[%s271 + $0x30] sm:$0xff] %v7552
        %7580 = vst [vmem:[%s271 + $0x38] sm:$0xff] %v7553
        %7581 = vst [vmem:[%s271 + $0x40] sm:$0xff] %v7554
        %7582 = vst [vmem:[%s271 + $0x48] sm:$0xff] %v7555
        %7583 = vst [vmem:[%s271 + $0x50] sm:$0xff] %v7556
        %7584 = vst [vmem:[%s271 + $0x58] sm:$0xff] %v7557
        %7585 = vst [vmem:[%s271 + $0x60] sm:$0xff] %v7558
        %7586 = vst [vmem:[%s271 + $0x68] sm:$0xff] %v7559
        %7587 = vst [vmem:[%s271 + $0x70] sm:$0xff] %v7560
        %7588 = vst [vmem:[%s271 + $0x78] sm:$0xff] %v7561
        %7589 = vst [vmem:[%s271 + $0x80] sm:$0xff] %v7562
        %7590 = vst [vmem:[%s271 + $0x88] sm:$0xff] %v7563
        %7591 = vst [vmem:[%s271 + $0x90] sm:$0xff] %v7564
        %7592 = vst [vmem:[%s271 + $0x98] sm:$0xff] %v7565
        %7593 = vst [vmem:[%s271 + $0xa0] sm:$0xff] %v7566
        %7594 = vst [vmem:[%s271 + $0xa8] sm:$0xff] %v7567
        %7595 = vst [vmem:[%s271 + $0xb0] sm:$0xff] %v7568
        %7596 = vst [vmem:[%s271 + $0xb8] sm:$0xff] %v7569
        %7597 = vst [vmem:[%s271 + $0xc0] sm:$0xff] %v7570
        %7598 = vst [vmem:[%s271 + $0xc8] sm:$0xff] %v7571
        %7599 = vst [vmem:[%s271 + $0xd0] sm:$0xff] %v7572
        %s7600 = smul.u32 27, %s19
        %p7601 = scmp.lt.s32.totalorder %s7600, 53
        %s7602 = scalar_select %p7601, %s7600, 53
        %s7603 = smul.addr %s7602, 8
        %s7604 = scalar_lea.vmem %s4, %s7603
        // Predicated region
        $region49: #{mesh_upsampling_decoder.1} parent=35 // pred_check
          %p7605 = pneg %p131
        $region50: #{mesh_upsampling_decoder.1} parent=35 // pred_check_branch
          %7607 = sbr.rel (%p7605) target = $region52
        $region51: #{mesh_upsampling_decoder.1} parent=35 // pred_region
          %s7608 = smul.u32 27, %s19
        $region52: #{mesh_upsampling_decoder.1} parent=35 // pred_fallthru
          _
      $region36: #{mesh_upsampling_decoder.1} parent=5 // pred_fallthru
        _
      %p7609 = scmp.le.s32.totalorder 2, %s14
      // Predicated region
      $region53: #{mesh_upsampling_decoder.1} parent=5 // pred_check
        %p7610 = pneg %p7609
      $region54: #{mesh_upsampling_decoder.1} parent=5 // pred_check_branch
        %7612 = sbr.rel (%p7610) target = $region56
      $region55: #{mesh_upsampling_decoder.1} parent=5 // pred_region
        %s7613 = ssub.s32 %s14, 2
        // Predicated region
        $region57: #{mesh_upsampling_decoder.1} parent=55 // pred_check
          %p7614 = pneg %p137
        $region58: #{mesh_upsampling_decoder.1} parent=55 // pred_check_branch
          %7616 = sbr.rel (%p7614) target = $region60
        $region59: #{mesh_upsampling_decoder.1} parent=55 // pred_region
          %s7617 = smul.u32 27, %s20
          %p7618 = scmp.lt.s32.totalorder %s7617, 53
          %s7619 = scalar_select %p7618, %s7617, 53
          %s7620 = smul.addr %s7619, 8
          %s7621 = scalar_lea.vmem %s4, %s7620
        $region60: #{mesh_upsampling_decoder.1} parent=55 // pred_fallthru
          _
      $region56: #{mesh_upsampling_decoder.1} parent=5 // pred_fallthru
        _
    $region6: #{mesh_upsampling_decoder.1} parent=1 // loop_footer
      %s18 = sadd.s32 1, %s14
    $region7: #{mesh_upsampling_decoder.1} parent=1 // loop_footer_branch
      %13 = sbr.rel target = $region3
    $region8: #{mesh_upsampling_decoder.1} parent=1 // loop_exit
      _
    %7622 = vsyncpa [#allocation3], 1
    %s7623 = scalar_lea.sflag [#allocation3], 1
    %7624 = vsyncpa %s7623, 1
    %7625 = vsyncpa [#allocation5], 1
    %s7626 = scalar_lea.sflag [#allocation5], 1
    %7627 = vsyncpa %s7626, 1

</llo_original>
